<compile_context>
chip_gen: v6e
topology: v6e:2x2x1
jax: 0.10.0
libtpu: 0.0.40
codegen_flags: <defaults>
</compile_context>

<pallas_src>
import functools

import jax
import jax.numpy as jnp
from jax.experimental import pallas as pl
from jax.experimental.pallas import tpu as pltpu


def _round_up(x, m):
    return ((x + m - 1) // m) * m


# ----------------------------- Pallas kernels -----------------------------

def _linear_kernel(x_ref, w_ref, b_ref, o_ref, *, relu):
    # x: (bm, K) bf16, w: (K, N) bf16, b: (1, N) f32 -> o: (bm, N) f32
    y = jnp.dot(x_ref[...], w_ref[...], preferred_element_type=jnp.float32) + b_ref[...]
    if relu:
        y = jnp.maximum(y, 0.0)
    o_ref[...] = y.astype(o_ref.dtype)


def pallas_linear(x, w, b, relu=False, block_m=None):
    """y = x @ w + b (optionally ReLU).  x: (M, K) bf16, w: (K, N) bf16, b: (1, N) f32."""
    M, K = x.shape
    K2, N = w.shape
    assert K == K2
    if block_m is not None and M % block_m == 0 and M // block_m > 1:
        bm = block_m
    else:
        bm = M
    grid = (M // bm,)
    return pl.pallas_call(
        functools.partial(_linear_kernel, relu=relu),
        out_shape=jax.ShapeDtypeStruct((M, N), jnp.float32),
        grid_spec=pltpu.PrefetchScalarGridSpec(
            num_scalar_prefetch=0,
            grid=grid,
            in_specs=[
                pl.BlockSpec((bm, K), lambda i: (i, 0)),
                pl.BlockSpec((K, N), lambda i: (0, 0)),
                pl.BlockSpec((1, N), lambda i: (0, 0)),
            ],
            out_specs=pl.BlockSpec((bm, N), lambda i: (i, 0)),
        ),
        compiler_params=pltpu.CompilerParams(dimension_semantics=("parallel",)),
    )(x, w, b)


def _encoder_conv_pool_kernel(p_ref, w_ref, b_ref, o_ref):
    # p: (1, H*W, Kpad) bf16 im2col patches for one image; w: (Kpad, Cout) bf16; b: (1, Cout) f32
    # -> o: (1, 1, Cout) = global-average-pooled ReLU(conv(x)) for this image.
    acc = jnp.dot(p_ref[0], w_ref[...], preferred_element_type=jnp.float32) + b_ref[...]
    acc = jnp.maximum(acc, 0.0)
    o_ref[0] = jnp.mean(acc, axis=0, keepdims=True).astype(o_ref.dtype)


def pallas_conv3x3_relu_gap(patches_bf16, w_mat, b_conv):
    """3x3 same conv + ReLU + global avg pool.  patches: (B, H*W, Kpad) bf16, w: (Kpad, Cout) bf16."""
    B, HW, K = patches_bf16.shape
    Cout = w_mat.shape[1]
    out = pl.pallas_call(
        _encoder_conv_pool_kernel,
        out_shape=jax.ShapeDtypeStruct((B, 1, Cout), jnp.float32),
        grid_spec=pltpu.PrefetchScalarGridSpec(
            num_scalar_prefetch=0,
            grid=(B,),
            in_specs=[
                pl.BlockSpec((1, HW, K), lambda b: (b, 0, 0)),
                pl.BlockSpec((K, Cout), lambda b: (0, 0)),
                pl.BlockSpec((1, Cout), lambda b: (0, 0)),
            ],
            out_specs=pl.BlockSpec((1, 1, Cout), lambda b: (b, 0, 0)),
        ),
        compiler_params=pltpu.CompilerParams(dimension_semantics=("parallel",)),
    )(patches_bf16, w_mat, b_conv)
    return out.reshape(B, Cout)


def _lstm_kernel(gx_ref, h0_ref, whhT_ref, o_ref, *, hidden, seq_len):
    # gx: (T, Bp, 4H) precomputed input gates (x @ W_ih^T + b_ih + b_hh), f32
    # h0: (Bp, H) f32; whhT: (H, 4H) bf16; o: (T, Bp, H) f32.  Gate order: i, f, g, o.
    H = hidden
    whh = whhT_ref[...]
    h0 = h0_ref[...]

    def step(t, carry):
        h, c = carry
        gates = gx_ref[t] + jnp.dot(h.astype(jnp.bfloat16), whh,
                                    preferred_element_type=jnp.float32)   # (Bp, 4H)
        i = jax.nn.sigmoid(gates[:, 0 * H:1 * H])
        f = jax.nn.sigmoid(gates[:, 1 * H:2 * H])
        g = jnp.tanh(gates[:, 2 * H:3 * H])
        o = jax.nn.sigmoid(gates[:, 3 * H:4 * H])
        c = f * c + i * g
        h = o * jnp.tanh(c)
        o_ref[t] = h.astype(o_ref.dtype)
        return (h, c)

    jax.lax.fori_loop(0, seq_len, step, (h0, jnp.zeros_like(h0)), unroll=True)


def pallas_lstm(gates_x_tbf, h0, w_hh_t):
    """Single-layer LSTM recurrence over precomputed input gates (T, Bp, 4H), state (h0, 0)."""
    T, Bp, H4 = gates_x_tbf.shape
    H = h0.shape[1]
    assert H4 == 4 * H
    return pl.pallas_call(
        functools.partial(_lstm_kernel, hidden=H, seq_len=T),
        out_shape=jax.ShapeDtypeStruct((T, Bp, H), jnp.float32),
    )(gates_x_tbf, h0, w_hh_t)


# ----------------------------- JAX glue -----------------------------

def _im2col_3x3(x_nhwc, k_pad):
    """(B, H, W, C) -> (B, H*W, k_pad) patches for a 3x3 same conv (zero-padded K)."""
    B, H, W, C = x_nhwc.shape
    xp = jnp.pad(x_nhwc, ((0, 0), (1, 1), (1, 1), (0, 0)))
    cols = [xp[:, kh:kh + H, kw:kw + W, :] for kh in range(3) for kw in range(3)]
    p = jnp.concatenate(cols, axis=-1).reshape(B, H * W, 9 * C)
    if k_pad > 9 * C:
        p = jnp.pad(p, ((0, 0), (0, 0), (0, k_pad - 9 * C)))
    return p


# ----------------------------- model (wrapper) -----------------------------

def init_params(key, *, cin=3, conv_ch=128, embed_size=128, hidden_size=128, vocab_size=256):
    ks = jax.random.split(key, 12)
    s = 0.1

    def rnd(k, shape):
        return s * jax.random.normal(k, shape, jnp.float32)

    k_conv = _round_up(9 * cin, 32)   # pad the im2col contraction dim to a 32-aligned width
    conv_w = jnp.zeros((k_conv, conv_ch), jnp.float32).at[:9 * cin].set(rnd(ks[0], (9 * cin, conv_ch)))

    p = {
        # surrogate encoder trunk: 3x3 conv (im2col matmul weight) + pooled-feature fc head
        "conv_w": conv_w.astype(jnp.bfloat16),                                   # (Kpad, Cc)
        "conv_b": rnd(ks[1], (1, conv_ch)),
        "enc_fc_w": rnd(ks[2], (conv_ch, embed_size)).astype(jnp.bfloat16),      # (K, N) layout
        "enc_fc_b": rnd(ks[3], (1, embed_size)),
        # decoder
        "embed": rnd(ks[4], (vocab_size, embed_size)),
        "proj_w": rnd(ks[5], (embed_size, hidden_size)).astype(jnp.bfloat16),    # (K, N)
        "proj_b": rnd(ks[6], (1, hidden_size)),
        "w_ih_t": rnd(ks[7], (embed_size, 4 * hidden_size)).astype(jnp.bfloat16),     # (E, 4H)
        "w_hh_t": rnd(ks[8], (hidden_size, 4 * hidden_size)).astype(jnp.bfloat16),    # (H, 4H)
        "lstm_b": rnd(ks[9], (1, 4 * hidden_size)) + rnd(ks[10], (1, 4 * hidden_size)),  # b_ih+b_hh
        "fc_w": rnd(ks[11], (hidden_size, vocab_size)).astype(jnp.bfloat16),     # (H, V)
        "fc_b": jnp.zeros((1, vocab_size), jnp.float32),
    }
    return p


def image_caption_forward(params, images_nchw, captions):
    """Training-mode forward: images (B,3,S,S) NCHW, captions (B,T) int32 -> logits (B,T,V)."""
    B = images_nchw.shape[0]
    T = captions.shape[1]
    E = params["w_ih_t"].shape[0]
    H = params["w_hh_t"].shape[0]
    V = params["fc_w"].shape[1]

    # ---------------- encoder ----------------
    x_nhwc = jnp.transpose(images_nchw, (0, 2, 3, 1))                              # NCHW -> NHWC
    patches = _im2col_3x3(x_nhwc, params["conv_w"].shape[0]).astype(jnp.bfloat16)  # (B, HW, Kpad)
    pooled = pallas_conv3x3_relu_gap(patches, params["conv_w"], params["conv_b"])  # (B, Cc)
    # encoder head: Linear -> ReLU -> Dropout (eval-mode identity)
    features = pallas_linear(pooled.astype(jnp.bfloat16), params["enc_fc_w"],
                             params["enc_fc_b"], relu=True)                        # (B, E)

    # ---------------- decoder (training branch) ----------------
    h0 = pallas_linear(features.astype(jnp.bfloat16), params["proj_w"], params["proj_b"])  # (B, H)

    Bp = _round_up(B, 8)                                          # pad batch to full sublanes
    emb_tb = jnp.take(params["embed"], captions.T, axis=0)        # (T, B, E) time-major gather
    emb_tb = jnp.pad(emb_tb, ((0, 0), (0, Bp - B), (0, 0)))       # (T, Bp, E)

    # hoisted input-to-hidden matmul: one big MXU matmul instead of T tiny per-step ones
    gates_x = pallas_linear(emb_tb.reshape(T * Bp, E).astype(jnp.bfloat16),
                            params["w_ih_t"], params["lstm_b"], block_m=32)        # (T*Bp, 4H)

    h0p = jnp.pad(h0, ((0, Bp - B), (0, 0)))                                       # (Bp, H)
    lstm_out = pallas_lstm(gates_x.reshape(T, Bp, 4 * H), h0p, params["w_hh_t"])   # (T, Bp, H)

    logits = pallas_linear(lstm_out.reshape(T * Bp, H).astype(jnp.bfloat16),
                           params["fc_w"], params["fc_b"], block_m=32)             # (T*Bp, V)
    logits = logits.reshape(T, Bp, V)[:, :B, :]                                    # drop batch pad
    return jnp.transpose(logits, (1, 0, 2))                                        # (B, T, V)


# ----------------------------- main -----------------------------

if __name__ == "__main__":
    B, CIN, S = 2, 3, 16               # batch, image channels, spatial
    T = 8                              # caption length
    CONV_CH, EMBED, HIDDEN, VOCAB = 128, 128, 128, 256   # lane-dense (multiples of 128)

    key = jax.random.PRNGKey(0)
    k_params, k_img, k_cap = jax.random.split(key, 3)

    params = init_params(k_params, cin=CIN, conv_ch=CONV_CH,
                         embed_size=EMBED, hidden_size=HIDDEN, vocab_size=VOCAB)
    images = jax.random.normal(k_img, (B, CIN, S, S), jnp.float32)     # NCHW like PyTorch
    captions = jax.random.randint(k_cap, (B, T), 0, VOCAB, jnp.int32)

    logits = jax.jit(image_caption_forward)(params, images, captions)
    logits = jax.block_until_ready(logits)

    assert logits.shape == (B, T, VOCAB), logits.shape
    assert jnp.all(jnp.isfinite(logits))
    print("KERNEL_OK")
</pallas_src>

<mosaic_0001>
module attributes {stable_mosaic.version = 11 : i64} {
  func.func @_encoder_conv_pool_kernel(%arg0: i32, %arg1: memref<1x256x32xbf16, #tpu.memory_space<vmem>>, %arg2: memref<32x128xbf16, #tpu.memory_space<vmem>>, %arg3: memref<1x128xf32, #tpu.memory_space<vmem>>, %arg4: memref<1x1x128xf32, #tpu.memory_space<vmem>>) attributes {dimension_semantics = [#tpu.dimension_semantics<parallel>], iteration_bounds = array<i64: 2>, scalar_prefetch = 0 : i64, scratch_operands = 0 : i64, tpu.core_type = #tpu.core_type<tc>, window_params = [{transform_indices = @transform_0, window_bounds = array<i64: 1, 256, 32>}, {pipeline_mode = #tpu.pipeline_mode<synchronous>, transform_indices = @transform_1, window_bounds = array<i64: 32, 128>}, {pipeline_mode = #tpu.pipeline_mode<synchronous>, transform_indices = @transform_2, window_bounds = array<i64: 1, 128>}, {transform_indices = @transform_3, window_bounds = array<i64: 1, 1, 128>}]} {
    %c0 = arith.constant 0 : index
    %c0_0 = arith.constant 0 : index
    %c0_1 = arith.constant 0 : index
    %0 = vector.load %arg1[%c0, %c0_0, %c0_1] : memref<1x256x32xbf16, #tpu.memory_space<vmem>>, vector<1x256x32xbf16>
    %1 = vector.shape_cast %0 : vector<1x256x32xbf16> to vector<256x32xbf16>
    %c0_2 = arith.constant 0 : index
    %c0_3 = arith.constant 0 : index
    %2 = vector.load %arg2[%c0_2, %c0_3] : memref<32x128xbf16, #tpu.memory_space<vmem>>, vector<32x128xbf16>
    %cst = arith.constant dense<0.000000e+00> : vector<256x128xf32>
    %3 = tpu.matmul %1, %2, %cst {dimension_numbers = #tpu.dot_dimension_numbers<[1], [0], [0], [1], [0, 0, 1, 1], [], []>} : vector<256x32xbf16>, vector<32x128xbf16>, vector<256x128xf32> -> vector<256x128xf32>
    %c0_4 = arith.constant 0 : index
    %c0_5 = arith.constant 0 : index
    %4 = vector.load %arg3[%c0_4, %c0_5] : memref<1x128xf32, #tpu.memory_space<vmem>>, vector<1x128xf32>
    %5 = vector.broadcast %4 : vector<1x128xf32> to vector<256x128xf32>
    %6 = arith.addf %3, %5 : vector<256x128xf32>
    %cst_6 = arith.constant 0.000000e+00 : f32
    %7 = vector.broadcast %cst_6 : f32 to vector<256x128xf32>
    %8 = arith.maximumf %6, %7 : vector<256x128xf32>
    %cst_7 = arith.constant dense<0.000000e+00> : vector<128xf32>
    %9 = vector.multi_reduction <add>, %8, %cst_7 [0] : vector<256x128xf32> to vector<128xf32>
    %10 = vector.shape_cast %9 : vector<128xf32> to vector<1x128xf32>
    %cst_8 = arith.constant 2.560000e+02 : f32
    %11 = vector.broadcast %cst_8 : f32 to vector<1x128xf32>
    %12 = arith.divf %10, %11 : vector<1x128xf32>
    %c0_9 = arith.constant 0 : index
    %c0_10 = arith.constant 0 : index
    %c0_11 = arith.constant 0 : index
    %13 = vector.load %arg4[%c0_9, %c0_10, %c0_11] : memref<1x1x128xf32, #tpu.memory_space<vmem>>, vector<1x1x128xf32>
    %14 = vector.shape_cast %13 : vector<1x1x128xf32> to vector<1x128xf32>
    %15 = vector.shape_cast %12 : vector<1x128xf32> to vector<1x1x128xf32>
    tpu.vector_store %arg4[%c0_9, %c0_10, %c0_11], %15 {strides = array<i32>} : memref<1x1x128xf32, #tpu.memory_space<vmem>>, vector<1x1x128xf32>,
    return
  }
  func.func @transform_0(%arg0: i32) -> (i32, i32, i32) {
    %c0_i32 = arith.constant 0 : i32
    %c0_i32_0 = arith.constant 0 : i32
    %c0_i32_1 = arith.constant 0 : i32
    return %arg0, %c0_i32, %c0_i32_0 : i32, i32, i32
  }
  func.func @transform_1(%arg0: i32) -> (i32, i32) {
    %c0_i32 = arith.constant 0 : i32
    %c0_i32_0 = arith.constant 0 : i32
    %c0_i32_1 = arith.constant 0 : i32
    return %c0_i32, %c0_i32_0 : i32, i32
  }
  func.func @transform_2(%arg0: i32) -> (i32, i32) {
    %c0_i32 = arith.constant 0 : i32
    %c0_i32_0 = arith.constant 0 : i32
    %c0_i32_1 = arith.constant 0 : i32
    return %c0_i32, %c0_i32_0 : i32, i32
  }
  func.func @transform_3(%arg0: i32) -> (i32, i32, i32) {
    %c0_i32 = arith.constant 0 : i32
    %c0_i32_0 = arith.constant 0 : i32
    %c0_i32_1 = arith.constant 0 : i32
    return %arg0, %c0_i32, %c0_i32_0 : i32, i32, i32
  }
}

module attributes {stable_mosaic.version = 11 : i64} {
  func.func @_linear_kernel(%arg0: i32, %arg1: memref<2x128xbf16, #tpu.memory_space<vmem>>, %arg2: memref<128x128xbf16, #tpu.memory_space<vmem>>, %arg3: memref<1x128xf32, #tpu.memory_space<vmem>>, %arg4: memref<2x128xf32, #tpu.memory_space<vmem>>) attributes {dimension_semantics = [#tpu.dimension_semantics<parallel>], iteration_bounds = array<i64: 1>, scalar_prefetch = 0 : i64, scratch_operands = 0 : i64, tpu.core_type = #tpu.core_type<tc>, window_params = [{transform_indices = @transform_0, window_bounds = array<i64: 2, 128>}, {pipeline_mode = #tpu.pipeline_mode<synchronous>, transform_indices = @transform_1, window_bounds = array<i64: 128, 128>}, {pipeline_mode = #tpu.pipeline_mode<synchronous>, transform_indices = @transform_2, window_bounds = array<i64: 1, 128>}, {transform_indices = @transform_3, window_bounds = array<i64: 2, 128>}]} {
    %c0 = arith.constant 0 : index
    %c0_0 = arith.constant 0 : index
    %0 = vector.load %arg1[%c0, %c0_0] : memref<2x128xbf16, #tpu.memory_space<vmem>>, vector<2x128xbf16>
    %c0_1 = arith.constant 0 : index
    %c0_2 = arith.constant 0 : index
    %1 = vector.load %arg2[%c0_1, %c0_2] : memref<128x128xbf16, #tpu.memory_space<vmem>>, vector<128x128xbf16>
    %cst = arith.constant dense<0.000000e+00> : vector<2x128xf32>
    %2 = tpu.matmul %0, %1, %cst {dimension_numbers = #tpu.dot_dimension_numbers<[1], [0], [0], [1], [0, 0, 1, 1], [], []>} : vector<2x128xbf16>, vector<128x128xbf16>, vector<2x128xf32> -> vector<2x128xf32>
    %c0_3 = arith.constant 0 : index
    %c0_4 = arith.constant 0 : index
    %3 = vector.load %arg3[%c0_3, %c0_4] : memref<1x128xf32, #tpu.memory_space<vmem>>, vector<1x128xf32>
    %4 = vector.broadcast %3 : vector<1x128xf32> to vector<2x128xf32>
    %5 = arith.addf %2, %4 : vector<2x128xf32>
    %cst_5 = arith.constant 0.000000e+00 : f32
    %6 = vector.broadcast %cst_5 : f32 to vector<2x128xf32>
    %7 = arith.maximumf %5, %6 : vector<2x128xf32>
    %c0_6 = arith.constant 0 : index
    %c0_7 = arith.constant 0 : index
    %8 = vector.load %arg4[%c0_6, %c0_7] : memref<2x128xf32, #tpu.memory_space<vmem>>, vector<2x128xf32>
    tpu.vector_store %arg4[%c0_6, %c0_7], %7 {strides = array<i32>} : memref<2x128xf32, #tpu.memory_space<vmem>>, vector<2x128xf32>,
    return
  }
  func.func @transform_0(%arg0: i32) -> (i32, i32) {
    %c0_i32 = arith.constant 0 : i32
    %c0_i32_0 = arith.constant 0 : i32
    return %arg0, %c0_i32 : i32, i32
  }
  func.func @transform_1(%arg0: i32) -> (i32, i32) {
    %c0_i32 = arith.constant 0 : i32
    %c0_i32_0 = arith.constant 0 : i32
    %c0_i32_1 = arith.constant 0 : i32
    return %c0_i32, %c0_i32_0 : i32, i32
  }
  func.func @transform_2(%arg0: i32) -> (i32, i32) {
    %c0_i32 = arith.constant 0 : i32
    %c0_i32_0 = arith.constant 0 : i32
    %c0_i32_1 = arith.constant 0 : i32
    return %c0_i32, %c0_i32_0 : i32, i32
  }
  func.func @transform_3(%arg0: i32) -> (i32, i32) {
    %c0_i32 = arith.constant 0 : i32
    %c0_i32_0 = arith.constant 0 : i32
    return %arg0, %c0_i32 : i32, i32
  }
}

module attributes {stable_mosaic.version = 11 : i64} {
  func.func @_linear_kernel(%arg0: i32, %arg1: memref<2x128xbf16, #tpu.memory_space<vmem>>, %arg2: memref<128x128xbf16, #tpu.memory_space<vmem>>, %arg3: memref<1x128xf32, #tpu.memory_space<vmem>>, %arg4: memref<2x128xf32, #tpu.memory_space<vmem>>) attributes {dimension_semantics = [#tpu.dimension_semantics<parallel>], iteration_bounds = array<i64: 1>, scalar_prefetch = 0 : i64, scratch_operands = 0 : i64, tpu.core_type = #tpu.core_type<tc>, window_params = [{transform_indices = @transform_0, window_bounds = array<i64: 2, 128>}, {pipeline_mode = #tpu.pipeline_mode<synchronous>, transform_indices = @transform_1, window_bounds = array<i64: 128, 128>}, {pipeline_mode = #tpu.pipeline_mode<synchronous>, transform_indices = @transform_2, window_bounds = array<i64: 1, 128>}, {transform_indices = @transform_3, window_bounds = array<i64: 2, 128>}]} {
    %c0 = arith.constant 0 : index
    %c0_0 = arith.constant 0 : index
    %0 = vector.load %arg1[%c0, %c0_0] : memref<2x128xbf16, #tpu.memory_space<vmem>>, vector<2x128xbf16>
    %c0_1 = arith.constant 0 : index
    %c0_2 = arith.constant 0 : index
    %1 = vector.load %arg2[%c0_1, %c0_2] : memref<128x128xbf16, #tpu.memory_space<vmem>>, vector<128x128xbf16>
    %cst = arith.constant dense<0.000000e+00> : vector<2x128xf32>
    %2 = tpu.matmul %0, %1, %cst {dimension_numbers = #tpu.dot_dimension_numbers<[1], [0], [0], [1], [0, 0, 1, 1], [], []>} : vector<2x128xbf16>, vector<128x128xbf16>, vector<2x128xf32> -> vector<2x128xf32>
    %c0_3 = arith.constant 0 : index
    %c0_4 = arith.constant 0 : index
    %3 = vector.load %arg3[%c0_3, %c0_4] : memref<1x128xf32, #tpu.memory_space<vmem>>, vector<1x128xf32>
    %4 = vector.broadcast %3 : vector<1x128xf32> to vector<2x128xf32>
    %5 = arith.addf %2, %4 : vector<2x128xf32>
    %c0_5 = arith.constant 0 : index
    %c0_6 = arith.constant 0 : index
    %6 = vector.load %arg4[%c0_5, %c0_6] : memref<2x128xf32, #tpu.memory_space<vmem>>, vector<2x128xf32>
    tpu.vector_store %arg4[%c0_5, %c0_6], %5 {strides = array<i32>} : memref<2x128xf32, #tpu.memory_space<vmem>>, vector<2x128xf32>,
    return
  }
  func.func @transform_0(%arg0: i32) -> (i32, i32) {
    %c0_i32 = arith.constant 0 : i32
    %c0_i32_0 = arith.constant 0 : i32
    return %arg0, %c0_i32 : i32, i32
  }
  func.func @transform_1(%arg0: i32) -> (i32, i32) {
    %c0_i32 = arith.constant 0 : i32
    %c0_i32_0 = arith.constant 0 : i32
    %c0_i32_1 = arith.constant 0 : i32
    return %c0_i32, %c0_i32_0 : i32, i32
  }
  func.func @transform_2(%arg0: i32) -> (i32, i32) {
    %c0_i32 = arith.constant 0 : i32
    %c0_i32_0 = arith.constant 0 : i32
    %c0_i32_1 = arith.constant 0 : i32
    return %c0_i32, %c0_i32_0 : i32, i32
  }
  func.func @transform_3(%arg0: i32) -> (i32, i32) {
    %c0_i32 = arith.constant 0 : i32
    %c0_i32_0 = arith.constant 0 : i32
    return %arg0, %c0_i32 : i32, i32
  }
}

module attributes {stable_mosaic.version = 11 : i64} {
  func.func @_linear_kernel(%arg0: i32, %arg1: memref<32x128xbf16, #tpu.memory_space<vmem>>, %arg2: memref<128x512xbf16, #tpu.memory_space<vmem>>, %arg3: memref<1x512xf32, #tpu.memory_space<vmem>>, %arg4: memref<32x512xf32, #tpu.memory_space<vmem>>) attributes {dimension_semantics = [#tpu.dimension_semantics<parallel>], iteration_bounds = array<i64: 2>, scalar_prefetch = 0 : i64, scratch_operands = 0 : i64, tpu.core_type = #tpu.core_type<tc>, window_params = [{transform_indices = @transform_0, window_bounds = array<i64: 32, 128>}, {pipeline_mode = #tpu.pipeline_mode<synchronous>, transform_indices = @transform_1, window_bounds = array<i64: 128, 512>}, {pipeline_mode = #tpu.pipeline_mode<synchronous>, transform_indices = @transform_2, window_bounds = array<i64: 1, 512>}, {transform_indices = @transform_3, window_bounds = array<i64: 32, 512>}]} {
    %c0 = arith.constant 0 : index
    %c0_0 = arith.constant 0 : index
    %0 = vector.load %arg1[%c0, %c0_0] : memref<32x128xbf16, #tpu.memory_space<vmem>>, vector<32x128xbf16>
    %c0_1 = arith.constant 0 : index
    %c0_2 = arith.constant 0 : index
    %1 = vector.load %arg2[%c0_1, %c0_2] : memref<128x512xbf16, #tpu.memory_space<vmem>>, vector<128x512xbf16>
    %cst = arith.constant dense<0.000000e+00> : vector<32x512xf32>
    %2 = tpu.matmul %0, %1, %cst {dimension_numbers = #tpu.dot_dimension_numbers<[1], [0], [0], [1], [0, 0, 1, 1], [], []>} : vector<32x128xbf16>, vector<128x512xbf16>, vector<32x512xf32> -> vector<32x512xf32>
    %c0_3 = arith.constant 0 : index
    %c0_4 = arith.constant 0 : index
    %3 = vector.load %arg3[%c0_3, %c0_4] : memref<1x512xf32, #tpu.memory_space<vmem>>, vector<1x512xf32>
    %4 = vector.broadcast %3 : vector<1x512xf32> to vector<32x512xf32>
    %5 = arith.addf %2, %4 : vector<32x512xf32>
    %c0_5 = arith.constant 0 : index
    %c0_6 = arith.constant 0 : index
    %6 = vector.load %arg4[%c0_5, %c0_6] : memref<32x512xf32, #tpu.memory_space<vmem>>, vector<32x512xf32>
    tpu.vector_store %arg4[%c0_5, %c0_6], %5 {strides = array<i32>} : memref<32x512xf32, #tpu.memory_space<vmem>>, vector<32x512xf32>,
    return
  }
  func.func @transform_0(%arg0: i32) -> (i32, i32) {
    %c0_i32 = arith.constant 0 : i32
    %c0_i32_0 = arith.constant 0 : i32
    return %arg0, %c0_i32 : i32, i32
  }
  func.func @transform_1(%arg0: i32) -> (i32, i32) {
    %c0_i32 = arith.constant 0 : i32
    %c0_i32_0 = arith.constant 0 : i32
    %c0_i32_1 = arith.constant 0 : i32
    return %c0_i32, %c0_i32_0 : i32, i32
  }
  func.func @transform_2(%arg0: i32) -> (i32, i32) {
    %c0_i32 = arith.constant 0 : i32
    %c0_i32_0 = arith.constant 0 : i32
    %c0_i32_1 = arith.constant 0 : i32
    return %c0_i32, %c0_i32_0 : i32, i32
  }
  func.func @transform_3(%arg0: i32) -> (i32, i32) {
    %c0_i32 = arith.constant 0 : i32
    %c0_i32_0 = arith.constant 0 : i32
    return %arg0, %c0_i32 : i32, i32
  }
}

module attributes {stable_mosaic.version = 11 : i64} {
  func.func @_linear_kernel(%arg0: i32, %arg1: memref<32x128xbf16, #tpu.memory_space<vmem>>, %arg2: memref<128x256xbf16, #tpu.memory_space<vmem>>, %arg3: memref<1x256xf32, #tpu.memory_space<vmem>>, %arg4: memref<32x256xf32, #tpu.memory_space<vmem>>) attributes {dimension_semantics = [#tpu.dimension_semantics<parallel>], iteration_bounds = array<i64: 2>, scalar_prefetch = 0 : i64, scratch_operands = 0 : i64, tpu.core_type = #tpu.core_type<tc>, window_params = [{transform_indices = @transform_0, window_bounds = array<i64: 32, 128>}, {pipeline_mode = #tpu.pipeline_mode<synchronous>, transform_indices = @transform_1, window_bounds = array<i64: 128, 256>}, {pipeline_mode = #tpu.pipeline_mode<synchronous>, transform_indices = @transform_2, window_bounds = array<i64: 1, 256>}, {transform_indices = @transform_3, window_bounds = array<i64: 32, 256>}]} {
    %c0 = arith.constant 0 : index
    %c0_0 = arith.constant 0 : index
    %0 = vector.load %arg1[%c0, %c0_0] : memref<32x128xbf16, #tpu.memory_space<vmem>>, vector<32x128xbf16>
    %c0_1 = arith.constant 0 : index
    %c0_2 = arith.constant 0 : index
    %1 = vector.load %arg2[%c0_1, %c0_2] : memref<128x256xbf16, #tpu.memory_space<vmem>>, vector<128x256xbf16>
    %cst = arith.constant dense<0.000000e+00> : vector<32x256xf32>
    %2 = tpu.matmul %0, %1, %cst {dimension_numbers = #tpu.dot_dimension_numbers<[1], [0], [0], [1], [0, 0, 1, 1], [], []>} : vector<32x128xbf16>, vector<128x256xbf16>, vector<32x256xf32> -> vector<32x256xf32>
    %c0_3 = arith.constant 0 : index
    %c0_4 = arith.constant 0 : index
    %3 = vector.load %arg3[%c0_3, %c0_4] : memref<1x256xf32, #tpu.memory_space<vmem>>, vector<1x256xf32>
    %4 = vector.broadcast %3 : vector<1x256xf32> to vector<32x256xf32>
    %5 = arith.addf %2, %4 : vector<32x256xf32>
    %c0_5 = arith.constant 0 : index
    %c0_6 = arith.constant 0 : index
    %6 = vector.load %arg4[%c0_5, %c0_6] : memref<32x256xf32, #tpu.memory_space<vmem>>, vector<32x256xf32>
    tpu.vector_store %arg4[%c0_5, %c0_6], %5 {strides = array<i32>} : memref<32x256xf32, #tpu.memory_space<vmem>>, vector<32x256xf32>,
    return
  }
  func.func @transform_0(%arg0: i32) -> (i32, i32) {
    %c0_i32 = arith.constant 0 : i32
    %c0_i32_0 = arith.constant 0 : i32
    return %arg0, %c0_i32 : i32, i32
  }
  func.func @transform_1(%arg0: i32) -> (i32, i32) {
    %c0_i32 = arith.constant 0 : i32
    %c0_i32_0 = arith.constant 0 : i32
    %c0_i32_1 = arith.constant 0 : i32
    return %c0_i32, %c0_i32_0 : i32, i32
  }
  func.func @transform_2(%arg0: i32) -> (i32, i32) {
    %c0_i32 = arith.constant 0 : i32
    %c0_i32_0 = arith.constant 0 : i32
    %c0_i32_1 = arith.constant 0 : i32
    return %c0_i32, %c0_i32_0 : i32, i32
  }
  func.func @transform_3(%arg0: i32) -> (i32, i32) {
    %c0_i32 = arith.constant 0 : i32
    %c0_i32_0 = arith.constant 0 : i32
    return %arg0, %c0_i32 : i32, i32
  }
}

module attributes {stable_mosaic.version = 11 : i64} {
  func.func @_lstm_kernel(%arg0: memref<8x8x512xf32, #tpu.memory_space<vmem>>, %arg1: memref<8x128xf32, #tpu.memory_space<vmem>>, %arg2: memref<128x512xbf16, #tpu.memory_space<vmem>>, %arg3: memref<8x8x128xf32, #tpu.memory_space<vmem>>) attributes {dimension_semantics = [], scalar_prefetch = 0 : i64, scratch_operands = 0 : i64, tpu.core_type = #tpu.core_type<tc>} {
    %c0 = arith.constant 0 : index
    %c0_0 = arith.constant 0 : index
    %0 = vector.load %arg2[%c0, %c0_0] : memref<128x512xbf16, #tpu.memory_space<vmem>>, vector<128x512xbf16>
    %c0_1 = arith.constant 0 : index
    %c0_2 = arith.constant 0 : index
    %1 = vector.load %arg1[%c0_1, %c0_2] : memref<8x128xf32, #tpu.memory_space<vmem>>, vector<8x128xf32>
    %cst = arith.constant 0.000000e+00 : f32
    %2 = vector.broadcast %cst : f32 to vector<8x128xf32>
    %c0_i32 = arith.constant 0 : i32
    %3 = arith.index_cast %c0_i32 : i32 to index
    %c0_3 = arith.constant 0 : index
    %c0_4 = arith.constant 0 : index
    %4 = vector.load %arg0[%3, %c0_3, %c0_4] : memref<8x8x512xf32, #tpu.memory_space<vmem>>, vector<1x8x512xf32>
    %5 = vector.shape_cast %4 : vector<1x8x512xf32> to vector<8x512xf32>
    %6 = arith.truncf %1 : vector<8x128xf32> to vector<8x128xbf16>
    %cst_5 = arith.constant dense<0.000000e+00> : vector<8x512xf32>
    %7 = tpu.matmul %6, %0, %cst_5 {dimension_numbers = #tpu.dot_dimension_numbers<[1], [0], [0], [1], [0, 0, 1, 1], [], []>} : vector<8x128xbf16>, vector<128x512xbf16>, vector<8x512xf32> -> vector<8x512xf32>
    %8 = arith.addf %5, %7 : vector<8x512xf32>
    %9 = vector.extract_strided_slice %8 {offsets = [0, 0], sizes = [8, 128], strides = [1, 1]} : vector<8x512xf32> to vector<8x128xf32>
    %10 = arith.negf %9 : vector<8x128xf32>
    %11 = math.exp %10 : vector<8x128xf32>
    %cst_6 = arith.constant 1.000000e+00 : f32
    %12 = vector.broadcast %cst_6 : f32 to vector<8x128xf32>
    %13 = arith.addf %12, %11 : vector<8x128xf32>
    %14 = arith.divf %12, %13 : vector<8x128xf32>
    %15 = vector.extract_strided_slice %8 {offsets = [0, 128], sizes = [8, 128], strides = [1, 1]} : vector<8x512xf32> to vector<8x128xf32>
    %16 = arith.negf %15 : vector<8x128xf32>
    %17 = math.exp %16 : vector<8x128xf32>
    %cst_7 = arith.constant 1.000000e+00 : f32
    %18 = vector.broadcast %cst_7 : f32 to vector<8x128xf32>
    %19 = arith.addf %18, %17 : vector<8x128xf32>
    %20 = arith.divf %18, %19 : vector<8x128xf32>
    %21 = vector.extract_strided_slice %8 {offsets = [0, 256], sizes = [8, 128], strides = [1, 1]} : vector<8x512xf32> to vector<8x128xf32>
    %22 = math.tanh %21 : vector<8x128xf32>
    %23 = vector.extract_strided_slice %8 {offsets = [0, 384], sizes = [8, 128], strides = [1, 1]} : vector<8x512xf32> to vector<8x128xf32>
    %24 = arith.negf %23 : vector<8x128xf32>
    %25 = math.exp %24 : vector<8x128xf32>
    %cst_8 = arith.constant 1.000000e+00 : f32
    %26 = vector.broadcast %cst_8 : f32 to vector<8x128xf32>
    %27 = arith.addf %26, %25 : vector<8x128xf32>
    %28 = arith.divf %26, %27 : vector<8x128xf32>
    %29 = arith.mulf %20, %2 : vector<8x128xf32>
    %30 = arith.mulf %14, %22 : vector<8x128xf32>
    %31 = arith.addf %29, %30 : vector<8x128xf32>
    %32 = math.tanh %31 : vector<8x128xf32>
    %33 = arith.mulf %28, %32 : vector<8x128xf32>
    %34 = arith.index_cast %c0_i32 : i32 to index
    %c0_9 = arith.constant 0 : index
    %c0_10 = arith.constant 0 : index
    %35 = vector.load %arg3[%34, %c0_9, %c0_10] : memref<8x8x128xf32, #tpu.memory_space<vmem>>, vector<1x8x128xf32>
    %36 = vector.shape_cast %35 : vector<1x8x128xf32> to vector<8x128xf32>
    %37 = vector.shape_cast %33 : vector<8x128xf32> to vector<1x8x128xf32>
    tpu.vector_store %arg3[%34, %c0_9, %c0_10], %37 {strides = array<i32>} : memref<8x8x128xf32, #tpu.memory_space<vmem>>, vector<1x8x128xf32>,
    %c1_i32 = arith.constant 1 : i32
    %38 = arith.index_cast %c1_i32 : i32 to index
    %c0_11 = arith.constant 0 : index
    %c0_12 = arith.constant 0 : index
    %39 = vector.load %arg0[%38, %c0_11, %c0_12] : memref<8x8x512xf32, #tpu.memory_space<vmem>>, vector<1x8x512xf32>
    %40 = vector.shape_cast %39 : vector<1x8x512xf32> to vector<8x512xf32>
    %41 = arith.truncf %33 : vector<8x128xf32> to vector<8x128xbf16>
    %cst_13 = arith.constant dense<0.000000e+00> : vector<8x512xf32>
    %42 = tpu.matmul %41, %0, %cst_13 {dimension_numbers = #tpu.dot_dimension_numbers<[1], [0], [0], [1], [0, 0, 1, 1], [], []>} : vector<8x128xbf16>, vector<128x512xbf16>, vector<8x512xf32> -> vector<8x512xf32>
    %43 = arith.addf %40, %42 : vector<8x512xf32>
    %44 = vector.extract_strided_slice %43 {offsets = [0, 0], sizes = [8, 128], strides = [1, 1]} : vector<8x512xf32> to vector<8x128xf32>
    %45 = arith.negf %44 : vector<8x128xf32>
    %46 = math.exp %45 : vector<8x128xf32>
    %cst_14 = arith.constant 1.000000e+00 : f32
    %47 = vector.broadcast %cst_14 : f32 to vector<8x128xf32>
    %48 = arith.addf %47, %46 : vector<8x128xf32>
    %49 = arith.divf %47, %48 : vector<8x128xf32>
    %50 = vector.extract_strided_slice %43 {offsets = [0, 128], sizes = [8, 128], strides = [1, 1]} : vector<8x512xf32> to vector<8x128xf32>
    %51 = arith.negf %50 : vector<8x128xf32>
    %52 = math.exp %51 : vector<8x128xf32>
    %cst_15 = arith.constant 1.000000e+00 : f32
    %53 = vector.broadcast %cst_15 : f32 to vector<8x128xf32>
    %54 = arith.addf %53, %52 : vector<8x128xf32>
    %55 = arith.divf %53, %54 : vector<8x128xf32>
    %56 = vector.extract_strided_slice %43 {offsets = [0, 256], sizes = [8, 128], strides = [1, 1]} : vector<8x512xf32> to vector<8x128xf32>
    %57 = math.tanh %56 : vector<8x128xf32>
    %58 = vector.extract_strided_slice %43 {offsets = [0, 384], sizes = [8, 128], strides = [1, 1]} : vector<8x512xf32> to vector<8x128xf32>
    %59 = arith.negf %58 : vector<8x128xf32>
    %60 = math.exp %59 : vector<8x128xf32>
    %cst_16 = arith.constant 1.000000e+00 : f32
    %61 = vector.broadcast %cst_16 : f32 to vector<8x128xf32>
    %62 = arith.addf %61, %60 : vector<8x128xf32>
    %63 = arith.divf %61, %62 : vector<8x128xf32>
    %64 = arith.mulf %55, %31 : vector<8x128xf32>
    %65 = arith.mulf %49, %57 : vector<8x128xf32>
    %66 = arith.addf %64, %65 : vector<8x128xf32>
    %67 = math.tanh %66 : vector<8x128xf32>
    %68 = arith.mulf %63, %67 : vector<8x128xf32>
    %69 = arith.index_cast %c1_i32 : i32 to index
    %c0_17 = arith.constant 0 : index
    %c0_18 = arith.constant 0 : index
    %70 = vector.load %arg3[%69, %c0_17, %c0_18] : memref<8x8x128xf32, #tpu.memory_space<vmem>>, vector<1x8x128xf32>
    %71 = vector.shape_cast %70 : vector<1x8x128xf32> to vector<8x128xf32>
    %72 = vector.shape_cast %68 : vector<8x128xf32> to vector<1x8x128xf32>
    tpu.vector_store %arg3[%69, %c0_17, %c0_18], %72 {strides = array<i32>} : memref<8x8x128xf32, #tpu.memory_space<vmem>>, vector<1x8x128xf32>,
    %c2_i32 = arith.constant 2 : i32
    %73 = arith.index_cast %c2_i32 : i32 to index
    %c0_19 = arith.constant 0 : index
    %c0_20 = arith.constant 0 : index
    %74 = vector.load %arg0[%73, %c0_19, %c0_20] : memref<8x8x512xf32, #tpu.memory_space<vmem>>, vector<1x8x512xf32>
    %75 = vector.shape_cast %74 : vector<1x8x512xf32> to vector<8x512xf32>
    %76 = arith.truncf %68 : vector<8x128xf32> to vector<8x128xbf16>
    %cst_21 = arith.constant dense<0.000000e+00> : vector<8x512xf32>
    %77 = tpu.matmul %76, %0, %cst_21 {dimension_numbers = #tpu.dot_dimension_numbers<[1], [0], [0], [1], [0, 0, 1, 1], [], []>} : vector<8x128xbf16>, vector<128x512xbf16>, vector<8x512xf32> -> vector<8x512xf32>
    %78 = arith.addf %75, %77 : vector<8x512xf32>
    %79 = vector.extract_strided_slice %78 {offsets = [0, 0], sizes = [8, 128], strides = [1, 1]} : vector<8x512xf32> to vector<8x128xf32>
    %80 = arith.negf %79 : vector<8x128xf32>
    %81 = math.exp %80 : vector<8x128xf32>
    %cst_22 = arith.constant 1.000000e+00 : f32
    %82 = vector.broadcast %cst_22 : f32 to vector<8x128xf32>
    %83 = arith.addf %82, %81 : vector<8x128xf32>
    %84 = arith.divf %82, %83 : vector<8x128xf32>
    %85 = vector.extract_strided_slice %78 {offsets = [0, 128], sizes = [8, 128], strides = [1, 1]} : vector<8x512xf32> to vector<8x128xf32>
    %86 = arith.negf %85 : vector<8x128xf32>
    %87 = math.exp %86 : vector<8x128xf32>
    %cst_23 = arith.constant 1.000000e+00 : f32
    %88 = vector.broadcast %cst_23 : f32 to vector<8x128xf32>
    %89 = arith.addf %88, %87 : vector<8x128xf32>
    %90 = arith.divf %88, %89 : vector<8x128xf32>
    %91 = vector.extract_strided_slice %78 {offsets = [0, 256], sizes = [8, 128], strides = [1, 1]} : vector<8x512xf32> to vector<8x128xf32>
    %92 = math.tanh %91 : vector<8x128xf32>
    %93 = vector.extract_strided_slice %78 {offsets = [0, 384], sizes = [8, 128], strides = [1, 1]} : vector<8x512xf32> to vector<8x128xf32>
    %94 = arith.negf %93 : vector<8x128xf32>
    %95 = math.exp %94 : vector<8x128xf32>
    %cst_24 = arith.constant 1.000000e+00 : f32
    %96 = vector.broadcast %cst_24 : f32 to vector<8x128xf32>
    %97 = arith.addf %96, %95 : vector<8x128xf32>
    %98 = arith.divf %96, %97 : vector<8x128xf32>
    %99 = arith.mulf %90, %66 : vector<8x128xf32>
    %100 = arith.mulf %84, %92 : vector<8x128xf32>
    %101 = arith.addf %99, %100 : vector<8x128xf32>
    %102 = math.tanh %101 : vector<8x128xf32>
    %103 = arith.mulf %98, %102 : vector<8x128xf32>
    %104 = arith.index_cast %c2_i32 : i32 to index
    %c0_25 = arith.constant 0 : index
    %c0_26 = arith.constant 0 : index
    %105 = vector.load %arg3[%104, %c0_25, %c0_26] : memref<8x8x128xf32, #tpu.memory_space<vmem>>, vector<1x8x128xf32>
    %106 = vector.shape_cast %105 : vector<1x8x128xf32> to vector<8x128xf32>
    %107 = vector.shape_cast %103 : vector<8x128xf32> to vector<1x8x128xf32>
    tpu.vector_store %arg3[%104, %c0_25, %c0_26], %107 {strides = array<i32>} : memref<8x8x128xf32, #tpu.memory_space<vmem>>, vector<1x8x128xf32>,
    %c3_i32 = arith.constant 3 : i32
    %108 = arith.index_cast %c3_i32 : i32 to index
    %c0_27 = arith.constant 0 : index
    %c0_28 = arith.constant 0 : index
    %109 = vector.load %arg0[%108, %c0_27, %c0_28] : memref<8x8x512xf32, #tpu.memory_space<vmem>>, vector<1x8x512xf32>
    %110 = vector.shape_cast %109 : vector<1x8x512xf32> to vector<8x512xf32>
    %111 = arith.truncf %103 : vector<8x128xf32> to vector<8x128xbf16>
    %cst_29 = arith.constant dense<0.000000e+00> : vector<8x512xf32>
    %112 = tpu.matmul %111, %0, %cst_29 {dimension_numbers = #tpu.dot_dimension_numbers<[1], [0], [0], [1], [0, 0, 1, 1], [], []>} : vector<8x128xbf16>, vector<128x512xbf16>, vector<8x512xf32> -> vector<8x512xf32>
    %113 = arith.addf %110, %112 : vector<8x512xf32>
    %114 = vector.extract_strided_slice %113 {offsets = [0, 0], sizes = [8, 128], strides = [1, 1]} : vector<8x512xf32> to vector<8x128xf32>
    %115 = arith.negf %114 : vector<8x128xf32>
    %116 = math.exp %115 : vector<8x128xf32>
    %cst_30 = arith.constant 1.000000e+00 : f32
    %117 = vector.broadcast %cst_30 : f32 to vector<8x128xf32>
    %118 = arith.addf %117, %116 : vector<8x128xf32>
    %119 = arith.divf %117, %118 : vector<8x128xf32>
    %120 = vector.extract_strided_slice %113 {offsets = [0, 128], sizes = [8, 128], strides = [1, 1]} : vector<8x512xf32> to vector<8x128xf32>
    %121 = arith.negf %120 : vector<8x128xf32>
    %122 = math.exp %121 : vector<8x128xf32>
    %cst_31 = arith.constant 1.000000e+00 : f32
    %123 = vector.broadcast %cst_31 : f32 to vector<8x128xf32>
    %124 = arith.addf %123, %122 : vector<8x128xf32>
    %125 = arith.divf %123, %124 : vector<8x128xf32>
    %126 = vector.extract_strided_slice %113 {offsets = [0, 256], sizes = [8, 128], strides = [1, 1]} : vector<8x512xf32> to vector<8x128xf32>
    %127 = math.tanh %126 : vector<8x128xf32>
    %128 = vector.extract_strided_slice %113 {offsets = [0, 384], sizes = [8, 128], strides = [1, 1]} : vector<8x512xf32> to vector<8x128xf32>
    %129 = arith.negf %128 : vector<8x128xf32>
    %130 = math.exp %129 : vector<8x128xf32>
    %cst_32 = arith.constant 1.000000e+00 : f32
    %131 = vector.broadcast %cst_32 : f32 to vector<8x128xf32>
    %132 = arith.addf %131, %130 : vector<8x128xf32>
    %133 = arith.divf %131, %132 : vector<8x128xf32>
    %134 = arith.mulf %125, %101 : vector<8x128xf32>
    %135 = arith.mulf %119, %127 : vector<8x128xf32>
    %136 = arith.addf %134, %135 : vector<8x128xf32>
    %137 = math.tanh %136 : vector<8x128xf32>
    %138 = arith.mulf %133, %137 : vector<8x128xf32>
    %139 = arith.index_cast %c3_i32 : i32 to index
    %c0_33 = arith.constant 0 : index
    %c0_34 = arith.constant 0 : index
    %140 = vector.load %arg3[%139, %c0_33, %c0_34] : memref<8x8x128xf32, #tpu.memory_space<vmem>>, vector<1x8x128xf32>
    %141 = vector.shape_cast %140 : vector<1x8x128xf32> to vector<8x128xf32>
    %142 = vector.shape_cast %138 : vector<8x128xf32> to vector<1x8x128xf32>
    tpu.vector_store %arg3[%139, %c0_33, %c0_34], %142 {strides = array<i32>} : memref<8x8x128xf32, #tpu.memory_space<vmem>>, vector<1x8x128xf32>,
    %c4_i32 = arith.constant 4 : i32
    %143 = arith.index_cast %c4_i32 : i32 to index
    %c0_35 = arith.constant 0 : index
    %c0_36 = arith.constant 0 : index
    %144 = vector.load %arg0[%143, %c0_35, %c0_36] : memref<8x8x512xf32, #tpu.memory_space<vmem>>, vector<1x8x512xf32>
    %145 = vector.shape_cast %144 : vector<1x8x512xf32> to vector<8x512xf32>
    %146 = arith.truncf %138 : vector<8x128xf32> to vector<8x128xbf16>
    %cst_37 = arith.constant dense<0.000000e+00> : vector<8x512xf32>
    %147 = tpu.matmul %146, %0, %cst_37 {dimension_numbers = #tpu.dot_dimension_numbers<[1], [0], [0], [1], [0, 0, 1, 1], [], []>} : vector<8x128xbf16>, vector<128x512xbf16>, vector<8x512xf32> -> vector<8x512xf32>
    %148 = arith.addf %145, %147 : vector<8x512xf32>
    %149 = vector.extract_strided_slice %148 {offsets = [0, 0], sizes = [8, 128], strides = [1, 1]} : vector<8x512xf32> to vector<8x128xf32>
    %150 = arith.negf %149 : vector<8x128xf32>
    %151 = math.exp %150 : vector<8x128xf32>
    %cst_38 = arith.constant 1.000000e+00 : f32
    %152 = vector.broadcast %cst_38 : f32 to vector<8x128xf32>
    %153 = arith.addf %152, %151 : vector<8x128xf32>
    %154 = arith.divf %152, %153 : vector<8x128xf32>
    %155 = vector.extract_strided_slice %148 {offsets = [0, 128], sizes = [8, 128], strides = [1, 1]} : vector<8x512xf32> to vector<8x128xf32>
    %156 = arith.negf %155 : vector<8x128xf32>
    %157 = math.exp %156 : vector<8x128xf32>
    %cst_39 = arith.constant 1.000000e+00 : f32
    %158 = vector.broadcast %cst_39 : f32 to vector<8x128xf32>
    %159 = arith.addf %158, %157 : vector<8x128xf32>
    %160 = arith.divf %158, %159 : vector<8x128xf32>
    %161 = vector.extract_strided_slice %148 {offsets = [0, 256], sizes = [8, 128], strides = [1, 1]} : vector<8x512xf32> to vector<8x128xf32>
    %162 = math.tanh %161 : vector<8x128xf32>
    %163 = vector.extract_strided_slice %148 {offsets = [0, 384], sizes = [8, 128], strides = [1, 1]} : vector<8x512xf32> to vector<8x128xf32>
    %164 = arith.negf %163 : vector<8x128xf32>
    %165 = math.exp %164 : vector<8x128xf32>
    %cst_40 = arith.constant 1.000000e+00 : f32
    %166 = vector.broadcast %cst_40 : f32 to vector<8x128xf32>
    %167 = arith.addf %166, %165 : vector<8x128xf32>
    %168 = arith.divf %166, %167 : vector<8x128xf32>
    %169 = arith.mulf %160, %136 : vector<8x128xf32>
    %170 = arith.mulf %154, %162 : vector<8x128xf32>
    %171 = arith.addf %169, %170 : vector<8x128xf32>
    %172 = math.tanh %171 : vector<8x128xf32>
    %173 = arith.mulf %168, %172 : vector<8x128xf32>
    %174 = arith.index_cast %c4_i32 : i32 to index
    %c0_41 = arith.constant 0 : index
    %c0_42 = arith.constant 0 : index
    %175 = vector.load %arg3[%174, %c0_41, %c0_42] : memref<8x8x128xf32, #tpu.memory_space<vmem>>, vector<1x8x128xf32>
    %176 = vector.shape_cast %175 : vector<1x8x128xf32> to vector<8x128xf32>
    %177 = vector.shape_cast %173 : vector<8x128xf32> to vector<1x8x128xf32>
    tpu.vector_store %arg3[%174, %c0_41, %c0_42], %177 {strides = array<i32>} : memref<8x8x128xf32, #tpu.memory_space<vmem>>, vector<1x8x128xf32>,
    %c5_i32 = arith.constant 5 : i32
    %178 = arith.index_cast %c5_i32 : i32 to index
    %c0_43 = arith.constant 0 : index
    %c0_44 = arith.constant 0 : index
    %179 = vector.load %arg0[%178, %c0_43, %c0_44] : memref<8x8x512xf32, #tpu.memory_space<vmem>>, vector<1x8x512xf32>
    %180 = vector.shape_cast %179 : vector<1x8x512xf32> to vector<8x512xf32>
    %181 = arith.truncf %173 : vector<8x128xf32> to vector<8x128xbf16>
    %cst_45 = arith.constant dense<0.000000e+00> : vector<8x512xf32>
    %182 = tpu.matmul %181, %0, %cst_45 {dimension_numbers = #tpu.dot_dimension_numbers<[1], [0], [0], [1], [0, 0, 1, 1], [], []>} : vector<8x128xbf16>, vector<128x512xbf16>, vector<8x512xf32> -> vector<8x512xf32>
    %183 = arith.addf %180, %182 : vector<8x512xf32>
    %184 = vector.extract_strided_slice %183 {offsets = [0, 0], sizes = [8, 128], strides = [1, 1]} : vector<8x512xf32> to vector<8x128xf32>
    %185 = arith.negf %184 : vector<8x128xf32>
    %186 = math.exp %185 : vector<8x128xf32>
    %cst_46 = arith.constant 1.000000e+00 : f32
    %187 = vector.broadcast %cst_46 : f32 to vector<8x128xf32>
    %188 = arith.addf %187, %186 : vector<8x128xf32>
    %189 = arith.divf %187, %188 : vector<8x128xf32>
    %190 = vector.extract_strided_slice %183 {offsets = [0, 128], sizes = [8, 128], strides = [1, 1]} : vector<8x512xf32> to vector<8x128xf32>
    %191 = arith.negf %190 : vector<8x128xf32>
    %192 = math.exp %191 : vector<8x128xf32>
    %cst_47 = arith.constant 1.000000e+00 : f32
    %193 = vector.broadcast %cst_47 : f32 to vector<8x128xf32>
    %194 = arith.addf %193, %192 : vector<8x128xf32>
    %195 = arith.divf %193, %194 : vector<8x128xf32>
    %196 = vector.extract_strided_slice %183 {offsets = [0, 256], sizes = [8, 128], strides = [1, 1]} : vector<8x512xf32> to vector<8x128xf32>
    %197 = math.tanh %196 : vector<8x128xf32>
    %198 = vector.extract_strided_slice %183 {offsets = [0, 384], sizes = [8, 128], strides = [1, 1]} : vector<8x512xf32> to vector<8x128xf32>
    %199 = arith.negf %198 : vector<8x128xf32>
    %200 = math.exp %199 : vector<8x128xf32>
    %cst_48 = arith.constant 1.000000e+00 : f32
    %201 = vector.broadcast %cst_48 : f32 to vector<8x128xf32>
    %202 = arith.addf %201, %200 : vector<8x128xf32>
    %203 = arith.divf %201, %202 : vector<8x128xf32>
    %204 = arith.mulf %195, %171 : vector<8x128xf32>
    %205 = arith.mulf %189, %197 : vector<8x128xf32>
    %206 = arith.addf %204, %205 : vector<8x128xf32>
    %207 = math.tanh %206 : vector<8x128xf32>
    %208 = arith.mulf %203, %207 : vector<8x128xf32>
    %209 = arith.index_cast %c5_i32 : i32 to index
    %c0_49 = arith.constant 0 : index
    %c0_50 = arith.constant 0 : index
    %210 = vector.load %arg3[%209, %c0_49, %c0_50] : memref<8x8x128xf32, #tpu.memory_space<vmem>>, vector<1x8x128xf32>
    %211 = vector.shape_cast %210 : vector<1x8x128xf32> to vector<8x128xf32>
    %212 = vector.shape_cast %208 : vector<8x128xf32> to vector<1x8x128xf32>
    tpu.vector_store %arg3[%209, %c0_49, %c0_50], %212 {strides = array<i32>} : memref<8x8x128xf32, #tpu.memory_space<vmem>>, vector<1x8x128xf32>,
    %c6_i32 = arith.constant 6 : i32
    %213 = arith.index_cast %c6_i32 : i32 to index
    %c0_51 = arith.constant 0 : index
    %c0_52 = arith.constant 0 : index
    %214 = vector.load %arg0[%213, %c0_51, %c0_52] : memref<8x8x512xf32, #tpu.memory_space<vmem>>, vector<1x8x512xf32>
    %215 = vector.shape_cast %214 : vector<1x8x512xf32> to vector<8x512xf32>
    %216 = arith.truncf %208 : vector<8x128xf32> to vector<8x128xbf16>
    %cst_53 = arith.constant dense<0.000000e+00> : vector<8x512xf32>
    %217 = tpu.matmul %216, %0, %cst_53 {dimension_numbers = #tpu.dot_dimension_numbers<[1], [0], [0], [1], [0, 0, 1, 1], [], []>} : vector<8x128xbf16>, vector<128x512xbf16>, vector<8x512xf32> -> vector<8x512xf32>
    %218 = arith.addf %215, %217 : vector<8x512xf32>
    %219 = vector.extract_strided_slice %218 {offsets = [0, 0], sizes = [8, 128], strides = [1, 1]} : vector<8x512xf32> to vector<8x128xf32>
    %220 = arith.negf %219 : vector<8x128xf32>
    %221 = math.exp %220 : vector<8x128xf32>
    %cst_54 = arith.constant 1.000000e+00 : f32
    %222 = vector.broadcast %cst_54 : f32 to vector<8x128xf32>
    %223 = arith.addf %222, %221 : vector<8x128xf32>
    %224 = arith.divf %222, %223 : vector<8x128xf32>
    %225 = vector.extract_strided_slice %218 {offsets = [0, 128], sizes = [8, 128], strides = [1, 1]} : vector<8x512xf32> to vector<8x128xf32>
    %226 = arith.negf %225 : vector<8x128xf32>
    %227 = math.exp %226 : vector<8x128xf32>
    %cst_55 = arith.constant 1.000000e+00 : f32
    %228 = vector.broadcast %cst_55 : f32 to vector<8x128xf32>
    %229 = arith.addf %228, %227 : vector<8x128xf32>
    %230 = arith.divf %228, %229 : vector<8x128xf32>
    %231 = vector.extract_strided_slice %218 {offsets = [0, 256], sizes = [8, 128], strides = [1, 1]} : vector<8x512xf32> to vector<8x128xf32>
    %232 = math.tanh %231 : vector<8x128xf32>
    %233 = vector.extract_strided_slice %218 {offsets = [0, 384], sizes = [8, 128], strides = [1, 1]} : vector<8x512xf32> to vector<8x128xf32>
    %234 = arith.negf %233 : vector<8x128xf32>
    %235 = math.exp %234 : vector<8x128xf32>
    %cst_56 = arith.constant 1.000000e+00 : f32
    %236 = vector.broadcast %cst_56 : f32 to vector<8x128xf32>
    %237 = arith.addf %236, %235 : vector<8x128xf32>
    %238 = arith.divf %236, %237 : vector<8x128xf32>
    %239 = arith.mulf %230, %206 : vector<8x128xf32>
    %240 = arith.mulf %224, %232 : vector<8x128xf32>
    %241 = arith.addf %239, %240 : vector<8x128xf32>
    %242 = math.tanh %241 : vector<8x128xf32>
    %243 = arith.mulf %238, %242 : vector<8x128xf32>
    %244 = arith.index_cast %c6_i32 : i32 to index
    %c0_57 = arith.constant 0 : index
    %c0_58 = arith.constant 0 : index
    %245 = vector.load %arg3[%244, %c0_57, %c0_58] : memref<8x8x128xf32, #tpu.memory_space<vmem>>, vector<1x8x128xf32>
    %246 = vector.shape_cast %245 : vector<1x8x128xf32> to vector<8x128xf32>
    %247 = vector.shape_cast %243 : vector<8x128xf32> to vector<1x8x128xf32>
    tpu.vector_store %arg3[%244, %c0_57, %c0_58], %247 {strides = array<i32>} : memref<8x8x128xf32, #tpu.memory_space<vmem>>, vector<1x8x128xf32>,
    %c7_i32 = arith.constant 7 : i32
    %248 = arith.index_cast %c7_i32 : i32 to index
    %c0_59 = arith.constant 0 : index
    %c0_60 = arith.constant 0 : index
    %249 = vector.load %arg0[%248, %c0_59, %c0_60] : memref<8x8x512xf32, #tpu.memory_space<vmem>>, vector<1x8x512xf32>
    %250 = vector.shape_cast %249 : vector<1x8x512xf32> to vector<8x512xf32>
    %251 = arith.truncf %243 : vector<8x128xf32> to vector<8x128xbf16>
    %cst_61 = arith.constant dense<0.000000e+00> : vector<8x512xf32>
    %252 = tpu.matmul %251, %0, %cst_61 {dimension_numbers = #tpu.dot_dimension_numbers<[1], [0], [0], [1], [0, 0, 1, 1], [], []>} : vector<8x128xbf16>, vector<128x512xbf16>, vector<8x512xf32> -> vector<8x512xf32>
    %253 = arith.addf %250, %252 : vector<8x512xf32>
    %254 = vector.extract_strided_slice %253 {offsets = [0, 0], sizes = [8, 128], strides = [1, 1]} : vector<8x512xf32> to vector<8x128xf32>
    %255 = arith.negf %254 : vector<8x128xf32>
    %256 = math.exp %255 : vector<8x128xf32>
    %cst_62 = arith.constant 1.000000e+00 : f32
    %257 = vector.broadcast %cst_62 : f32 to vector<8x128xf32>
    %258 = arith.addf %257, %256 : vector<8x128xf32>
    %259 = arith.divf %257, %258 : vector<8x128xf32>
    %260 = vector.extract_strided_slice %253 {offsets = [0, 128], sizes = [8, 128], strides = [1, 1]} : vector<8x512xf32> to vector<8x128xf32>
    %261 = arith.negf %260 : vector<8x128xf32>
    %262 = math.exp %261 : vector<8x128xf32>
    %cst_63 = arith.constant 1.000000e+00 : f32
    %263 = vector.broadcast %cst_63 : f32 to vector<8x128xf32>
    %264 = arith.addf %263, %262 : vector<8x128xf32>
    %265 = arith.divf %263, %264 : vector<8x128xf32>
    %266 = vector.extract_strided_slice %253 {offsets = [0, 256], sizes = [8, 128], strides = [1, 1]} : vector<8x512xf32> to vector<8x128xf32>
    %267 = math.tanh %266 : vector<8x128xf32>
    %268 = vector.extract_strided_slice %253 {offsets = [0, 384], sizes = [8, 128], strides = [1, 1]} : vector<8x512xf32> to vector<8x128xf32>
    %269 = arith.negf %268 : vector<8x128xf32>
    %270 = math.exp %269 : vector<8x128xf32>
    %cst_64 = arith.constant 1.000000e+00 : f32
    %271 = vector.broadcast %cst_64 : f32 to vector<8x128xf32>
    %272 = arith.addf %271, %270 : vector<8x128xf32>
    %273 = arith.divf %271, %272 : vector<8x128xf32>
    %274 = arith.mulf %265, %241 : vector<8x128xf32>
    %275 = arith.mulf %259, %267 : vector<8x128xf32>
    %276 = arith.addf %274, %275 : vector<8x128xf32>
    %277 = math.tanh %276 : vector<8x128xf32>
    %278 = arith.mulf %273, %277 : vector<8x128xf32>
    %279 = arith.index_cast %c7_i32 : i32 to index
    %c0_65 = arith.constant 0 : index
    %c0_66 = arith.constant 0 : index
    %280 = vector.load %arg3[%279, %c0_65, %c0_66] : memref<8x8x128xf32, #tpu.memory_space<vmem>>, vector<1x8x128xf32>
    %281 = vector.shape_cast %280 : vector<1x8x128xf32> to vector<8x128xf32>
    %282 = vector.shape_cast %278 : vector<8x128xf32> to vector<1x8x128xf32>
    tpu.vector_store %arg3[%279, %c0_65, %c0_66], %282 {strides = array<i32>} : memref<8x8x128xf32, #tpu.memory_space<vmem>>, vector<1x8x128xf32>,
    %c8_i32 = arith.constant 8 : i32
    return
  }
}

</mosaic_0001>

<llo_original>
// kernel: image_caption_forward.7
$region0: #{image_caption_forward.7}
  #allocation0 [shape = 'u32[]', space=smem, size = 0x4, offset = 0x4, fixed_abs, tag = 'smem constant byte address 0x4 - core index']
  #allocation1 [shape = 'u32[144,128]{1,0:T(1,128)}', space=vmem, size = 0x12000, scoped, tag = 'internal scratch']
  %s0 = inlined_call_operand.vmem [shape: bf16[2,128], index: 0, kind: input, shape index: {}]
  %s1 = inlined_call_operand.vmem [shape: bf16[128,128], index: 1, kind: input, shape index: {}]
  %s2 = inlined_call_operand.vmem [shape: f32[1,128], index: 2, kind: input, shape index: {}]
  %s3 = inlined_call_operand.vmem [shape: f32[2,128], index: 3, kind: output, shape index: {}]
  %s4 = sld [smem:[#allocation0]]
  $region22: #{image_caption_forward.7} parent=0
    _
  %s6 = ssub.s32 1, %s4
  %s7 = scalar_select 0, %s6, %s4
  // Predicated region
  $region2: #{image_caption_forward.7} parent=0 // pred_check
    _
  $region3: #{image_caption_forward.7} parent=0 // pred_check_branch
    %9 = sbr.rel (0) target = $region5
  $region4: #{image_caption_forward.7} parent=0 // pred_region
    _
  $region5: #{image_caption_forward.7} parent=0 // pred_fallthru
    _
  // Predicated region
  $region6: #{image_caption_forward.7} parent=0 // pred_check
    _
  $region7: #{image_caption_forward.7} parent=0 // pred_check_branch
    %11 = sbr.rel (0) target = $region9
  $region8: #{image_caption_forward.7} parent=0 // pred_region
    _
  $region9: #{image_caption_forward.7} parent=0 // pred_fallthru
    _
  // Predicated region
  $region10: #{image_caption_forward.7} parent=0 // pred_check
    _
  $region11: #{image_caption_forward.7} parent=0 // pred_check_branch
    %13 = sbr.rel (0) target = $region13
  $region12: #{image_caption_forward.7} parent=0 // pred_region
    _
  $region13: #{image_caption_forward.7} parent=0 // pred_fallthru
    _
  %v15 = vld [vmem:[%s0] sm:$0x1]
  %v16 = vld [vmem:[%s1] sm:$0xf]
  %v17 = vld [vmem:[%s1 + $0x4] sm:$0xf]
  %v18 = vld [vmem:[%s1 + $0x8] sm:$0xf]
  %v19 = vld [vmem:[%s1 + $0xc] sm:$0xf]
  %v20 = vld [vmem:[%s1 + $0x10] sm:$0xf]
  %v21 = vld [vmem:[%s1 + $0x14] sm:$0xf]
  %v22 = vld [vmem:[%s1 + $0x18] sm:$0xf]
  %v23 = vld [vmem:[%s1 + $0x1c] sm:$0xf]
  %v24 = vld [vmem:[%s1 + $0x20] sm:$0xf]
  %v25 = vld [vmem:[%s1 + $0x24] sm:$0xf]
  %v26 = vld [vmem:[%s1 + $0x28] sm:$0xf]
  %v27 = vld [vmem:[%s1 + $0x2c] sm:$0xf]
  %v28 = vld [vmem:[%s1 + $0x30] sm:$0xf]
  %v29 = vld [vmem:[%s1 + $0x34] sm:$0xf]
  %v30 = vld [vmem:[%s1 + $0x38] sm:$0xf]
  %v31 = vld [vmem:[%s1 + $0x3c] sm:$0xf]
  %v32 = vld [vmem:[%s2] sm:$0x1]
  %v34 = vlaneseq
  %v35 = vshrl.u32 %v34, 7
  %v36 = vsub.s32 0, %v35
  %v37 = vrot.slane %v32, %v36
  %v55 = vunpack.c.l.b16 %v16
  %v56 = vunpack.c.l.b16 %v17
  %v57 = vunpack.c.l.b16 %v18
  %v58 = vunpack.c.l.b16 %v19
  %v59 = vunpack.c.l.b16 %v20
  %v60 = vunpack.c.l.b16 %v21
  %v61 = vunpack.c.l.b16 %v22
  %v62 = vunpack.c.l.b16 %v23
  %v63 = vunpack.c.l.b16 %v24
  %v64 = vunpack.c.l.b16 %v25
  %v65 = vunpack.c.l.b16 %v26
  %v66 = vunpack.c.l.b16 %v27
  %v67 = vunpack.c.l.b16 %v28
  %v68 = vunpack.c.l.b16 %v29
  %v69 = vunpack.c.l.b16 %v30
  %v70 = vunpack.c.l.b16 %v31
  %v71 = vpack.c.b16 %v56, %v55
  %v72 = vpack.c.b16 %v58, %v57
  %v73 = vpack.c.b16 %v60, %v59
  %v74 = vpack.c.b16 %v62, %v61
  %v75 = vpack.c.b16 %v64, %v63
  %v76 = vpack.c.b16 %v66, %v65
  %v77 = vpack.c.b16 %v68, %v67
  %v78 = vpack.c.b16 %v70, %v69
  %87 = vmatprep.subr.bf16.mxu0 0
  %88 = vmatpush1.bf16.msra.mxu0 %v78
  %89 = vmatprep.subr.bf16.mxu0 0
  %90 = vmatpush1.bf16.msra.mxu0 %v77
  %91 = vmatprep.subr.bf16.mxu0 0
  %92 = vmatpush1.bf16.msra.mxu0 %v76
  %93 = vmatprep.subr.bf16.mxu0 0
  %94 = vmatpush1.bf16.msra.mxu0 %v75
  %95 = vmatprep.subr.bf16.mxu0 0
  %96 = vmatpush1.bf16.msra.mxu0 %v74
  %97 = vmatprep.subr.bf16.mxu0 0
  %98 = vmatpush1.bf16.msra.mxu0 %v73
  %99 = vmatprep.subr.bf16.mxu0 0
  %100 = vmatpush1.bf16.msra.mxu0 %v72
  %101 = vmatprep.subr.bf16.mxu0 0
  %102 = vmatpush1.bf16.msra.mxu0 %v71
  %103 = vmatprep.subr.bf16.mxu0 0
  %104 = vmatpush2.bf16.msra.mxu0 0
  %105 = vmatprep.subr.bf16.mxu0 0
  %106 = vmatpush2.bf16.msra.mxu0 0
  %107 = vmatprep.subr.bf16.mxu0 0
  %108 = vmatpush2.bf16.msra.mxu0 0
  %109 = vmatprep.subr.bf16.mxu0 0
  %110 = vmatpush2.bf16.msra.mxu0 0
  %111 = vmatprep.subr.bf16.mxu0 0
  %112 = vmatpush2.bf16.msra.mxu0 0
  %113 = vmatprep.subr.bf16.mxu0 0
  %114 = vmatpush2.bf16.msra.mxu0 0
  %115 = vmatprep.subr.bf16.mxu0 0
  %116 = vmatpush2.bf16.msra.mxu0 0
  %117 = vmatprep.subr.bf16.mxu0 0
  %118 = vmatpush2.bf16.msra.mxu0 0
  %119 = vmatprep.mubr.bf16.mxu0 0
  %120 = vmatmul.mubr.bf16.gmra.mxu0 %v15
  %v121 = vpop.f32.mrf.mxu0
  %v122 = vadd.f32 %v37, %v121
  %v123 = vpop.f32.mrf.mxu0
  %v124 = vpop.f32.mrf.mxu0
  %v125 = vpop.f32.mrf.mxu0
  %126 = vdwg.mxu0
  %v127 = vmax.f32 %v122, 0.0
  %128 = vst [vmem:[%s3] sm:$0x3] %v127
  // Predicated region
  $region14: #{image_caption_forward.7} parent=0 // pred_check
    _
  $region15: #{image_caption_forward.7} parent=0 // pred_check_branch
    %130 = sbr.rel (0) target = $region17
  $region16: #{image_caption_forward.7} parent=0 // pred_region
    _
  $region17: #{image_caption_forward.7} parent=0 // pred_fallthru
    _
  // Predicated region
  $region18: #{image_caption_forward.7} parent=0 // pred_check
    _
  $region19: #{image_caption_forward.7} parent=0 // pred_check_branch
    %132 = sbr.rel (0) target = $region21
  $region20: #{image_caption_forward.7} parent=0 // pred_region
    _
  $region21: #{image_caption_forward.7} parent=0 // pred_fallthru
    _

// kernel: image_caption_forward.8
$region0: #{image_caption_forward.8}
  #allocation0 [shape = 'u32[]', space=smem, size = 0x4, offset = 0x4, fixed_abs, tag = 'smem constant byte address 0x4 - core index']
  #allocation1 [shape = 'u32[144,128]{1,0:T(1,128)}', space=vmem, size = 0x12000, scoped, tag = 'internal scratch']
  %s0 = inlined_call_operand.vmem [shape: bf16[2,128], index: 0, kind: input, shape index: {}]
  %s1 = inlined_call_operand.vmem [shape: bf16[128,128], index: 1, kind: input, shape index: {}]
  %s2 = inlined_call_operand.vmem [shape: f32[1,128], index: 2, kind: input, shape index: {}]
  %s3 = inlined_call_operand.vmem [shape: f32[2,128], index: 3, kind: output, shape index: {}]
  %s4 = sld [smem:[#allocation0]]
  $region22: #{image_caption_forward.8} parent=0
    _
  %s6 = ssub.s32 1, %s4
  %s7 = scalar_select 0, %s6, %s4
  // Predicated region
  $region2: #{image_caption_forward.8} parent=0 // pred_check
    _
  $region3: #{image_caption_forward.8} parent=0 // pred_check_branch
    %9 = sbr.rel (0) target = $region5
  $region4: #{image_caption_forward.8} parent=0 // pred_region
    _
  $region5: #{image_caption_forward.8} parent=0 // pred_fallthru
    _
  // Predicated region
  $region6: #{image_caption_forward.8} parent=0 // pred_check
    _
  $region7: #{image_caption_forward.8} parent=0 // pred_check_branch
    %11 = sbr.rel (0) target = $region9
  $region8: #{image_caption_forward.8} parent=0 // pred_region
    _
  $region9: #{image_caption_forward.8} parent=0 // pred_fallthru
    _
  // Predicated region
  $region10: #{image_caption_forward.8} parent=0 // pred_check
    _
  $region11: #{image_caption_forward.8} parent=0 // pred_check_branch
    %13 = sbr.rel (0) target = $region13
  $region12: #{image_caption_forward.8} parent=0 // pred_region
    _
  $region13: #{image_caption_forward.8} parent=0 // pred_fallthru
    _
  %v15 = vld [vmem:[%s0] sm:$0x1]
  %v16 = vld [vmem:[%s1] sm:$0xf]
  %v17 = vld [vmem:[%s1 + $0x4] sm:$0xf]
  %v18 = vld [vmem:[%s1 + $0x8] sm:$0xf]
  %v19 = vld [vmem:[%s1 + $0xc] sm:$0xf]
  %v20 = vld [vmem:[%s1 + $0x10] sm:$0xf]
  %v21 = vld [vmem:[%s1 + $0x14] sm:$0xf]
  %v22 = vld [vmem:[%s1 + $0x18] sm:$0xf]
  %v23 = vld [vmem:[%s1 + $0x1c] sm:$0xf]
  %v24 = vld [vmem:[%s1 + $0x20] sm:$0xf]
  %v25 = vld [vmem:[%s1 + $0x24] sm:$0xf]
  %v26 = vld [vmem:[%s1 + $0x28] sm:$0xf]
  %v27 = vld [vmem:[%s1 + $0x2c] sm:$0xf]
  %v28 = vld [vmem:[%s1 + $0x30] sm:$0xf]
  %v29 = vld [vmem:[%s1 + $0x34] sm:$0xf]
  %v30 = vld [vmem:[%s1 + $0x38] sm:$0xf]
  %v31 = vld [vmem:[%s1 + $0x3c] sm:$0xf]
  %v32 = vld [vmem:[%s2] sm:$0x1]
  %v34 = vlaneseq
  %v35 = vshrl.u32 %v34, 7
  %v36 = vsub.s32 0, %v35
  %v37 = vrot.slane %v32, %v36
  %v55 = vunpack.c.l.b16 %v16
  %v56 = vunpack.c.l.b16 %v17
  %v57 = vunpack.c.l.b16 %v18
  %v58 = vunpack.c.l.b16 %v19
  %v59 = vunpack.c.l.b16 %v20
  %v60 = vunpack.c.l.b16 %v21
  %v61 = vunpack.c.l.b16 %v22
  %v62 = vunpack.c.l.b16 %v23
  %v63 = vunpack.c.l.b16 %v24
  %v64 = vunpack.c.l.b16 %v25
  %v65 = vunpack.c.l.b16 %v26
  %v66 = vunpack.c.l.b16 %v27
  %v67 = vunpack.c.l.b16 %v28
  %v68 = vunpack.c.l.b16 %v29
  %v69 = vunpack.c.l.b16 %v30
  %v70 = vunpack.c.l.b16 %v31
  %v71 = vpack.c.b16 %v56, %v55
  %v72 = vpack.c.b16 %v58, %v57
  %v73 = vpack.c.b16 %v60, %v59
  %v74 = vpack.c.b16 %v62, %v61
  %v75 = vpack.c.b16 %v64, %v63
  %v76 = vpack.c.b16 %v66, %v65
  %v77 = vpack.c.b16 %v68, %v67
  %v78 = vpack.c.b16 %v70, %v69
  %87 = vmatprep.subr.bf16.mxu0 0
  %88 = vmatpush1.bf16.msra.mxu0 %v78
  %89 = vmatprep.subr.bf16.mxu0 0
  %90 = vmatpush1.bf16.msra.mxu0 %v77
  %91 = vmatprep.subr.bf16.mxu0 0
  %92 = vmatpush1.bf16.msra.mxu0 %v76
  %93 = vmatprep.subr.bf16.mxu0 0
  %94 = vmatpush1.bf16.msra.mxu0 %v75
  %95 = vmatprep.subr.bf16.mxu0 0
  %96 = vmatpush1.bf16.msra.mxu0 %v74
  %97 = vmatprep.subr.bf16.mxu0 0
  %98 = vmatpush1.bf16.msra.mxu0 %v73
  %99 = vmatprep.subr.bf16.mxu0 0
  %100 = vmatpush1.bf16.msra.mxu0 %v72
  %101 = vmatprep.subr.bf16.mxu0 0
  %102 = vmatpush1.bf16.msra.mxu0 %v71
  %103 = vmatprep.subr.bf16.mxu0 0
  %104 = vmatpush2.bf16.msra.mxu0 0
  %105 = vmatprep.subr.bf16.mxu0 0
  %106 = vmatpush2.bf16.msra.mxu0 0
  %107 = vmatprep.subr.bf16.mxu0 0
  %108 = vmatpush2.bf16.msra.mxu0 0
  %109 = vmatprep.subr.bf16.mxu0 0
  %110 = vmatpush2.bf16.msra.mxu0 0
  %111 = vmatprep.subr.bf16.mxu0 0
  %112 = vmatpush2.bf16.msra.mxu0 0
  %113 = vmatprep.subr.bf16.mxu0 0
  %114 = vmatpush2.bf16.msra.mxu0 0
  %115 = vmatprep.subr.bf16.mxu0 0
  %116 = vmatpush2.bf16.msra.mxu0 0
  %117 = vmatprep.subr.bf16.mxu0 0
  %118 = vmatpush2.bf16.msra.mxu0 0
  %119 = vmatprep.mubr.bf16.mxu0 0
  %120 = vmatmul.mubr.bf16.gmra.mxu0 %v15
  %v121 = vpop.f32.mrf.mxu0
  %v122 = vadd.f32 %v37, %v121
  %v123 = vpop.f32.mrf.mxu0
  %v124 = vpop.f32.mrf.mxu0
  %v125 = vpop.f32.mrf.mxu0
  %126 = vdwg.mxu0
  %127 = vst [vmem:[%s3] sm:$0x3] %v122
  // Predicated region
  $region14: #{image_caption_forward.8} parent=0 // pred_check
    _
  $region15: #{image_caption_forward.8} parent=0 // pred_check_branch
    %129 = sbr.rel (0) target = $region17
  $region16: #{image_caption_forward.8} parent=0 // pred_region
    _
  $region17: #{image_caption_forward.8} parent=0 // pred_fallthru
    _
  // Predicated region
  $region18: #{image_caption_forward.8} parent=0 // pred_check
    _
  $region19: #{image_caption_forward.8} parent=0 // pred_check_branch
    %131 = sbr.rel (0) target = $region21
  $region20: #{image_caption_forward.8} parent=0 // pred_region
    _
  $region21: #{image_caption_forward.8} parent=0 // pred_fallthru
    _

// kernel: image_caption_forward.6
$region0: #{image_caption_forward.6}
  #allocation0 [shape = 'u32[]', space=smem, size = 0x4, offset = 0x4, fixed_abs, tag = 'smem constant byte address 0x4 - core index']
  #allocation1 [shape = 'u32[144,128]{1,0:T(1,128)}', space=vmem, size = 0x12000, scoped, tag = 'internal scratch']
  %s0 = inlined_call_operand.vmem [shape: bf16[2,256,32], index: 0, kind: input, shape index: {}]
  %s1 = inlined_call_operand.vmem [shape: bf16[32,128], index: 1, kind: input, shape index: {}]
  %s2 = inlined_call_operand.vmem [shape: f32[1,128], index: 2, kind: input, shape index: {}]
  %s3 = inlined_call_operand.vmem [shape: f32[2,1,128], index: 3, kind: output, shape index: {}]
  %s4 = sld [smem:[#allocation0]]
  $region45: #{image_caption_forward.6} parent=0
    _
  %s6 = ssub.s32 1, %s4
  %s7 = scalar_select 0, %s6, %s4
  loop: start=0, step=1, limit=4
  $region2: #{image_caption_forward.6} parent=0 // loop_pre_header
    _
  $region3: #{image_caption_forward.6} parent=0 // loop_header
    %s9 = sphi 0, %s13
    %p10 = scmp.ge.s32.totalorder %s9, 4
    %s19 = sphi 0, %s21
    %s22 = sphi 0, %s19
    %s23 = sphi 0, %s22
    %s39 = sphi 0, %s23
    %s43 = sphi 0, %s43
    %s45 = sphi 0, %s43
    %s46 = sphi 0, %s45
    %s60 = sphi 0, %s46
    %s64 = sphi 0, %s64
    %s66 = sphi 0, %s64
    %s67 = sphi 0, %s66
    %s81 = sphi 0, %s67
    %s87 = sphi 0, %s89
    %s90 = sphi 0, %s87
    %s91 = sphi 0, %s90
    %s107 = sphi 0, %s91
  $region4: #{image_caption_forward.6} parent=0 // loop_header_branch
    %12 = sbr.rel (%p10) target = $region8
  $region5: #{image_caption_forward.6} parent=0 // loop_body
    %s14 = ssub.s32 %s9, 1
    %s15 = ssub.s32 %s9, 2
    %s16 = sadd.s32 %s9, 1
    %s17 = ssub.s32 %s9, %s16
    %p18 = scmp.eq.s32.totalorder %s17, 0
    %s20 = sadd.s32 %s19, 1
    %s21 = scalar_select %p18, %s19, %s20
    %p24 = pneg %p18
    %p25 = scmp.eq.s32.totalorder %s9, 1
    %p26 = por %p24, %p25
    %p27 = scmp.ne.s32.totalorder %s19, %s22
    %p28 = scmp.eq.s32.totalorder %s9, 0
    %p29 = por %p27, %p28
    %p30 = scmp.ne.s32.totalorder %s19, %s22
    %p31 = scmp.eq.s32.totalorder %s14, 1
    %p32 = por %p30, %p31
    %p33 = scmp.ne.s32.totalorder %s22, %s23
    %p34 = scmp.eq.s32.totalorder %s14, 0
    %p35 = por %p33, %p34
    %p36 = scmp.ne.s32.totalorder %s22, %s23
    %p37 = scmp.eq.s32.totalorder %s15, 1
    %p38 = por %p36, %p37
    %p40 = scmp.ne.s32.totalorder %s23, %s39
    %p41 = scmp.eq.s32.totalorder %s15, 0
    %p42 = por %p40, %p41
    %s44 = sadd.s32 %s43, 1
    %p47 = scmp.eq.s32.totalorder %s9, 1
    %p48 = scmp.ne.s32.totalorder %s43, %s45
    %p49 = scmp.eq.s32.totalorder %s9, 0
    %p50 = por %p48, %p49
    %p51 = scmp.ne.s32.totalorder %s43, %s45
    %p52 = scmp.eq.s32.totalorder %s14, 1
    %p53 = por %p51, %p52
    %p54 = scmp.ne.s32.totalorder %s45, %s46
    %p55 = scmp.eq.s32.totalorder %s14, 0
    %p56 = por %p54, %p55
    %p57 = scmp.ne.s32.totalorder %s45, %s46
    %p58 = scmp.eq.s32.totalorder %s15, 1
    %p59 = por %p57, %p58
    %p61 = scmp.ne.s32.totalorder %s46, %s60
    %p62 = scmp.eq.s32.totalorder %s15, 0
    %p63 = por %p61, %p62
    %s65 = sadd.s32 %s64, 1
    %p68 = scmp.eq.s32.totalorder %s9, 1
    %p69 = scmp.ne.s32.totalorder %s64, %s66
    %p70 = scmp.eq.s32.totalorder %s9, 0
    %p71 = por %p69, %p70
    %p72 = scmp.ne.s32.totalorder %s64, %s66
    %p73 = scmp.eq.s32.totalorder %s14, 1
    %p74 = por %p72, %p73
    %p75 = scmp.ne.s32.totalorder %s66, %s67
    %p76 = scmp.eq.s32.totalorder %s14, 0
    %p77 = por %p75, %p76
    %p78 = scmp.ne.s32.totalorder %s66, %s67
    %p79 = scmp.eq.s32.totalorder %s15, 1
    %p80 = por %p78, %p79
    %p82 = scmp.ne.s32.totalorder %s67, %s81
    %p83 = scmp.eq.s32.totalorder %s15, 0
    %p84 = por %p82, %p83
    %s85 = ssub.s32 %s9, %s16
    %p86 = scmp.eq.s32.totalorder %s85, 0
    %s88 = sadd.s32 %s87, 1
    %s89 = scalar_select %p86, %s87, %s88
    %p92 = pneg %p86
    %p93 = scmp.eq.s32.totalorder %s9, 1
    %p94 = por %p92, %p93
    %p95 = scmp.ne.s32.totalorder %s87, %s90
    %p96 = scmp.eq.s32.totalorder %s9, 0
    %p97 = por %p95, %p96
    %p98 = scmp.ne.s32.totalorder %s87, %s90
    %p99 = scmp.eq.s32.totalorder %s14, 1
    %p100 = por %p98, %p99
    %p101 = scmp.ne.s32.totalorder %s90, %s91
    %p102 = scmp.eq.s32.totalorder %s14, 0
    %p103 = por %p101, %p102
    %p104 = scmp.ne.s32.totalorder %s90, %s91
    %p105 = scmp.eq.s32.totalorder %s15, 1
    %p106 = por %p104, %p105
    %p108 = scmp.ne.s32.totalorder %s91, %s107
    %p109 = scmp.eq.s32.totalorder %s15, 0
    %p110 = por %p108, %p109
    %p111 = scmp.le.s32.totalorder 1, %s9
    %p112 = scmp.lt.s32.totalorder %s9, 3
    %p113 = pnand %p111, %p112
    %p114 = pneg %p113
    // Predicated region
    $region9: #{image_caption_forward.6} parent=5 // pred_check
      _
    $region10: #{image_caption_forward.6} parent=5 // pred_check_branch
      %116 = sbr.rel (%p113) target = $region12
    $region11: #{image_caption_forward.6} parent=5 // pred_region
      %s117 = ssub.s32 %s9, 1
      // Predicated region
      $region13: #{image_caption_forward.6} parent=11 // pred_check
        %p118 = pneg %p56
      $region14: #{image_caption_forward.6} parent=11 // pred_check_branch
        %120 = sbr.rel (%p118) target = $region16
      $region15: #{image_caption_forward.6} parent=11 // pred_region
        _
      $region16: #{image_caption_forward.6} parent=11 // pred_fallthru
        _
      // Predicated region
      $region17: #{image_caption_forward.6} parent=11 // pred_check
        %p121 = pneg %p77
      $region18: #{image_caption_forward.6} parent=11 // pred_check_branch
        %123 = sbr.rel (%p121) target = $region20
      $region19: #{image_caption_forward.6} parent=11 // pred_region
        _
      $region20: #{image_caption_forward.6} parent=11 // pred_fallthru
        _
    $region12: #{image_caption_forward.6} parent=5 // pred_fallthru
      _
    %p124 = scmp.lt.s32.totalorder %s9, 2
    // Predicated region
    $region21: #{image_caption_forward.6} parent=5 // pred_check
      %p125 = pneg %p124
    $region22: #{image_caption_forward.6} parent=5 // pred_check_branch
      %127 = sbr.rel (%p125) target = $region24
    $region23: #{image_caption_forward.6} parent=5 // pred_region
      // Predicated region
      $region25: #{image_caption_forward.6} parent=23 // pred_check
        %p128 = pneg %p29
      $region26: #{image_caption_forward.6} parent=23 // pred_check_branch
        %130 = sbr.rel (%p128) target = $region28
      $region27: #{image_caption_forward.6} parent=23 // pred_region
        %p131 = scmp.lt.s32.totalorder %s9, 1
        %s132 = scalar_select %p131, %s9, 1
        %s133 = smul.addr %s132, 32
        %s134 = smul.addr %s133, 4
        %s135 = scalar_lea.vmem %s0, %s134
      $region28: #{image_caption_forward.6} parent=23 // pred_fallthru
        _
    $region24: #{image_caption_forward.6} parent=5 // pred_fallthru
      _
    %p136 = scmp.le.s32.totalorder 1, %s9
    %p137 = scmp.lt.s32.totalorder %s9, 3
    %p138 = pnand %p136, %p137
    %p139 = pneg %p138
    // Predicated region
    $region29: #{image_caption_forward.6} parent=5 // pred_check
      _
    $region30: #{image_caption_forward.6} parent=5 // pred_check_branch
      %141 = sbr.rel (%p138) target = $region32
    $region31: #{image_caption_forward.6} parent=5 // pred_region
      %s142 = ssub.s32 %s9, 1
      %p143 = scmp.lt.s32.totalorder %s14, 1
      %s144 = scalar_select %p143, %s14, 1
      %s145 = smul.addr %s144, 32
      %s146 = smul.addr %s145, 4
      %s147 = scalar_lea.vmem %s0, %s146
      %p148 = pneg %p35
      %p149 = pneg %p32
      %p150 = pneg %p56
      %p151 = pneg %p53
      %p152 = pneg %p77
      %p153 = pneg %p74
      %p154 = pneg %p103
      %p155 = pneg %p100
      %p156 = scmp.lt.s32.totalorder %s14, 1
      %s157 = scalar_select %p156, %s14, 1
      %s158 = scalar_lea.vmem %s3, %s157
      %p159 = scmp.lt.s32.totalorder %s14, 1
      %s160 = scalar_select %p159, %s14, 1
      %s161 = smul.addr %s160, 32
      %s162 = smul.addr %s161, 4
      %s163 = scalar_lea.vmem %s0, %s162
      %p164 = scmp.lt.s32.totalorder %s14, 1
      %s165 = scalar_select %p164, %s14, 1
      %s166 = scalar_lea.vmem %s3, %s165
      %v168 = vld [vmem:[%s163] sm:$0xf]
      %v169 = vld [vmem:[%s163 + $0x4] sm:$0xf]
      %v170 = vld [vmem:[%s163 + $0x8] sm:$0xf]
      %v171 = vld [vmem:[%s163 + $0xc] sm:$0xf]
      %v172 = vld [vmem:[%s163 + $0x10] sm:$0xf]
      %v173 = vld [vmem:[%s163 + $0x14] sm:$0xf]
      %v174 = vld [vmem:[%s163 + $0x18] sm:$0xf]
      %v175 = vld [vmem:[%s163 + $0x1c] sm:$0xf]
      %v176 = vld [vmem:[%s163 + $0x20] sm:$0xf]
      %v177 = vld [vmem:[%s163 + $0x24] sm:$0xf]
      %v178 = vld [vmem:[%s163 + $0x28] sm:$0xf]
      %v179 = vld [vmem:[%s163 + $0x2c] sm:$0xf]
      %v180 = vld [vmem:[%s163 + $0x30] sm:$0xf]
      %v181 = vld [vmem:[%s163 + $0x34] sm:$0xf]
      %v182 = vld [vmem:[%s163 + $0x38] sm:$0xf]
      %v183 = vld [vmem:[%s163 + $0x3c] sm:$0xf]
      %v184 = vld [vmem:[%s163 + $0x40] sm:$0xf]
      %v185 = vld [vmem:[%s163 + $0x44] sm:$0xf]
      %v186 = vld [vmem:[%s163 + $0x48] sm:$0xf]
      %v187 = vld [vmem:[%s163 + $0x4c] sm:$0xf]
      %v188 = vld [vmem:[%s163 + $0x50] sm:$0xf]
      %v189 = vld [vmem:[%s163 + $0x54] sm:$0xf]
      %v190 = vld [vmem:[%s163 + $0x58] sm:$0xf]
      %v191 = vld [vmem:[%s163 + $0x5c] sm:$0xf]
      %v192 = vld [vmem:[%s163 + $0x60] sm:$0xf]
      %v193 = vld [vmem:[%s163 + $0x64] sm:$0xf]
      %v194 = vld [vmem:[%s163 + $0x68] sm:$0xf]
      %v195 = vld [vmem:[%s163 + $0x6c] sm:$0xf]
      %v196 = vld [vmem:[%s163 + $0x70] sm:$0xf]
      %v197 = vld [vmem:[%s163 + $0x74] sm:$0xf]
      %v198 = vld [vmem:[%s163 + $0x78] sm:$0xf]
      %v199 = vld [vmem:[%s163 + $0x7c] sm:$0xf]
      %v200 = vld [vmem:[%s1] sm:$0xf]
      %v201 = vld [vmem:[%s1 + $0x4] sm:$0xf]
      %v202 = vld [vmem:[%s1 + $0x8] sm:$0xf]
      %v203 = vld [vmem:[%s1 + $0xc] sm:$0xf]
      %v204 = vld [vmem:[%s2] sm:$0x1]
      %v206 = vlaneseq
      %v207 = vshrl.u32 %v206, 7
      %v208 = vsub.s32 0, %v207
      %v209 = vrot.slane %v204, %v208
      %v243 = vunpack.c.l.b16 %v168
      %v244 = vunpack.c.l.b16 %v169
      %v245 = vunpack.c.l.b16 %v170
      %v246 = vunpack.c.l.b16 %v171
      %v247 = vunpack.c.l.b16 %v172
      %v248 = vunpack.c.l.b16 %v173
      %v249 = vunpack.c.l.b16 %v174
      %v250 = vunpack.c.l.b16 %v175
      %v251 = vunpack.c.l.b16 %v176
      %v252 = vunpack.c.l.b16 %v177
      %v253 = vunpack.c.l.b16 %v178
      %v254 = vunpack.c.l.b16 %v179
      %v255 = vunpack.c.l.b16 %v180
      %v256 = vunpack.c.l.b16 %v181
      %v257 = vunpack.c.l.b16 %v182
      %v258 = vunpack.c.l.b16 %v183
      %v259 = vunpack.c.l.b16 %v184
      %v260 = vunpack.c.l.b16 %v185
      %v261 = vunpack.c.l.b16 %v186
      %v262 = vunpack.c.l.b16 %v187
      %v263 = vunpack.c.l.b16 %v188
      %v264 = vunpack.c.l.b16 %v189
      %v265 = vunpack.c.l.b16 %v190
      %v266 = vunpack.c.l.b16 %v191
      %v267 = vunpack.c.l.b16 %v192
      %v268 = vunpack.c.l.b16 %v193
      %v269 = vunpack.c.l.b16 %v194
      %v270 = vunpack.c.l.b16 %v195
      %v271 = vunpack.c.l.b16 %v196
      %v272 = vunpack.c.l.b16 %v197
      %v273 = vunpack.c.l.b16 %v198
      %v274 = vunpack.c.l.b16 %v199
      %v275 = vpack.c.b16 %v244, %v243
      %v276 = vpack.c.b16 %v246, %v245
      %v277 = vpack.c.b16 %v248, %v247
      %v278 = vpack.c.b16 %v250, %v249
      %v279 = vpack.c.b16 %v252, %v251
      %v280 = vpack.c.b16 %v254, %v253
      %v281 = vpack.c.b16 %v256, %v255
      %v282 = vpack.c.b16 %v258, %v257
      %v283 = vpack.c.b16 %v260, %v259
      %v284 = vpack.c.b16 %v262, %v261
      %v285 = vpack.c.b16 %v264, %v263
      %v286 = vpack.c.b16 %v266, %v265
      %v287 = vpack.c.b16 %v268, %v267
      %v288 = vpack.c.b16 %v270, %v269
      %v289 = vpack.c.b16 %v272, %v271
      %v290 = vpack.c.b16 %v274, %v273
      %v295 = vunpack.c.l.b16 %v200
      %v296 = vunpack.c.l.b16 %v201
      %v297 = vunpack.c.l.b16 %v202
      %v298 = vunpack.c.l.b16 %v203
      %v299 = vpack.c.b16 %v296, %v295
      %v300 = vpack.c.b16 %v298, %v297
      %vm303 = vcmask 261120
      %v305 = vsel %vm303, %v275, 0
      %v308 = vsel %vm303, %v276, 0
      %v311 = vsel %vm303, %v277, 0
      %v314 = vsel %vm303, %v278, 0
      %v317 = vsel %vm303, %v279, 0
      %v320 = vsel %vm303, %v280, 0
      %v323 = vsel %vm303, %v281, 0
      %v326 = vsel %vm303, %v282, 0
      %v329 = vsel %vm303, %v283, 0
      %v332 = vsel %vm303, %v284, 0
      %v335 = vsel %vm303, %v285, 0
      %v338 = vsel %vm303, %v286, 0
      %v341 = vsel %vm303, %v287, 0
      %v344 = vsel %vm303, %v288, 0
      %v347 = vsel %vm303, %v289, 0
      %v350 = vsel %vm303, %v290, 0
      %352 = vmatprep.subr.bf16.mxu0 0
      %353 = vmatpush1.bf16.msra.mxu0 0
      %354 = vmatprep.subr.bf16.mxu0 0
      %355 = vmatpush1.bf16.msra.mxu0 0
      %356 = vmatprep.subr.bf16.mxu0 0
      %357 = vmatpush1.bf16.msra.mxu0 0
      %358 = vmatprep.subr.bf16.mxu0 0
      %359 = vmatpush1.bf16.msra.mxu0 0
      %360 = vmatprep.subr.bf16.mxu0 0
      %361 = vmatpush1.bf16.msra.mxu0 0
      %362 = vmatprep.subr.bf16.mxu0 0
      %363 = vmatpush1.bf16.msra.mxu0 0
      %364 = vmatprep.subr.bf16.mxu0 0
      %365 = vmatpush1.bf16.msra.mxu0 %v300
      %366 = vmatprep.subr.bf16.mxu0 0
      %367 = vmatpush1.bf16.msra.mxu0 %v299
      %368 = vmatprep.subr.bf16.mxu0 0
      %369 = vmatpush2.bf16.msra.mxu0 0
      %370 = vmatprep.subr.bf16.mxu0 0
      %371 = vmatpush2.bf16.msra.mxu0 0
      %372 = vmatprep.subr.bf16.mxu0 0
      %373 = vmatpush2.bf16.msra.mxu0 0
      %374 = vmatprep.subr.bf16.mxu0 0
      %375 = vmatpush2.bf16.msra.mxu0 0
      %376 = vmatprep.subr.bf16.mxu0 0
      %377 = vmatpush2.bf16.msra.mxu0 0
      %378 = vmatprep.subr.bf16.mxu0 0
      %379 = vmatpush2.bf16.msra.mxu0 0
      %380 = vmatprep.subr.bf16.mxu0 0
      %381 = vmatpush2.bf16.msra.mxu0 0
      %382 = vmatprep.subr.bf16.mxu0 0
      %383 = vmatpush2.bf16.msra.mxu0 0
      %384 = vmatprep.mubr.bf16.mxu0 0
      %385 = vmatmul.mubr.bf16.gmra.mxu0 %v305
      %v386 = vpop.f32.mrf.mxu0
      %v387 = vadd.f32 %v209, %v386
      %v388 = vpop.f32.mrf.mxu0
      %v389 = vpop.f32.mrf.mxu0
      %v390 = vadd.f32 %v209, %v389
      %v391 = vpop.f32.mrf.mxu0
      %392 = vmatprep.mubr.bf16.mxu0 0
      %393 = vmatmul.mubr.bf16.gmra.mxu0 %v308
      %v394 = vpop.f32.mrf.mxu0
      %v395 = vadd.f32 %v209, %v394
      %v396 = vpop.f32.mrf.mxu0
      %v397 = vpop.f32.mrf.mxu0
      %v398 = vadd.f32 %v209, %v397
      %v399 = vpop.f32.mrf.mxu0
      %400 = vmatprep.mubr.bf16.mxu0 0
      %401 = vmatmul.mubr.bf16.gmra.mxu0 %v311
      %v402 = vpop.f32.mrf.mxu0
      %v403 = vadd.f32 %v209, %v402
      %v404 = vpop.f32.mrf.mxu0
      %v405 = vpop.f32.mrf.mxu0
      %v406 = vadd.f32 %v209, %v405
      %v407 = vpop.f32.mrf.mxu0
      %408 = vmatprep.mubr.bf16.mxu0 0
      %409 = vmatmul.mubr.bf16.gmra.mxu0 %v314
      %v410 = vpop.f32.mrf.mxu0
      %v411 = vadd.f32 %v209, %v410
      %v412 = vpop.f32.mrf.mxu0
      %v413 = vpop.f32.mrf.mxu0
      %v414 = vadd.f32 %v209, %v413
      %v415 = vpop.f32.mrf.mxu0
      %416 = vmatprep.mubr.bf16.mxu0 0
      %417 = vmatmul.mubr.bf16.gmra.mxu0 %v317
      %v418 = vpop.f32.mrf.mxu0
      %v419 = vadd.f32 %v209, %v418
      %v420 = vpop.f32.mrf.mxu0
      %v421 = vpop.f32.mrf.mxu0
      %v422 = vadd.f32 %v209, %v421
      %v423 = vpop.f32.mrf.mxu0
      %424 = vmatprep.mubr.bf16.mxu0 0
      %425 = vmatmul.mubr.bf16.gmra.mxu0 %v320
      %v426 = vpop.f32.mrf.mxu0
      %v427 = vadd.f32 %v209, %v426
      %v428 = vpop.f32.mrf.mxu0
      %v429 = vpop.f32.mrf.mxu0
      %v430 = vadd.f32 %v209, %v429
      %v431 = vpop.f32.mrf.mxu0
      %432 = vmatprep.mubr.bf16.mxu0 0
      %433 = vmatmul.mubr.bf16.gmra.mxu0 %v323
      %v434 = vpop.f32.mrf.mxu0
      %v435 = vadd.f32 %v209, %v434
      %v436 = vpop.f32.mrf.mxu0
      %v437 = vpop.f32.mrf.mxu0
      %v438 = vadd.f32 %v209, %v437
      %v439 = vpop.f32.mrf.mxu0
      %440 = vmatprep.mubr.bf16.mxu0 0
      %441 = vmatmul.mubr.bf16.gmra.mxu0 %v326
      %v442 = vpop.f32.mrf.mxu0
      %v443 = vadd.f32 %v209, %v442
      %v444 = vpop.f32.mrf.mxu0
      %v445 = vpop.f32.mrf.mxu0
      %v446 = vadd.f32 %v209, %v445
      %v447 = vpop.f32.mrf.mxu0
      %448 = vmatprep.mubr.bf16.mxu0 0
      %449 = vmatmul.mubr.bf16.gmra.mxu0 %v329
      %v450 = vpop.f32.mrf.mxu0
      %v451 = vadd.f32 %v209, %v450
      %v452 = vpop.f32.mrf.mxu0
      %v453 = vpop.f32.mrf.mxu0
      %v454 = vadd.f32 %v209, %v453
      %v455 = vpop.f32.mrf.mxu0
      %456 = vmatprep.mubr.bf16.mxu0 0
      %457 = vmatmul.mubr.bf16.gmra.mxu0 %v332
      %v458 = vpop.f32.mrf.mxu0
      %v459 = vadd.f32 %v209, %v458
      %v460 = vpop.f32.mrf.mxu0
      %v461 = vpop.f32.mrf.mxu0
      %v462 = vadd.f32 %v209, %v461
      %v463 = vpop.f32.mrf.mxu0
      %464 = vmatprep.mubr.bf16.mxu0 0
      %465 = vmatmul.mubr.bf16.gmra.mxu0 %v335
      %v466 = vpop.f32.mrf.mxu0
      %v467 = vadd.f32 %v209, %v466
      %v468 = vpop.f32.mrf.mxu0
      %v469 = vpop.f32.mrf.mxu0
      %v470 = vadd.f32 %v209, %v469
      %v471 = vpop.f32.mrf.mxu0
      %472 = vmatprep.mubr.bf16.mxu0 0
      %473 = vmatmul.mubr.bf16.gmra.mxu0 %v338
      %v474 = vpop.f32.mrf.mxu0
      %v475 = vadd.f32 %v209, %v474
      %v476 = vpop.f32.mrf.mxu0
      %v477 = vpop.f32.mrf.mxu0
      %v478 = vadd.f32 %v209, %v477
      %v479 = vpop.f32.mrf.mxu0
      %480 = vmatprep.mubr.bf16.mxu0 0
      %481 = vmatmul.mubr.bf16.gmra.mxu0 %v341
      %v482 = vpop.f32.mrf.mxu0
      %v483 = vadd.f32 %v209, %v482
      %v484 = vpop.f32.mrf.mxu0
      %v485 = vpop.f32.mrf.mxu0
      %v486 = vadd.f32 %v209, %v485
      %v487 = vpop.f32.mrf.mxu0
      %488 = vmatprep.mubr.bf16.mxu0 0
      %489 = vmatmul.mubr.bf16.gmra.mxu0 %v344
      %v490 = vpop.f32.mrf.mxu0
      %v491 = vadd.f32 %v209, %v490
      %v492 = vpop.f32.mrf.mxu0
      %v493 = vpop.f32.mrf.mxu0
      %v494 = vadd.f32 %v209, %v493
      %v495 = vpop.f32.mrf.mxu0
      %496 = vmatprep.mubr.bf16.mxu0 0
      %497 = vmatmul.mubr.bf16.gmra.mxu0 %v347
      %v498 = vpop.f32.mrf.mxu0
      %v499 = vadd.f32 %v209, %v498
      %v500 = vpop.f32.mrf.mxu0
      %v501 = vpop.f32.mrf.mxu0
      %v502 = vadd.f32 %v209, %v501
      %v503 = vpop.f32.mrf.mxu0
      %504 = vmatprep.mubr.bf16.mxu0 0
      %505 = vmatmul.mubr.bf16.gmra.mxu0 %v350
      %v506 = vpop.f32.mrf.mxu0
      %v507 = vadd.f32 %v209, %v506
      %v508 = vpop.f32.mrf.mxu0
      %v509 = vpop.f32.mrf.mxu0
      %v510 = vadd.f32 %v209, %v509
      %v511 = vpop.f32.mrf.mxu0
      %512 = vdwg.mxu0
      %v513 = vmax.f32 %v387, 0.0
      %v514 = vmax.f32 %v390, 0.0
      %v515 = vmax.f32 %v395, 0.0
      %v516 = vmax.f32 %v398, 0.0
      %v517 = vmax.f32 %v403, 0.0
      %v518 = vmax.f32 %v406, 0.0
      %v519 = vmax.f32 %v411, 0.0
      %v520 = vmax.f32 %v414, 0.0
      %v521 = vmax.f32 %v419, 0.0
      %v522 = vmax.f32 %v422, 0.0
      %v523 = vmax.f32 %v427, 0.0
      %v524 = vmax.f32 %v430, 0.0
      %v525 = vmax.f32 %v435, 0.0
      %v526 = vmax.f32 %v438, 0.0
      %v527 = vmax.f32 %v443, 0.0
      %v528 = vmax.f32 %v446, 0.0
      %v529 = vmax.f32 %v451, 0.0
      %v530 = vmax.f32 %v454, 0.0
      %v531 = vmax.f32 %v459, 0.0
      %v532 = vmax.f32 %v462, 0.0
      %v533 = vmax.f32 %v467, 0.0
      %v534 = vmax.f32 %v470, 0.0
      %v535 = vmax.f32 %v475, 0.0
      %v536 = vmax.f32 %v478, 0.0
      %v537 = vmax.f32 %v483, 0.0
      %v538 = vmax.f32 %v486, 0.0
      %v539 = vmax.f32 %v491, 0.0
      %v540 = vmax.f32 %v494, 0.0
      %v541 = vmax.f32 %v499, 0.0
      %v542 = vmax.f32 %v502, 0.0
      %v543 = vmax.f32 %v507, 0.0
      %v544 = vmax.f32 %v510, 0.0
      %v545 = vadd.f32 %v513, %v514
      %v546 = vadd.f32 %v545, %v515
      %v547 = vadd.f32 %v546, %v516
      %v548 = vadd.f32 %v547, %v517
      %v549 = vadd.f32 %v548, %v518
      %v550 = vadd.f32 %v549, %v519
      %v551 = vadd.f32 %v550, %v520
      %v552 = vadd.f32 %v551, %v521
      %v553 = vadd.f32 %v552, %v522
      %v554 = vadd.f32 %v553, %v523
      %v555 = vadd.f32 %v554, %v524
      %v556 = vadd.f32 %v555, %v525
      %v557 = vadd.f32 %v556, %v526
      %v558 = vadd.f32 %v557, %v527
      %v559 = vadd.f32 %v558, %v528
      %v560 = vadd.f32 %v559, %v529
      %v561 = vadd.f32 %v560, %v530
      %v562 = vadd.f32 %v561, %v531
      %v563 = vadd.f32 %v562, %v532
      %v564 = vadd.f32 %v563, %v533
      %v565 = vadd.f32 %v564, %v534
      %v566 = vadd.f32 %v565, %v535
      %v567 = vadd.f32 %v566, %v536
      %v568 = vadd.f32 %v567, %v537
      %v569 = vadd.f32 %v568, %v538
      %v570 = vadd.f32 %v569, %v539
      %v571 = vadd.f32 %v570, %v540
      %v572 = vadd.f32 %v571, %v541
      %v573 = vadd.f32 %v572, %v542
      %v574 = vadd.f32 %v573, %v543
      %v575 = vadd.f32 %v574, %v544
      %v576 = vrot.slane %v575, 4
      %v577 = vadd.f32 %v575, %v576
      %v578 = vrot.slane %v577, 2
      %v579 = vadd.f32 %v577, %v578
      %v580 = vrot.slane %v579, 1
      %v581 = vadd.f32 %v579, %v580
      %v582 = vrcp.pop 256.0
      %v583 = vmul.f32 %v581, %v582
      %584 = vst [vmem:[%s166] sm:$0x1] %v583
      %p585 = scmp.lt.s32.totalorder %s14, 1
      %s586 = scalar_select %p585, %s14, 1
      %s587 = scalar_lea.vmem %s3, %s586
      // Predicated region
      $region33: #{image_caption_forward.6} parent=31 // pred_check
        %p588 = pneg %p100
      $region34: #{image_caption_forward.6} parent=31 // pred_check_branch
        %590 = sbr.rel (%p588) target = $region36
      $region35: #{image_caption_forward.6} parent=31 // pred_region
        _
      $region36: #{image_caption_forward.6} parent=31 // pred_fallthru
        _
    $region32: #{image_caption_forward.6} parent=5 // pred_fallthru
      _
    %p591 = scmp.le.s32.totalorder 2, %s9
    // Predicated region
    $region37: #{image_caption_forward.6} parent=5 // pred_check
      %p592 = pneg %p591
    $region38: #{image_caption_forward.6} parent=5 // pred_check_branch
      %594 = sbr.rel (%p592) target = $region40
    $region39: #{image_caption_forward.6} parent=5 // pred_region
      %s595 = ssub.s32 %s9, 2
      // Predicated region
      $region41: #{image_caption_forward.6} parent=39 // pred_check
        %p596 = pneg %p106
      $region42: #{image_caption_forward.6} parent=39 // pred_check_branch
        %598 = sbr.rel (%p596) target = $region44
      $region43: #{image_caption_forward.6} parent=39 // pred_region
        %p599 = scmp.lt.s32.totalorder %s15, 1
        %s600 = scalar_select %p599, %s15, 1
        %s601 = scalar_lea.vmem %s3, %s600
      $region44: #{image_caption_forward.6} parent=39 // pred_fallthru
        _
    $region40: #{image_caption_forward.6} parent=5 // pred_fallthru
      _
  $region6: #{image_caption_forward.6} parent=0 // loop_footer
    %s13 = sadd.s32 1, %s9
  $region7: #{image_caption_forward.6} parent=0 // loop_footer_branch
    %8 = sbr.rel target = $region3
  $region8: #{image_caption_forward.6} parent=0 // loop_exit
    _

// kernel: image_caption_forward.9
$region0: #{image_caption_forward.9}
  #allocation0 [shape = 'u32[]', space=smem, size = 0x4, offset = 0x4, fixed_abs, tag = 'smem constant byte address 0x4 - core index']
  #allocation1 [shape = 'u32[144,128]{1,0:T(1,128)}', space=vmem, size = 0x12000, scoped, tag = 'internal scratch']
  %s0 = inlined_call_operand.vmem [shape: bf16[64,128], index: 0, kind: input, shape index: {}]
  %s1 = inlined_call_operand.vmem [shape: bf16[128,512], index: 1, kind: input, shape index: {}]
  %s2 = inlined_call_operand.vmem [shape: f32[1,512], index: 2, kind: input, shape index: {}]
  %s3 = inlined_call_operand.vmem [shape: f32[64,512], index: 3, kind: output, shape index: {}]
  %s4 = sld [smem:[#allocation0]]
  $region45: #{image_caption_forward.9} parent=0
    _
  %s6 = ssub.s32 1, %s4
  %s7 = scalar_select 0, %s6, %s4
  loop: start=0, step=1, limit=4
  $region2: #{image_caption_forward.9} parent=0 // loop_pre_header
    _
  $region3: #{image_caption_forward.9} parent=0 // loop_header
    %s9 = sphi 0, %s13
    %p10 = scmp.ge.s32.totalorder %s9, 4
    %s19 = sphi 0, %s21
    %s22 = sphi 0, %s19
    %s23 = sphi 0, %s22
    %s39 = sphi 0, %s23
    %s43 = sphi 0, %s43
    %s45 = sphi 0, %s43
    %s46 = sphi 0, %s45
    %s60 = sphi 0, %s46
    %s64 = sphi 0, %s64
    %s66 = sphi 0, %s64
    %s67 = sphi 0, %s66
    %s81 = sphi 0, %s67
    %s87 = sphi 0, %s89
    %s90 = sphi 0, %s87
    %s91 = sphi 0, %s90
    %s107 = sphi 0, %s91
  $region4: #{image_caption_forward.9} parent=0 // loop_header_branch
    %12 = sbr.rel (%p10) target = $region8
  $region5: #{image_caption_forward.9} parent=0 // loop_body
    %s14 = ssub.s32 %s9, 1
    %s15 = ssub.s32 %s9, 2
    %s16 = sadd.s32 %s9, 1
    %s17 = ssub.s32 %s9, %s16
    %p18 = scmp.eq.s32.totalorder %s17, 0
    %s20 = sadd.s32 %s19, 1
    %s21 = scalar_select %p18, %s19, %s20
    %p24 = pneg %p18
    %p25 = scmp.eq.s32.totalorder %s9, 1
    %p26 = por %p24, %p25
    %p27 = scmp.ne.s32.totalorder %s19, %s22
    %p28 = scmp.eq.s32.totalorder %s9, 0
    %p29 = por %p27, %p28
    %p30 = scmp.ne.s32.totalorder %s19, %s22
    %p31 = scmp.eq.s32.totalorder %s14, 1
    %p32 = por %p30, %p31
    %p33 = scmp.ne.s32.totalorder %s22, %s23
    %p34 = scmp.eq.s32.totalorder %s14, 0
    %p35 = por %p33, %p34
    %p36 = scmp.ne.s32.totalorder %s22, %s23
    %p37 = scmp.eq.s32.totalorder %s15, 1
    %p38 = por %p36, %p37
    %p40 = scmp.ne.s32.totalorder %s23, %s39
    %p41 = scmp.eq.s32.totalorder %s15, 0
    %p42 = por %p40, %p41
    %s44 = sadd.s32 %s43, 1
    %p47 = scmp.eq.s32.totalorder %s9, 1
    %p48 = scmp.ne.s32.totalorder %s43, %s45
    %p49 = scmp.eq.s32.totalorder %s9, 0
    %p50 = por %p48, %p49
    %p51 = scmp.ne.s32.totalorder %s43, %s45
    %p52 = scmp.eq.s32.totalorder %s14, 1
    %p53 = por %p51, %p52
    %p54 = scmp.ne.s32.totalorder %s45, %s46
    %p55 = scmp.eq.s32.totalorder %s14, 0
    %p56 = por %p54, %p55
    %p57 = scmp.ne.s32.totalorder %s45, %s46
    %p58 = scmp.eq.s32.totalorder %s15, 1
    %p59 = por %p57, %p58
    %p61 = scmp.ne.s32.totalorder %s46, %s60
    %p62 = scmp.eq.s32.totalorder %s15, 0
    %p63 = por %p61, %p62
    %s65 = sadd.s32 %s64, 1
    %p68 = scmp.eq.s32.totalorder %s9, 1
    %p69 = scmp.ne.s32.totalorder %s64, %s66
    %p70 = scmp.eq.s32.totalorder %s9, 0
    %p71 = por %p69, %p70
    %p72 = scmp.ne.s32.totalorder %s64, %s66
    %p73 = scmp.eq.s32.totalorder %s14, 1
    %p74 = por %p72, %p73
    %p75 = scmp.ne.s32.totalorder %s66, %s67
    %p76 = scmp.eq.s32.totalorder %s14, 0
    %p77 = por %p75, %p76
    %p78 = scmp.ne.s32.totalorder %s66, %s67
    %p79 = scmp.eq.s32.totalorder %s15, 1
    %p80 = por %p78, %p79
    %p82 = scmp.ne.s32.totalorder %s67, %s81
    %p83 = scmp.eq.s32.totalorder %s15, 0
    %p84 = por %p82, %p83
    %s85 = ssub.s32 %s9, %s16
    %p86 = scmp.eq.s32.totalorder %s85, 0
    %s88 = sadd.s32 %s87, 1
    %s89 = scalar_select %p86, %s87, %s88
    %p92 = pneg %p86
    %p93 = scmp.eq.s32.totalorder %s9, 1
    %p94 = por %p92, %p93
    %p95 = scmp.ne.s32.totalorder %s87, %s90
    %p96 = scmp.eq.s32.totalorder %s9, 0
    %p97 = por %p95, %p96
    %p98 = scmp.ne.s32.totalorder %s87, %s90
    %p99 = scmp.eq.s32.totalorder %s14, 1
    %p100 = por %p98, %p99
    %p101 = scmp.ne.s32.totalorder %s90, %s91
    %p102 = scmp.eq.s32.totalorder %s14, 0
    %p103 = por %p101, %p102
    %p104 = scmp.ne.s32.totalorder %s90, %s91
    %p105 = scmp.eq.s32.totalorder %s15, 1
    %p106 = por %p104, %p105
    %p108 = scmp.ne.s32.totalorder %s91, %s107
    %p109 = scmp.eq.s32.totalorder %s15, 0
    %p110 = por %p108, %p109
    %p111 = scmp.le.s32.totalorder 1, %s9
    %p112 = scmp.lt.s32.totalorder %s9, 3
    %p113 = pnand %p111, %p112
    %p114 = pneg %p113
    // Predicated region
    $region9: #{image_caption_forward.9} parent=5 // pred_check
      _
    $region10: #{image_caption_forward.9} parent=5 // pred_check_branch
      %116 = sbr.rel (%p113) target = $region12
    $region11: #{image_caption_forward.9} parent=5 // pred_region
      %s117 = ssub.s32 %s9, 1
      // Predicated region
      $region13: #{image_caption_forward.9} parent=11 // pred_check
        %p118 = pneg %p56
      $region14: #{image_caption_forward.9} parent=11 // pred_check_branch
        %120 = sbr.rel (%p118) target = $region16
      $region15: #{image_caption_forward.9} parent=11 // pred_region
        _
      $region16: #{image_caption_forward.9} parent=11 // pred_fallthru
        _
      // Predicated region
      $region17: #{image_caption_forward.9} parent=11 // pred_check
        %p121 = pneg %p77
      $region18: #{image_caption_forward.9} parent=11 // pred_check_branch
        %123 = sbr.rel (%p121) target = $region20
      $region19: #{image_caption_forward.9} parent=11 // pred_region
        _
      $region20: #{image_caption_forward.9} parent=11 // pred_fallthru
        _
    $region12: #{image_caption_forward.9} parent=5 // pred_fallthru
      _
    %p124 = scmp.lt.s32.totalorder %s9, 2
    // Predicated region
    $region21: #{image_caption_forward.9} parent=5 // pred_check
      %p125 = pneg %p124
    $region22: #{image_caption_forward.9} parent=5 // pred_check_branch
      %127 = sbr.rel (%p125) target = $region24
    $region23: #{image_caption_forward.9} parent=5 // pred_region
      // Predicated region
      $region25: #{image_caption_forward.9} parent=23 // pred_check
        %p128 = pneg %p29
      $region26: #{image_caption_forward.9} parent=23 // pred_check_branch
        %130 = sbr.rel (%p128) target = $region28
      $region27: #{image_caption_forward.9} parent=23 // pred_region
        %s131 = smul.u32 4, %s9
        %p132 = scmp.lt.s32.totalorder %s131, 7
        %s133 = scalar_select %p132, %s131, 7
        %s134 = smul.addr %s133, 4
        %s135 = scalar_lea.vmem %s0, %s134
        %s136 = smul.u32 4, %s9
      $region28: #{image_caption_forward.9} parent=23 // pred_fallthru
        _
    $region24: #{image_caption_forward.9} parent=5 // pred_fallthru
      _
    %p137 = scmp.le.s32.totalorder 1, %s9
    %p138 = scmp.lt.s32.totalorder %s9, 3
    %p139 = pnand %p137, %p138
    %p140 = pneg %p139
    // Predicated region
    $region29: #{image_caption_forward.9} parent=5 // pred_check
      _
    $region30: #{image_caption_forward.9} parent=5 // pred_check_branch
      %142 = sbr.rel (%p139) target = $region32
    $region31: #{image_caption_forward.9} parent=5 // pred_region
      %s143 = ssub.s32 %s9, 1
      %s144 = smul.u32 4, %s14
      %p145 = scmp.lt.s32.totalorder %s144, 7
      %s146 = scalar_select %p145, %s144, 7
      %s147 = smul.addr %s146, 4
      %s148 = scalar_lea.vmem %s0, %s147
      %p149 = pneg %p35
      %p150 = pneg %p32
      %p151 = pneg %p56
      %p152 = pneg %p53
      %p153 = pneg %p77
      %p154 = pneg %p74
      %p155 = pneg %p103
      %p156 = pneg %p100
      %s157 = smul.u32 4, %s14
      %p158 = scmp.lt.s32.totalorder %s157, 7
      %s159 = scalar_select %p158, %s157, 7
      %s160 = smul.addr %s159, 4
      %s161 = smul.addr %s160, 8
      %s162 = scalar_lea.vmem %s3, %s161
      %s163 = smul.u32 4, %s14
      %p164 = scmp.lt.s32.totalorder %s163, 7
      %s165 = scalar_select %p164, %s163, 7
      %s166 = smul.addr %s165, 4
      %s167 = scalar_lea.vmem %s0, %s166
      %s168 = smul.u32 4, %s14
      %s169 = smul.u32 4, %s14
      %p170 = scmp.lt.s32.totalorder %s169, 7
      %s171 = scalar_select %p170, %s169, 7
      %s172 = smul.addr %s171, 4
      %s173 = smul.addr %s172, 8
      %s174 = scalar_lea.vmem %s3, %s173
      %s175 = smul.u32 4, %s14
      %v177 = vld [vmem:[%s167] sm:$0xf]
      %v178 = vld [vmem:[%s167 + $0x4] sm:$0xf]
      %v179 = vld [vmem:[%s167 + $0x8] sm:$0xf]
      %v180 = vld [vmem:[%s167 + $0xc] sm:$0xf]
      %v181 = vld [vmem:[%s1] sm:$0xff]
      %v182 = vld [vmem:[%s1 + $0x8] sm:$0xff]
      %v183 = vld [vmem:[%s1 + $0x10] sm:$0xff]
      %v184 = vld [vmem:[%s1 + $0x18] sm:$0xff]
      %v185 = vld [vmem:[%s1 + $0x20] sm:$0xff]
      %v186 = vld [vmem:[%s1 + $0x28] sm:$0xff]
      %v187 = vld [vmem:[%s1 + $0x30] sm:$0xff]
      %v188 = vld [vmem:[%s1 + $0x38] sm:$0xff]
      %v189 = vld [vmem:[%s1 + $0x40] sm:$0xff]
      %v190 = vld [vmem:[%s1 + $0x48] sm:$0xff]
      %v191 = vld [vmem:[%s1 + $0x50] sm:$0xff]
      %v192 = vld [vmem:[%s1 + $0x58] sm:$0xff]
      %v193 = vld [vmem:[%s1 + $0x60] sm:$0xff]
      %v194 = vld [vmem:[%s1 + $0x68] sm:$0xff]
      %v195 = vld [vmem:[%s1 + $0x70] sm:$0xff]
      %v196 = vld [vmem:[%s1 + $0x78] sm:$0xff]
      %v197 = vld [vmem:[%s1 + $0x80] sm:$0xff]
      %v198 = vld [vmem:[%s1 + $0x88] sm:$0xff]
      %v199 = vld [vmem:[%s1 + $0x90] sm:$0xff]
      %v200 = vld [vmem:[%s1 + $0x98] sm:$0xff]
      %v201 = vld [vmem:[%s1 + $0xa0] sm:$0xff]
      %v202 = vld [vmem:[%s1 + $0xa8] sm:$0xff]
      %v203 = vld [vmem:[%s1 + $0xb0] sm:$0xff]
      %v204 = vld [vmem:[%s1 + $0xb8] sm:$0xff]
      %v205 = vld [vmem:[%s1 + $0xc0] sm:$0xff]
      %v206 = vld [vmem:[%s1 + $0xc8] sm:$0xff]
      %v207 = vld [vmem:[%s1 + $0xd0] sm:$0xff]
      %v208 = vld [vmem:[%s1 + $0xd8] sm:$0xff]
      %v209 = vld [vmem:[%s1 + $0xe0] sm:$0xff]
      %v210 = vld [vmem:[%s1 + $0xe8] sm:$0xff]
      %v211 = vld [vmem:[%s1 + $0xf0] sm:$0xff]
      %v212 = vld [vmem:[%s1 + $0xf8] sm:$0xff]
      %v213 = vld [vmem:[%s2] sm:$0xf]
      %v215 = vlaneseq
      %v216 = vshrl.u32 %v215, 7
      %v217 = vsub.s32 0, %v216
      %v218 = vrot.slane %v213, %v217
      %v219 = vlaneseq
      %v220 = vshrl.u32 %v219, 7
      %v221 = vsub.s32 1, %v220
      %v222 = vrot.slane %v213, %v221
      %v223 = vlaneseq
      %v224 = vshrl.u32 %v223, 7
      %v225 = vsub.s32 2, %v224
      %v226 = vrot.slane %v213, %v225
      %v227 = vlaneseq
      %v228 = vshrl.u32 %v227, 7
      %v229 = vsub.s32 3, %v228
      %v230 = vrot.slane %v213, %v229
      %v239 = vunpack.c.l.b16 %v177
      %v240 = vunpack.c.l.b16 %v178
      %v241 = vunpack.c.l.b16 %v179
      %v242 = vunpack.c.l.b16 %v180
      %v243 = vpack.c.b16 %v240, %v239
      %v244 = vpack.c.b16 %v242, %v241
      %v279 = vunpack.c.l.b16 %v181
      %v280 = vunpack.c.h.b16 %v181
      %v281 = vunpack.c.l.b16 %v182
      %v282 = vunpack.c.h.b16 %v182
      %v283 = vunpack.c.l.b16 %v183
      %v284 = vunpack.c.h.b16 %v183
      %v285 = vunpack.c.l.b16 %v184
      %v286 = vunpack.c.h.b16 %v184
      %v287 = vunpack.c.l.b16 %v185
      %v288 = vunpack.c.h.b16 %v185
      %v289 = vunpack.c.l.b16 %v186
      %v290 = vunpack.c.h.b16 %v186
      %v291 = vunpack.c.l.b16 %v187
      %v292 = vunpack.c.h.b16 %v187
      %v293 = vunpack.c.l.b16 %v188
      %v294 = vunpack.c.h.b16 %v188
      %v295 = vunpack.c.l.b16 %v189
      %v296 = vunpack.c.h.b16 %v189
      %v297 = vunpack.c.l.b16 %v190
      %v298 = vunpack.c.h.b16 %v190
      %v299 = vunpack.c.l.b16 %v191
      %v300 = vunpack.c.h.b16 %v191
      %v301 = vunpack.c.l.b16 %v192
      %v302 = vunpack.c.h.b16 %v192
      %v303 = vunpack.c.l.b16 %v193
      %v304 = vunpack.c.h.b16 %v193
      %v305 = vunpack.c.l.b16 %v194
      %v306 = vunpack.c.h.b16 %v194
      %v307 = vunpack.c.l.b16 %v195
      %v308 = vunpack.c.h.b16 %v195
      %v309 = vunpack.c.l.b16 %v196
      %v310 = vunpack.c.h.b16 %v196
      %v311 = vunpack.c.l.b16 %v197
      %v312 = vunpack.c.h.b16 %v197
      %v313 = vunpack.c.l.b16 %v198
      %v314 = vunpack.c.h.b16 %v198
      %v315 = vunpack.c.l.b16 %v199
      %v316 = vunpack.c.h.b16 %v199
      %v317 = vunpack.c.l.b16 %v200
      %v318 = vunpack.c.h.b16 %v200
      %v319 = vunpack.c.l.b16 %v201
      %v320 = vunpack.c.h.b16 %v201
      %v321 = vunpack.c.l.b16 %v202
      %v322 = vunpack.c.h.b16 %v202
      %v323 = vunpack.c.l.b16 %v203
      %v324 = vunpack.c.h.b16 %v203
      %v325 = vunpack.c.l.b16 %v204
      %v326 = vunpack.c.h.b16 %v204
      %v327 = vunpack.c.l.b16 %v205
      %v328 = vunpack.c.h.b16 %v205
      %v329 = vunpack.c.l.b16 %v206
      %v330 = vunpack.c.h.b16 %v206
      %v331 = vunpack.c.l.b16 %v207
      %v332 = vunpack.c.h.b16 %v207
      %v333 = vunpack.c.l.b16 %v208
      %v334 = vunpack.c.h.b16 %v208
      %v335 = vunpack.c.l.b16 %v209
      %v336 = vunpack.c.h.b16 %v209
      %v337 = vunpack.c.l.b16 %v210
      %v338 = vunpack.c.h.b16 %v210
      %v339 = vunpack.c.l.b16 %v211
      %v340 = vunpack.c.h.b16 %v211
      %v341 = vunpack.c.l.b16 %v212
      %v342 = vunpack.c.h.b16 %v212
      %v343 = vpack.c.b16 %v283, %v279
      %v344 = vpack.c.b16 %v284, %v280
      %v345 = vpack.c.b16 %v285, %v281
      %v346 = vpack.c.b16 %v286, %v282
      %v347 = vpack.c.b16 %v291, %v287
      %v348 = vpack.c.b16 %v292, %v288
      %v349 = vpack.c.b16 %v293, %v289
      %v350 = vpack.c.b16 %v294, %v290
      %v351 = vpack.c.b16 %v299, %v295
      %v352 = vpack.c.b16 %v300, %v296
      %v353 = vpack.c.b16 %v301, %v297
      %v354 = vpack.c.b16 %v302, %v298
      %v355 = vpack.c.b16 %v307, %v303
      %v356 = vpack.c.b16 %v308, %v304
      %v357 = vpack.c.b16 %v309, %v305
      %v358 = vpack.c.b16 %v310, %v306
      %v359 = vpack.c.b16 %v315, %v311
      %v360 = vpack.c.b16 %v316, %v312
      %v361 = vpack.c.b16 %v317, %v313
      %v362 = vpack.c.b16 %v318, %v314
      %v363 = vpack.c.b16 %v323, %v319
      %v364 = vpack.c.b16 %v324, %v320
      %v365 = vpack.c.b16 %v325, %v321
      %v366 = vpack.c.b16 %v326, %v322
      %v367 = vpack.c.b16 %v331, %v327
      %v368 = vpack.c.b16 %v332, %v328
      %v369 = vpack.c.b16 %v333, %v329
      %v370 = vpack.c.b16 %v334, %v330
      %v371 = vpack.c.b16 %v339, %v335
      %v372 = vpack.c.b16 %v340, %v336
      %v373 = vpack.c.b16 %v341, %v337
      %v374 = vpack.c.b16 %v342, %v338
      %407 = vmatprep.subr.bf16.mxu0 %v372
      %408 = vmatpush1.bf16.msra.mxu0 %v371
      %409 = vmatprep.subr.bf16.mxu0 %v368
      %410 = vmatpush1.bf16.msra.mxu0 %v367
      %411 = vmatprep.subr.bf16.mxu0 %v364
      %412 = vmatpush1.bf16.msra.mxu0 %v363
      %413 = vmatprep.subr.bf16.mxu0 %v360
      %414 = vmatpush1.bf16.msra.mxu0 %v359
      %415 = vmatprep.subr.bf16.mxu0 %v356
      %416 = vmatpush1.bf16.msra.mxu0 %v355
      %417 = vmatprep.subr.bf16.mxu0 %v352
      %418 = vmatpush1.bf16.msra.mxu0 %v351
      %419 = vmatprep.subr.bf16.mxu0 %v348
      %420 = vmatpush1.bf16.msra.mxu0 %v347
      %421 = vmatprep.subr.bf16.mxu0 %v344
      %422 = vmatpush1.bf16.msra.mxu0 %v343
      %423 = vmatprep.subr.bf16.mxu0 0
      %424 = vmatpush2.bf16.msra.mxu0 0
      %425 = vmatprep.subr.bf16.mxu0 0
      %426 = vmatpush2.bf16.msra.mxu0 0
      %427 = vmatprep.subr.bf16.mxu0 0
      %428 = vmatpush2.bf16.msra.mxu0 0
      %429 = vmatprep.subr.bf16.mxu0 0
      %430 = vmatpush2.bf16.msra.mxu0 0
      %431 = vmatprep.subr.bf16.mxu0 0
      %432 = vmatpush2.bf16.msra.mxu0 0
      %433 = vmatprep.subr.bf16.mxu0 0
      %434 = vmatpush2.bf16.msra.mxu0 0
      %435 = vmatprep.subr.bf16.mxu0 0
      %436 = vmatpush2.bf16.msra.mxu0 0
      %437 = vmatprep.subr.bf16.mxu0 0
      %438 = vmatpush2.bf16.msra.mxu0 0
      %439 = vmatprep.mubr.bf16.mxu0 0
      %440 = vmatmul.mubr.bf16.gmra.mxu0 %v243
      %v441 = vpop.f32.mrf.mxu0
      %v442 = vadd.f32 %v218, %v441
      %v443 = vpop.f32.mrf.mxu0
      %v444 = vadd.f32 %v222, %v443
      %v445 = vpop.f32.mrf.mxu0
      %v446 = vadd.f32 %v218, %v445
      %v447 = vpop.f32.mrf.mxu0
      %v448 = vadd.f32 %v222, %v447
      %449 = vmatprep.mubr.bf16.mxu0 0
      %450 = vmatmul.mubr.bf16.gmra.mxu0 %v244
      %v451 = vpop.f32.mrf.mxu0
      %v452 = vadd.f32 %v218, %v451
      %v453 = vpop.f32.mrf.mxu0
      %v454 = vadd.f32 %v222, %v453
      %v455 = vpop.f32.mrf.mxu0
      %v456 = vadd.f32 %v218, %v455
      %v457 = vpop.f32.mrf.mxu0
      %v458 = vadd.f32 %v222, %v457
      %459 = vdwg.mxu0
      %460 = vmatprep.subr.bf16.mxu0 %v374
      %461 = vmatpush1.bf16.msra.mxu0 %v373
      %462 = vmatprep.subr.bf16.mxu0 %v370
      %463 = vmatpush1.bf16.msra.mxu0 %v369
      %464 = vmatprep.subr.bf16.mxu0 %v366
      %465 = vmatpush1.bf16.msra.mxu0 %v365
      %466 = vmatprep.subr.bf16.mxu0 %v362
      %467 = vmatpush1.bf16.msra.mxu0 %v361
      %468 = vmatprep.subr.bf16.mxu0 %v358
      %469 = vmatpush1.bf16.msra.mxu0 %v357
      %470 = vmatprep.subr.bf16.mxu0 %v354
      %471 = vmatpush1.bf16.msra.mxu0 %v353
      %472 = vmatprep.subr.bf16.mxu0 %v350
      %473 = vmatpush1.bf16.msra.mxu0 %v349
      %474 = vmatprep.subr.bf16.mxu0 %v346
      %475 = vmatpush1.bf16.msra.mxu0 %v345
      %476 = vmatprep.subr.bf16.mxu0 0
      %477 = vmatpush2.bf16.msra.mxu0 0
      %478 = vmatprep.subr.bf16.mxu0 0
      %479 = vmatpush2.bf16.msra.mxu0 0
      %480 = vmatprep.subr.bf16.mxu0 0
      %481 = vmatpush2.bf16.msra.mxu0 0
      %482 = vmatprep.subr.bf16.mxu0 0
      %483 = vmatpush2.bf16.msra.mxu0 0
      %484 = vmatprep.subr.bf16.mxu0 0
      %485 = vmatpush2.bf16.msra.mxu0 0
      %486 = vmatprep.subr.bf16.mxu0 0
      %487 = vmatpush2.bf16.msra.mxu0 0
      %488 = vmatprep.subr.bf16.mxu0 0
      %489 = vmatpush2.bf16.msra.mxu0 0
      %490 = vmatprep.subr.bf16.mxu0 0
      %491 = vmatpush2.bf16.msra.mxu0 0
      %492 = vmatprep.mubr.bf16.mxu0 0
      %493 = vmatmul.mubr.bf16.gmra.mxu0 %v243
      %v494 = vpop.f32.mrf.mxu0
      %v495 = vadd.f32 %v226, %v494
      %v496 = vpop.f32.mrf.mxu0
      %v497 = vadd.f32 %v230, %v496
      %v498 = vpop.f32.mrf.mxu0
      %v499 = vadd.f32 %v226, %v498
      %v500 = vpop.f32.mrf.mxu0
      %v501 = vadd.f32 %v230, %v500
      %502 = vmatprep.mubr.bf16.mxu0 0
      %503 = vmatmul.mubr.bf16.gmra.mxu0 %v244
      %v504 = vpop.f32.mrf.mxu0
      %v505 = vadd.f32 %v226, %v504
      %v506 = vpop.f32.mrf.mxu0
      %v507 = vadd.f32 %v230, %v506
      %v508 = vpop.f32.mrf.mxu0
      %v509 = vadd.f32 %v226, %v508
      %v510 = vpop.f32.mrf.mxu0
      %v511 = vadd.f32 %v230, %v510
      %512 = vdwg.mxu0
      %513 = vst [vmem:[%s174] sm:$0xff] %v442
      %514 = vst [vmem:[%s174 + $0x8] sm:$0xff] %v444
      %515 = vst [vmem:[%s174 + $0x10] sm:$0xff] %v495
      %516 = vst [vmem:[%s174 + $0x18] sm:$0xff] %v497
      %517 = vst [vmem:[%s174 + $0x20] sm:$0xff] %v446
      %518 = vst [vmem:[%s174 + $0x28] sm:$0xff] %v448
      %519 = vst [vmem:[%s174 + $0x30] sm:$0xff] %v499
      %520 = vst [vmem:[%s174 + $0x38] sm:$0xff] %v501
      %521 = vst [vmem:[%s174 + $0x40] sm:$0xff] %v452
      %522 = vst [vmem:[%s174 + $0x48] sm:$0xff] %v454
      %523 = vst [vmem:[%s174 + $0x50] sm:$0xff] %v505
      %524 = vst [vmem:[%s174 + $0x58] sm:$0xff] %v507
      %525 = vst [vmem:[%s174 + $0x60] sm:$0xff] %v456
      %526 = vst [vmem:[%s174 + $0x68] sm:$0xff] %v458
      %527 = vst [vmem:[%s174 + $0x70] sm:$0xff] %v509
      %528 = vst [vmem:[%s174 + $0x78] sm:$0xff] %v511
      %s529 = smul.u32 4, %s14
      %p530 = scmp.lt.s32.totalorder %s529, 7
      %s531 = scalar_select %p530, %s529, 7
      %s532 = smul.addr %s531, 4
      %s533 = smul.addr %s532, 8
      %s534 = scalar_lea.vmem %s3, %s533
      // Predicated region
      $region33: #{image_caption_forward.9} parent=31 // pred_check
        %p535 = pneg %p100
      $region34: #{image_caption_forward.9} parent=31 // pred_check_branch
        %537 = sbr.rel (%p535) target = $region36
      $region35: #{image_caption_forward.9} parent=31 // pred_region
        %s538 = smul.u32 4, %s14
      $region36: #{image_caption_forward.9} parent=31 // pred_fallthru
        _
    $region32: #{image_caption_forward.9} parent=5 // pred_fallthru
      _
    %p539 = scmp.le.s32.totalorder 2, %s9
    // Predicated region
    $region37: #{image_caption_forward.9} parent=5 // pred_check
      %p540 = pneg %p539
    $region38: #{image_caption_forward.9} parent=5 // pred_check_branch
      %542 = sbr.rel (%p540) target = $region40
    $region39: #{image_caption_forward.9} parent=5 // pred_region
      %s543 = ssub.s32 %s9, 2
      // Predicated region
      $region41: #{image_caption_forward.9} parent=39 // pred_check
        %p544 = pneg %p106
      $region42: #{image_caption_forward.9} parent=39 // pred_check_branch
        %546 = sbr.rel (%p544) target = $region44
      $region43: #{image_caption_forward.9} parent=39 // pred_region
        %s547 = smul.u32 4, %s15
        %p548 = scmp.lt.s32.totalorder %s547, 7
        %s549 = scalar_select %p548, %s547, 7
        %s550 = smul.addr %s549, 4
        %s551 = smul.addr %s550, 8
        %s552 = scalar_lea.vmem %s3, %s551
      $region44: #{image_caption_forward.9} parent=39 // pred_fallthru
        _
    $region40: #{image_caption_forward.9} parent=5 // pred_fallthru
      _
  $region6: #{image_caption_forward.9} parent=0 // loop_footer
    %s13 = sadd.s32 1, %s9
  $region7: #{image_caption_forward.9} parent=0 // loop_footer_branch
    %8 = sbr.rel target = $region3
  $region8: #{image_caption_forward.9} parent=0 // loop_exit
    _

// kernel: image_caption_forward.11
$region0: #{image_caption_forward.11}
  #allocation0 [shape = 'u32[]', space=smem, size = 0x4, offset = 0x4, fixed_abs, tag = 'smem constant byte address 0x4 - core index']
  #allocation1 [shape = 'u32[144,128]{1,0:T(1,128)}', space=vmem, size = 0x12000, scoped, tag = 'internal scratch']
  %s0 = inlined_call_operand.vmem [shape: bf16[64,128], index: 0, kind: input, shape index: {}]
  %s1 = inlined_call_operand.vmem [shape: bf16[128,256], index: 1, kind: input, shape index: {}]
  %s2 = inlined_call_operand.vmem [shape: f32[1,256], index: 2, kind: input, shape index: {}]
  %s3 = inlined_call_operand.vmem [shape: f32[64,256], index: 3, kind: output, shape index: {}]
  %s4 = sld [smem:[#allocation0]]
  $region45: #{image_caption_forward.11} parent=0
    _
  %s6 = ssub.s32 1, %s4
  %s7 = scalar_select 0, %s6, %s4
  loop: start=0, step=1, limit=4
  $region2: #{image_caption_forward.11} parent=0 // loop_pre_header
    _
  $region3: #{image_caption_forward.11} parent=0 // loop_header
    %s9 = sphi 0, %s13
    %p10 = scmp.ge.s32.totalorder %s9, 4
    %s19 = sphi 0, %s21
    %s22 = sphi 0, %s19
    %s23 = sphi 0, %s22
    %s39 = sphi 0, %s23
    %s43 = sphi 0, %s43
    %s45 = sphi 0, %s43
    %s46 = sphi 0, %s45
    %s60 = sphi 0, %s46
    %s64 = sphi 0, %s64
    %s66 = sphi 0, %s64
    %s67 = sphi 0, %s66
    %s81 = sphi 0, %s67
    %s87 = sphi 0, %s89
    %s90 = sphi 0, %s87
    %s91 = sphi 0, %s90
    %s107 = sphi 0, %s91
  $region4: #{image_caption_forward.11} parent=0 // loop_header_branch
    %12 = sbr.rel (%p10) target = $region8
  $region5: #{image_caption_forward.11} parent=0 // loop_body
    %s14 = ssub.s32 %s9, 1
    %s15 = ssub.s32 %s9, 2
    %s16 = sadd.s32 %s9, 1
    %s17 = ssub.s32 %s9, %s16
    %p18 = scmp.eq.s32.totalorder %s17, 0
    %s20 = sadd.s32 %s19, 1
    %s21 = scalar_select %p18, %s19, %s20
    %p24 = pneg %p18
    %p25 = scmp.eq.s32.totalorder %s9, 1
    %p26 = por %p24, %p25
    %p27 = scmp.ne.s32.totalorder %s19, %s22
    %p28 = scmp.eq.s32.totalorder %s9, 0
    %p29 = por %p27, %p28
    %p30 = scmp.ne.s32.totalorder %s19, %s22
    %p31 = scmp.eq.s32.totalorder %s14, 1
    %p32 = por %p30, %p31
    %p33 = scmp.ne.s32.totalorder %s22, %s23
    %p34 = scmp.eq.s32.totalorder %s14, 0
    %p35 = por %p33, %p34
    %p36 = scmp.ne.s32.totalorder %s22, %s23
    %p37 = scmp.eq.s32.totalorder %s15, 1
    %p38 = por %p36, %p37
    %p40 = scmp.ne.s32.totalorder %s23, %s39
    %p41 = scmp.eq.s32.totalorder %s15, 0
    %p42 = por %p40, %p41
    %s44 = sadd.s32 %s43, 1
    %p47 = scmp.eq.s32.totalorder %s9, 1
    %p48 = scmp.ne.s32.totalorder %s43, %s45
    %p49 = scmp.eq.s32.totalorder %s9, 0
    %p50 = por %p48, %p49
    %p51 = scmp.ne.s32.totalorder %s43, %s45
    %p52 = scmp.eq.s32.totalorder %s14, 1
    %p53 = por %p51, %p52
    %p54 = scmp.ne.s32.totalorder %s45, %s46
    %p55 = scmp.eq.s32.totalorder %s14, 0
    %p56 = por %p54, %p55
    %p57 = scmp.ne.s32.totalorder %s45, %s46
    %p58 = scmp.eq.s32.totalorder %s15, 1
    %p59 = por %p57, %p58
    %p61 = scmp.ne.s32.totalorder %s46, %s60
    %p62 = scmp.eq.s32.totalorder %s15, 0
    %p63 = por %p61, %p62
    %s65 = sadd.s32 %s64, 1
    %p68 = scmp.eq.s32.totalorder %s9, 1
    %p69 = scmp.ne.s32.totalorder %s64, %s66
    %p70 = scmp.eq.s32.totalorder %s9, 0
    %p71 = por %p69, %p70
    %p72 = scmp.ne.s32.totalorder %s64, %s66
    %p73 = scmp.eq.s32.totalorder %s14, 1
    %p74 = por %p72, %p73
    %p75 = scmp.ne.s32.totalorder %s66, %s67
    %p76 = scmp.eq.s32.totalorder %s14, 0
    %p77 = por %p75, %p76
    %p78 = scmp.ne.s32.totalorder %s66, %s67
    %p79 = scmp.eq.s32.totalorder %s15, 1
    %p80 = por %p78, %p79
    %p82 = scmp.ne.s32.totalorder %s67, %s81
    %p83 = scmp.eq.s32.totalorder %s15, 0
    %p84 = por %p82, %p83
    %s85 = ssub.s32 %s9, %s16
    %p86 = scmp.eq.s32.totalorder %s85, 0
    %s88 = sadd.s32 %s87, 1
    %s89 = scalar_select %p86, %s87, %s88
    %p92 = pneg %p86
    %p93 = scmp.eq.s32.totalorder %s9, 1
    %p94 = por %p92, %p93
    %p95 = scmp.ne.s32.totalorder %s87, %s90
    %p96 = scmp.eq.s32.totalorder %s9, 0
    %p97 = por %p95, %p96
    %p98 = scmp.ne.s32.totalorder %s87, %s90
    %p99 = scmp.eq.s32.totalorder %s14, 1
    %p100 = por %p98, %p99
    %p101 = scmp.ne.s32.totalorder %s90, %s91
    %p102 = scmp.eq.s32.totalorder %s14, 0
    %p103 = por %p101, %p102
    %p104 = scmp.ne.s32.totalorder %s90, %s91
    %p105 = scmp.eq.s32.totalorder %s15, 1
    %p106 = por %p104, %p105
    %p108 = scmp.ne.s32.totalorder %s91, %s107
    %p109 = scmp.eq.s32.totalorder %s15, 0
    %p110 = por %p108, %p109
    %p111 = scmp.le.s32.totalorder 1, %s9
    %p112 = scmp.lt.s32.totalorder %s9, 3
    %p113 = pnand %p111, %p112
    %p114 = pneg %p113
    // Predicated region
    $region9: #{image_caption_forward.11} parent=5 // pred_check
      _
    $region10: #{image_caption_forward.11} parent=5 // pred_check_branch
      %116 = sbr.rel (%p113) target = $region12
    $region11: #{image_caption_forward.11} parent=5 // pred_region
      %s117 = ssub.s32 %s9, 1
      // Predicated region
      $region13: #{image_caption_forward.11} parent=11 // pred_check
        %p118 = pneg %p56
      $region14: #{image_caption_forward.11} parent=11 // pred_check_branch
        %120 = sbr.rel (%p118) target = $region16
      $region15: #{image_caption_forward.11} parent=11 // pred_region
        _
      $region16: #{image_caption_forward.11} parent=11 // pred_fallthru
        _
      // Predicated region
      $region17: #{image_caption_forward.11} parent=11 // pred_check
        %p121 = pneg %p77
      $region18: #{image_caption_forward.11} parent=11 // pred_check_branch
        %123 = sbr.rel (%p121) target = $region20
      $region19: #{image_caption_forward.11} parent=11 // pred_region
        _
      $region20: #{image_caption_forward.11} parent=11 // pred_fallthru
        _
    $region12: #{image_caption_forward.11} parent=5 // pred_fallthru
      _
    %p124 = scmp.lt.s32.totalorder %s9, 2
    // Predicated region
    $region21: #{image_caption_forward.11} parent=5 // pred_check
      %p125 = pneg %p124
    $region22: #{image_caption_forward.11} parent=5 // pred_check_branch
      %127 = sbr.rel (%p125) target = $region24
    $region23: #{image_caption_forward.11} parent=5 // pred_region
      // Predicated region
      $region25: #{image_caption_forward.11} parent=23 // pred_check
        %p128 = pneg %p29
      $region26: #{image_caption_forward.11} parent=23 // pred_check_branch
        %130 = sbr.rel (%p128) target = $region28
      $region27: #{image_caption_forward.11} parent=23 // pred_region
        %s131 = smul.u32 4, %s9
        %p132 = scmp.lt.s32.totalorder %s131, 7
        %s133 = scalar_select %p132, %s131, 7
        %s134 = smul.addr %s133, 4
        %s135 = scalar_lea.vmem %s0, %s134
        %s136 = smul.u32 4, %s9
      $region28: #{image_caption_forward.11} parent=23 // pred_fallthru
        _
    $region24: #{image_caption_forward.11} parent=5 // pred_fallthru
      _
    %p137 = scmp.le.s32.totalorder 1, %s9
    %p138 = scmp.lt.s32.totalorder %s9, 3
    %p139 = pnand %p137, %p138
    %p140 = pneg %p139
    // Predicated region
    $region29: #{image_caption_forward.11} parent=5 // pred_check
      _
    $region30: #{image_caption_forward.11} parent=5 // pred_check_branch
      %142 = sbr.rel (%p139) target = $region32
    $region31: #{image_caption_forward.11} parent=5 // pred_region
      %s143 = ssub.s32 %s9, 1
      %s144 = smul.u32 4, %s14
      %p145 = scmp.lt.s32.totalorder %s144, 7
      %s146 = scalar_select %p145, %s144, 7
      %s147 = smul.addr %s146, 4
      %s148 = scalar_lea.vmem %s0, %s147
      %p149 = pneg %p35
      %p150 = pneg %p32
      %p151 = pneg %p56
      %p152 = pneg %p53
      %p153 = pneg %p77
      %p154 = pneg %p74
      %p155 = pneg %p103
      %p156 = pneg %p100
      %s157 = smul.u32 4, %s14
      %p158 = scmp.lt.s32.totalorder %s157, 7
      %s159 = scalar_select %p158, %s157, 7
      %s160 = smul.addr %s159, 2
      %s161 = smul.addr %s160, 8
      %s162 = scalar_lea.vmem %s3, %s161
      %s163 = smul.u32 4, %s14
      %p164 = scmp.lt.s32.totalorder %s163, 7
      %s165 = scalar_select %p164, %s163, 7
      %s166 = smul.addr %s165, 4
      %s167 = scalar_lea.vmem %s0, %s166
      %s168 = smul.u32 4, %s14
      %s169 = smul.u32 4, %s14
      %p170 = scmp.lt.s32.totalorder %s169, 7
      %s171 = scalar_select %p170, %s169, 7
      %s172 = smul.addr %s171, 2
      %s173 = smul.addr %s172, 8
      %s174 = scalar_lea.vmem %s3, %s173
      %s175 = smul.u32 4, %s14
      %v177 = vld [vmem:[%s167] sm:$0xf]
      %v178 = vld [vmem:[%s167 + $0x4] sm:$0xf]
      %v179 = vld [vmem:[%s167 + $0x8] sm:$0xf]
      %v180 = vld [vmem:[%s167 + $0xc] sm:$0xf]
      %v181 = vld [vmem:[%s1] sm:$0xff]
      %v182 = vld [vmem:[%s1 + $0x8] sm:$0xff]
      %v183 = vld [vmem:[%s1 + $0x10] sm:$0xff]
      %v184 = vld [vmem:[%s1 + $0x18] sm:$0xff]
      %v185 = vld [vmem:[%s1 + $0x20] sm:$0xff]
      %v186 = vld [vmem:[%s1 + $0x28] sm:$0xff]
      %v187 = vld [vmem:[%s1 + $0x30] sm:$0xff]
      %v188 = vld [vmem:[%s1 + $0x38] sm:$0xff]
      %v189 = vld [vmem:[%s1 + $0x40] sm:$0xff]
      %v190 = vld [vmem:[%s1 + $0x48] sm:$0xff]
      %v191 = vld [vmem:[%s1 + $0x50] sm:$0xff]
      %v192 = vld [vmem:[%s1 + $0x58] sm:$0xff]
      %v193 = vld [vmem:[%s1 + $0x60] sm:$0xff]
      %v194 = vld [vmem:[%s1 + $0x68] sm:$0xff]
      %v195 = vld [vmem:[%s1 + $0x70] sm:$0xff]
      %v196 = vld [vmem:[%s1 + $0x78] sm:$0xff]
      %v197 = vld [vmem:[%s2] sm:$0x3]
      %v199 = vlaneseq
      %v200 = vshrl.u32 %v199, 7
      %v201 = vsub.s32 0, %v200
      %v202 = vrot.slane %v197, %v201
      %v203 = vlaneseq
      %v204 = vshrl.u32 %v203, 7
      %v205 = vsub.s32 1, %v204
      %v206 = vrot.slane %v197, %v205
      %v213 = vunpack.c.l.b16 %v177
      %v214 = vunpack.c.l.b16 %v178
      %v215 = vunpack.c.l.b16 %v179
      %v216 = vunpack.c.l.b16 %v180
      %v217 = vpack.c.b16 %v214, %v213
      %v218 = vpack.c.b16 %v216, %v215
      %v237 = vunpack.c.l.b16 %v181
      %v238 = vunpack.c.h.b16 %v181
      %v239 = vunpack.c.l.b16 %v182
      %v240 = vunpack.c.h.b16 %v182
      %v241 = vunpack.c.l.b16 %v183
      %v242 = vunpack.c.h.b16 %v183
      %v243 = vunpack.c.l.b16 %v184
      %v244 = vunpack.c.h.b16 %v184
      %v245 = vunpack.c.l.b16 %v185
      %v246 = vunpack.c.h.b16 %v185
      %v247 = vunpack.c.l.b16 %v186
      %v248 = vunpack.c.h.b16 %v186
      %v249 = vunpack.c.l.b16 %v187
      %v250 = vunpack.c.h.b16 %v187
      %v251 = vunpack.c.l.b16 %v188
      %v252 = vunpack.c.h.b16 %v188
      %v253 = vunpack.c.l.b16 %v189
      %v254 = vunpack.c.h.b16 %v189
      %v255 = vunpack.c.l.b16 %v190
      %v256 = vunpack.c.h.b16 %v190
      %v257 = vunpack.c.l.b16 %v191
      %v258 = vunpack.c.h.b16 %v191
      %v259 = vunpack.c.l.b16 %v192
      %v260 = vunpack.c.h.b16 %v192
      %v261 = vunpack.c.l.b16 %v193
      %v262 = vunpack.c.h.b16 %v193
      %v263 = vunpack.c.l.b16 %v194
      %v264 = vunpack.c.h.b16 %v194
      %v265 = vunpack.c.l.b16 %v195
      %v266 = vunpack.c.h.b16 %v195
      %v267 = vunpack.c.l.b16 %v196
      %v268 = vunpack.c.h.b16 %v196
      %v269 = vpack.c.b16 %v239, %v237
      %v270 = vpack.c.b16 %v240, %v238
      %v271 = vpack.c.b16 %v243, %v241
      %v272 = vpack.c.b16 %v244, %v242
      %v273 = vpack.c.b16 %v247, %v245
      %v274 = vpack.c.b16 %v248, %v246
      %v275 = vpack.c.b16 %v251, %v249
      %v276 = vpack.c.b16 %v252, %v250
      %v277 = vpack.c.b16 %v255, %v253
      %v278 = vpack.c.b16 %v256, %v254
      %v279 = vpack.c.b16 %v259, %v257
      %v280 = vpack.c.b16 %v260, %v258
      %v281 = vpack.c.b16 %v263, %v261
      %v282 = vpack.c.b16 %v264, %v262
      %v283 = vpack.c.b16 %v267, %v265
      %v284 = vpack.c.b16 %v268, %v266
      %301 = vmatprep.subr.bf16.mxu0 %v284
      %302 = vmatpush1.bf16.msra.mxu0 %v283
      %303 = vmatprep.subr.bf16.mxu0 %v282
      %304 = vmatpush1.bf16.msra.mxu0 %v281
      %305 = vmatprep.subr.bf16.mxu0 %v280
      %306 = vmatpush1.bf16.msra.mxu0 %v279
      %307 = vmatprep.subr.bf16.mxu0 %v278
      %308 = vmatpush1.bf16.msra.mxu0 %v277
      %309 = vmatprep.subr.bf16.mxu0 %v276
      %310 = vmatpush1.bf16.msra.mxu0 %v275
      %311 = vmatprep.subr.bf16.mxu0 %v274
      %312 = vmatpush1.bf16.msra.mxu0 %v273
      %313 = vmatprep.subr.bf16.mxu0 %v272
      %314 = vmatpush1.bf16.msra.mxu0 %v271
      %315 = vmatprep.subr.bf16.mxu0 %v270
      %316 = vmatpush1.bf16.msra.mxu0 %v269
      %317 = vmatprep.subr.bf16.mxu0 0
      %318 = vmatpush2.bf16.msra.mxu0 0
      %319 = vmatprep.subr.bf16.mxu0 0
      %320 = vmatpush2.bf16.msra.mxu0 0
      %321 = vmatprep.subr.bf16.mxu0 0
      %322 = vmatpush2.bf16.msra.mxu0 0
      %323 = vmatprep.subr.bf16.mxu0 0
      %324 = vmatpush2.bf16.msra.mxu0 0
      %325 = vmatprep.subr.bf16.mxu0 0
      %326 = vmatpush2.bf16.msra.mxu0 0
      %327 = vmatprep.subr.bf16.mxu0 0
      %328 = vmatpush2.bf16.msra.mxu0 0
      %329 = vmatprep.subr.bf16.mxu0 0
      %330 = vmatpush2.bf16.msra.mxu0 0
      %331 = vmatprep.subr.bf16.mxu0 0
      %332 = vmatpush2.bf16.msra.mxu0 0
      %333 = vmatprep.mubr.bf16.mxu0 0
      %334 = vmatmul.mubr.bf16.gmra.mxu0 %v217
      %v335 = vpop.f32.mrf.mxu0
      %v336 = vadd.f32 %v202, %v335
      %v337 = vpop.f32.mrf.mxu0
      %v338 = vadd.f32 %v206, %v337
      %v339 = vpop.f32.mrf.mxu0
      %v340 = vadd.f32 %v202, %v339
      %v341 = vpop.f32.mrf.mxu0
      %v342 = vadd.f32 %v206, %v341
      %343 = vmatprep.mubr.bf16.mxu0 0
      %344 = vmatmul.mubr.bf16.gmra.mxu0 %v218
      %v345 = vpop.f32.mrf.mxu0
      %v346 = vadd.f32 %v202, %v345
      %v347 = vpop.f32.mrf.mxu0
      %v348 = vadd.f32 %v206, %v347
      %v349 = vpop.f32.mrf.mxu0
      %v350 = vadd.f32 %v202, %v349
      %v351 = vpop.f32.mrf.mxu0
      %v352 = vadd.f32 %v206, %v351
      %353 = vdwg.mxu0
      %354 = vst [vmem:[%s174] sm:$0xff] %v336
      %355 = vst [vmem:[%s174 + $0x8] sm:$0xff] %v338
      %356 = vst [vmem:[%s174 + $0x10] sm:$0xff] %v340
      %357 = vst [vmem:[%s174 + $0x18] sm:$0xff] %v342
      %358 = vst [vmem:[%s174 + $0x20] sm:$0xff] %v346
      %359 = vst [vmem:[%s174 + $0x28] sm:$0xff] %v348
      %360 = vst [vmem:[%s174 + $0x30] sm:$0xff] %v350
      %361 = vst [vmem:[%s174 + $0x38] sm:$0xff] %v352
      %s362 = smul.u32 4, %s14
      %p363 = scmp.lt.s32.totalorder %s362, 7
      %s364 = scalar_select %p363, %s362, 7
      %s365 = smul.addr %s364, 2
      %s366 = smul.addr %s365, 8
      %s367 = scalar_lea.vmem %s3, %s366
      // Predicated region
      $region33: #{image_caption_forward.11} parent=31 // pred_check
        %p368 = pneg %p100
      $region34: #{image_caption_forward.11} parent=31 // pred_check_branch
        %370 = sbr.rel (%p368) target = $region36
      $region35: #{image_caption_forward.11} parent=31 // pred_region
        %s371 = smul.u32 4, %s14
      $region36: #{image_caption_forward.11} parent=31 // pred_fallthru
        _
    $region32: #{image_caption_forward.11} parent=5 // pred_fallthru
      _
    %p372 = scmp.le.s32.totalorder 2, %s9
    // Predicated region
    $region37: #{image_caption_forward.11} parent=5 // pred_check
      %p373 = pneg %p372
    $region38: #{image_caption_forward.11} parent=5 // pred_check_branch
      %375 = sbr.rel (%p373) target = $region40
    $region39: #{image_caption_forward.11} parent=5 // pred_region
      %s376 = ssub.s32 %s9, 2
      // Predicated region
      $region41: #{image_caption_forward.11} parent=39 // pred_check
        %p377 = pneg %p106
      $region42: #{image_caption_forward.11} parent=39 // pred_check_branch
        %379 = sbr.rel (%p377) target = $region44
      $region43: #{image_caption_forward.11} parent=39 // pred_region
        %s380 = smul.u32 4, %s15
        %p381 = scmp.lt.s32.totalorder %s380, 7
        %s382 = scalar_select %p381, %s380, 7
        %s383 = smul.addr %s382, 2
        %s384 = smul.addr %s383, 8
        %s385 = scalar_lea.vmem %s3, %s384
      $region44: #{image_caption_forward.11} parent=39 // pred_fallthru
        _
    $region40: #{image_caption_forward.11} parent=5 // pred_fallthru
      _
  $region6: #{image_caption_forward.11} parent=0 // loop_footer
    %s13 = sadd.s32 1, %s9
  $region7: #{image_caption_forward.11} parent=0 // loop_footer_branch
    %8 = sbr.rel target = $region3
  $region8: #{image_caption_forward.11} parent=0 // loop_exit
    _

// kernel: image_caption_forward.10
$region0: #{image_caption_forward.10}
  #allocation0 [shape = 'u32[]', space=smem, size = 0x4, offset = 0x4, fixed_abs, tag = 'smem constant byte address 0x4 - core index']
  #allocation1 [shape = 'u32[144,128]{1,0:T(1,128)}', space=vmem, size = 0x12000, scoped, tag = 'internal scratch']
  %s0 = inlined_call_operand.vmem [shape: f32[8,8,512], index: 0, kind: input, shape index: {}]
  %s1 = inlined_call_operand.vmem [shape: f32[8,128], index: 1, kind: input, shape index: {}]
  %s2 = inlined_call_operand.vmem [shape: bf16[128,512], index: 2, kind: input, shape index: {}]
  %s3 = inlined_call_operand.vmem [shape: f32[8,8,128], index: 3, kind: output, shape index: {}]
  %s4 = sld [smem:[#allocation0]]
  $region22: #{image_caption_forward.10} parent=0
    _
  %s6 = ssub.s32 1, %s4
  %s7 = scalar_select 0, %s6, %s4
  // Predicated region
  $region2: #{image_caption_forward.10} parent=0 // pred_check
    _
  $region3: #{image_caption_forward.10} parent=0 // pred_check_branch
    %9 = sbr.rel (0) target = $region5
  $region4: #{image_caption_forward.10} parent=0 // pred_region
    _
  $region5: #{image_caption_forward.10} parent=0 // pred_fallthru
    _
  // Predicated region
  $region6: #{image_caption_forward.10} parent=0 // pred_check
    _
  $region7: #{image_caption_forward.10} parent=0 // pred_check_branch
    %11 = sbr.rel (0) target = $region9
  $region8: #{image_caption_forward.10} parent=0 // pred_region
    _
  $region9: #{image_caption_forward.10} parent=0 // pred_fallthru
    _
  // Predicated region
  $region10: #{image_caption_forward.10} parent=0 // pred_check
    _
  $region11: #{image_caption_forward.10} parent=0 // pred_check_branch
    %13 = sbr.rel (0) target = $region13
  $region12: #{image_caption_forward.10} parent=0 // pred_region
    _
  $region13: #{image_caption_forward.10} parent=0 // pred_fallthru
    _
  %v15 = vld [vmem:[%s2] sm:$0xff]
  %v16 = vld [vmem:[%s2 + $0x8] sm:$0xff]
  %v17 = vld [vmem:[%s2 + $0x10] sm:$0xff]
  %v18 = vld [vmem:[%s2 + $0x18] sm:$0xff]
  %v19 = vld [vmem:[%s2 + $0x20] sm:$0xff]
  %v20 = vld [vmem:[%s2 + $0x28] sm:$0xff]
  %v21 = vld [vmem:[%s2 + $0x30] sm:$0xff]
  %v22 = vld [vmem:[%s2 + $0x38] sm:$0xff]
  %v23 = vld [vmem:[%s2 + $0x40] sm:$0xff]
  %v24 = vld [vmem:[%s2 + $0x48] sm:$0xff]
  %v25 = vld [vmem:[%s2 + $0x50] sm:$0xff]
  %v26 = vld [vmem:[%s2 + $0x58] sm:$0xff]
  %v27 = vld [vmem:[%s2 + $0x60] sm:$0xff]
  %v28 = vld [vmem:[%s2 + $0x68] sm:$0xff]
  %v29 = vld [vmem:[%s2 + $0x70] sm:$0xff]
  %v30 = vld [vmem:[%s2 + $0x78] sm:$0xff]
  %v31 = vld [vmem:[%s2 + $0x80] sm:$0xff]
  %v32 = vld [vmem:[%s2 + $0x88] sm:$0xff]
  %v33 = vld [vmem:[%s2 + $0x90] sm:$0xff]
  %v34 = vld [vmem:[%s2 + $0x98] sm:$0xff]
  %v35 = vld [vmem:[%s2 + $0xa0] sm:$0xff]
  %v36 = vld [vmem:[%s2 + $0xa8] sm:$0xff]
  %v37 = vld [vmem:[%s2 + $0xb0] sm:$0xff]
  %v38 = vld [vmem:[%s2 + $0xb8] sm:$0xff]
  %v39 = vld [vmem:[%s2 + $0xc0] sm:$0xff]
  %v40 = vld [vmem:[%s2 + $0xc8] sm:$0xff]
  %v41 = vld [vmem:[%s2 + $0xd0] sm:$0xff]
  %v42 = vld [vmem:[%s2 + $0xd8] sm:$0xff]
  %v43 = vld [vmem:[%s2 + $0xe0] sm:$0xff]
  %v44 = vld [vmem:[%s2 + $0xe8] sm:$0xff]
  %v45 = vld [vmem:[%s2 + $0xf0] sm:$0xff]
  %v46 = vld [vmem:[%s2 + $0xf8] sm:$0xff]
  %v47 = vld [vmem:[%s1] sm:$0xff]
  %v48 = vld [vmem:[%s0] sm:$0xff]
  %v49 = vld [vmem:[%s0 + $0x8] sm:$0xff]
  %v50 = vld [vmem:[%s0 + $0x10] sm:$0xff]
  %v51 = vld [vmem:[%s0 + $0x18] sm:$0xff]
  %v52 = vpack.c.bf16 %v47, %v47
  %v85 = vunpack.c.l.b16 %v15
  %v86 = vunpack.c.h.b16 %v15
  %v87 = vunpack.c.l.b16 %v16
  %v88 = vunpack.c.h.b16 %v16
  %v89 = vunpack.c.l.b16 %v17
  %v90 = vunpack.c.h.b16 %v17
  %v91 = vunpack.c.l.b16 %v18
  %v92 = vunpack.c.h.b16 %v18
  %v93 = vunpack.c.l.b16 %v19
  %v94 = vunpack.c.h.b16 %v19
  %v95 = vunpack.c.l.b16 %v20
  %v96 = vunpack.c.h.b16 %v20
  %v97 = vunpack.c.l.b16 %v21
  %v98 = vunpack.c.h.b16 %v21
  %v99 = vunpack.c.l.b16 %v22
  %v100 = vunpack.c.h.b16 %v22
  %v101 = vunpack.c.l.b16 %v23
  %v102 = vunpack.c.h.b16 %v23
  %v103 = vunpack.c.l.b16 %v24
  %v104 = vunpack.c.h.b16 %v24
  %v105 = vunpack.c.l.b16 %v25
  %v106 = vunpack.c.h.b16 %v25
  %v107 = vunpack.c.l.b16 %v26
  %v108 = vunpack.c.h.b16 %v26
  %v109 = vunpack.c.l.b16 %v27
  %v110 = vunpack.c.h.b16 %v27
  %v111 = vunpack.c.l.b16 %v28
  %v112 = vunpack.c.h.b16 %v28
  %v113 = vunpack.c.l.b16 %v29
  %v114 = vunpack.c.h.b16 %v29
  %v115 = vunpack.c.l.b16 %v30
  %v116 = vunpack.c.h.b16 %v30
  %v117 = vunpack.c.l.b16 %v31
  %v118 = vunpack.c.h.b16 %v31
  %v119 = vunpack.c.l.b16 %v32
  %v120 = vunpack.c.h.b16 %v32
  %v121 = vunpack.c.l.b16 %v33
  %v122 = vunpack.c.h.b16 %v33
  %v123 = vunpack.c.l.b16 %v34
  %v124 = vunpack.c.h.b16 %v34
  %v125 = vunpack.c.l.b16 %v35
  %v126 = vunpack.c.h.b16 %v35
  %v127 = vunpack.c.l.b16 %v36
  %v128 = vunpack.c.h.b16 %v36
  %v129 = vunpack.c.l.b16 %v37
  %v130 = vunpack.c.h.b16 %v37
  %v131 = vunpack.c.l.b16 %v38
  %v132 = vunpack.c.h.b16 %v38
  %v133 = vunpack.c.l.b16 %v39
  %v134 = vunpack.c.h.b16 %v39
  %v135 = vunpack.c.l.b16 %v40
  %v136 = vunpack.c.h.b16 %v40
  %v137 = vunpack.c.l.b16 %v41
  %v138 = vunpack.c.h.b16 %v41
  %v139 = vunpack.c.l.b16 %v42
  %v140 = vunpack.c.h.b16 %v42
  %v141 = vunpack.c.l.b16 %v43
  %v142 = vunpack.c.h.b16 %v43
  %v143 = vunpack.c.l.b16 %v44
  %v144 = vunpack.c.h.b16 %v44
  %v145 = vunpack.c.l.b16 %v45
  %v146 = vunpack.c.h.b16 %v45
  %v147 = vunpack.c.l.b16 %v46
  %v148 = vunpack.c.h.b16 %v46
  %v149 = vpack.c.b16 %v89, %v85
  %v150 = vpack.c.b16 %v90, %v86
  %v151 = vpack.c.b16 %v91, %v87
  %v152 = vpack.c.b16 %v92, %v88
  %v153 = vpack.c.b16 %v97, %v93
  %v154 = vpack.c.b16 %v98, %v94
  %v155 = vpack.c.b16 %v99, %v95
  %v156 = vpack.c.b16 %v100, %v96
  %v157 = vpack.c.b16 %v105, %v101
  %v158 = vpack.c.b16 %v106, %v102
  %v159 = vpack.c.b16 %v107, %v103
  %v160 = vpack.c.b16 %v108, %v104
  %v161 = vpack.c.b16 %v113, %v109
  %v162 = vpack.c.b16 %v114, %v110
  %v163 = vpack.c.b16 %v115, %v111
  %v164 = vpack.c.b16 %v116, %v112
  %v165 = vpack.c.b16 %v121, %v117
  %v166 = vpack.c.b16 %v122, %v118
  %v167 = vpack.c.b16 %v123, %v119
  %v168 = vpack.c.b16 %v124, %v120
  %v169 = vpack.c.b16 %v129, %v125
  %v170 = vpack.c.b16 %v130, %v126
  %v171 = vpack.c.b16 %v131, %v127
  %v172 = vpack.c.b16 %v132, %v128
  %v173 = vpack.c.b16 %v137, %v133
  %v174 = vpack.c.b16 %v138, %v134
  %v175 = vpack.c.b16 %v139, %v135
  %v176 = vpack.c.b16 %v140, %v136
  %v177 = vpack.c.b16 %v145, %v141
  %v178 = vpack.c.b16 %v146, %v142
  %v179 = vpack.c.b16 %v147, %v143
  %v180 = vpack.c.b16 %v148, %v144
  %213 = vmatprep.subr.bf16.mxu0 %v178
  %214 = vmatpush1.bf16.msra.mxu0 %v177
  %215 = vmatprep.subr.bf16.mxu0 %v174
  %216 = vmatpush1.bf16.msra.mxu0 %v173
  %217 = vmatprep.subr.bf16.mxu0 %v170
  %218 = vmatpush1.bf16.msra.mxu0 %v169
  %219 = vmatprep.subr.bf16.mxu0 %v166
  %220 = vmatpush1.bf16.msra.mxu0 %v165
  %221 = vmatprep.subr.bf16.mxu0 %v162
  %222 = vmatpush1.bf16.msra.mxu0 %v161
  %223 = vmatprep.subr.bf16.mxu0 %v158
  %224 = vmatpush1.bf16.msra.mxu0 %v157
  %225 = vmatprep.subr.bf16.mxu0 %v154
  %226 = vmatpush1.bf16.msra.mxu0 %v153
  %227 = vmatprep.subr.bf16.mxu0 %v150
  %228 = vmatpush1.bf16.msra.mxu0 %v149
  %229 = vmatprep.subr.bf16.mxu0 0
  %230 = vmatpush2.bf16.msra.mxu0 0
  %231 = vmatprep.subr.bf16.mxu0 0
  %232 = vmatpush2.bf16.msra.mxu0 0
  %233 = vmatprep.subr.bf16.mxu0 0
  %234 = vmatpush2.bf16.msra.mxu0 0
  %235 = vmatprep.subr.bf16.mxu0 0
  %236 = vmatpush2.bf16.msra.mxu0 0
  %237 = vmatprep.subr.bf16.mxu0 0
  %238 = vmatpush2.bf16.msra.mxu0 0
  %239 = vmatprep.subr.bf16.mxu0 0
  %240 = vmatpush2.bf16.msra.mxu0 0
  %241 = vmatprep.subr.bf16.mxu0 0
  %242 = vmatpush2.bf16.msra.mxu0 0
  %243 = vmatprep.subr.bf16.mxu0 0
  %244 = vmatpush2.bf16.msra.mxu0 0
  %245 = vmatprep.mubr.bf16.mxu0 0
  %246 = vmatmul.mubr.bf16.gmra.mxu0 %v52
  %v247 = vpop.f32.mrf.mxu0
  %v248 = vadd.f32 0.0, %v247
  %v249 = vpop.f32.mrf.mxu0
  %v250 = vadd.f32 0.0, %v249
  %v251 = vpop.f32.mrf.mxu0
  %v252 = vpop.f32.mrf.mxu0
  %253 = vdwg.mxu0
  %254 = vmatprep.subr.bf16.mxu0 %v180
  %255 = vmatpush1.bf16.msra.mxu0 %v179
  %256 = vmatprep.subr.bf16.mxu0 %v176
  %257 = vmatpush1.bf16.msra.mxu0 %v175
  %258 = vmatprep.subr.bf16.mxu0 %v172
  %259 = vmatpush1.bf16.msra.mxu0 %v171
  %260 = vmatprep.subr.bf16.mxu0 %v168
  %261 = vmatpush1.bf16.msra.mxu0 %v167
  %262 = vmatprep.subr.bf16.mxu0 %v164
  %263 = vmatpush1.bf16.msra.mxu0 %v163
  %264 = vmatprep.subr.bf16.mxu0 %v160
  %265 = vmatpush1.bf16.msra.mxu0 %v159
  %266 = vmatprep.subr.bf16.mxu0 %v156
  %267 = vmatpush1.bf16.msra.mxu0 %v155
  %268 = vmatprep.subr.bf16.mxu0 %v152
  %269 = vmatpush1.bf16.msra.mxu0 %v151
  %270 = vmatprep.subr.bf16.mxu0 0
  %271 = vmatpush2.bf16.msra.mxu0 0
  %272 = vmatprep.subr.bf16.mxu0 0
  %273 = vmatpush2.bf16.msra.mxu0 0
  %274 = vmatprep.subr.bf16.mxu0 0
  %275 = vmatpush2.bf16.msra.mxu0 0
  %276 = vmatprep.subr.bf16.mxu0 0
  %277 = vmatpush2.bf16.msra.mxu0 0
  %278 = vmatprep.subr.bf16.mxu0 0
  %279 = vmatpush2.bf16.msra.mxu0 0
  %280 = vmatprep.subr.bf16.mxu0 0
  %281 = vmatpush2.bf16.msra.mxu0 0
  %282 = vmatprep.subr.bf16.mxu0 0
  %283 = vmatpush2.bf16.msra.mxu0 0
  %284 = vmatprep.subr.bf16.mxu0 0
  %285 = vmatpush2.bf16.msra.mxu0 0
  %286 = vmatprep.mubr.bf16.mxu0 0
  %287 = vmatmul.mubr.bf16.gmra.mxu0 %v52
  %v288 = vpop.f32.mrf.mxu0
  %v289 = vadd.f32 0.0, %v288
  %v290 = vpop.f32.mrf.mxu0
  %v291 = vadd.f32 0.0, %v290
  %v292 = vpop.f32.mrf.mxu0
  %v293 = vpop.f32.mrf.mxu0
  %294 = vdwg.mxu0
  %v295 = vadd.f32 %v48, %v248
  %v296 = vadd.f32 %v49, %v250
  %v297 = vadd.f32 %v50, %v289
  %v298 = vadd.f32 %v51, %v291
  %v299 = vxor.u32 %v295, 2147483648
  %v300 = vmul.f32 %v299, 1.442695
  %v301 = vpow.pop %v300
  %v302 = vadd.f32 %v301, 1.0
  %v303 = vrcp.pop %v302
  %v304 = vmul.f32 1.0, %v303
  %v305 = vxor.u32 %v296, 2147483648
  %v306 = vmul.f32 %v305, 1.442695
  %v307 = vpow.pop %v306
  %v308 = vadd.f32 %v307, 1.0
  %v309 = vrcp.pop %v308
  %v310 = vmul.f32 1.0, %v309
  %v311 = vtanh.pop %v297
  %v312 = vxor.u32 %v298, 2147483648
  %v313 = vmul.f32 %v312, 1.442695
  %v314 = vpow.pop %v313
  %v315 = vadd.f32 %v314, 1.0
  %v316 = vrcp.pop %v315
  %v317 = vmul.f32 1.0, %v316
  %v318 = vmul.f32 %v310, 0.0
  %v319 = vmul.f32 %v304, %v311
  %v320 = vadd.f32 %v318, %v319
  %v321 = vtanh.pop %v320
  %v322 = vmul.f32 %v317, %v321
  %323 = vst [vmem:[%s3] sm:$0xff] %v322
  %s324 = scalar_lea.vmem %s0, 32
  %v325 = vld [vmem:[%s324] sm:$0xff]
  %v326 = vld [vmem:[%s324 + $0x8] sm:$0xff]
  %v327 = vld [vmem:[%s324 + $0x10] sm:$0xff]
  %v328 = vld [vmem:[%s324 + $0x18] sm:$0xff]
  %v329 = vpack.c.bf16 %v322, %v322
  %330 = vmatprep.subr.bf16.mxu0 %v178
  %331 = vmatpush1.bf16.msra.mxu0 %v177
  %332 = vmatprep.subr.bf16.mxu0 %v174
  %333 = vmatpush1.bf16.msra.mxu0 %v173
  %334 = vmatprep.subr.bf16.mxu0 %v170
  %335 = vmatpush1.bf16.msra.mxu0 %v169
  %336 = vmatprep.subr.bf16.mxu0 %v166
  %337 = vmatpush1.bf16.msra.mxu0 %v165
  %338 = vmatprep.subr.bf16.mxu0 %v162
  %339 = vmatpush1.bf16.msra.mxu0 %v161
  %340 = vmatprep.subr.bf16.mxu0 %v158
  %341 = vmatpush1.bf16.msra.mxu0 %v157
  %342 = vmatprep.subr.bf16.mxu0 %v154
  %343 = vmatpush1.bf16.msra.mxu0 %v153
  %344 = vmatprep.subr.bf16.mxu0 %v150
  %345 = vmatpush1.bf16.msra.mxu0 %v149
  %346 = vmatprep.subr.bf16.mxu0 0
  %347 = vmatpush2.bf16.msra.mxu0 0
  %348 = vmatprep.subr.bf16.mxu0 0
  %349 = vmatpush2.bf16.msra.mxu0 0
  %350 = vmatprep.subr.bf16.mxu0 0
  %351 = vmatpush2.bf16.msra.mxu0 0
  %352 = vmatprep.subr.bf16.mxu0 0
  %353 = vmatpush2.bf16.msra.mxu0 0
  %354 = vmatprep.subr.bf16.mxu0 0
  %355 = vmatpush2.bf16.msra.mxu0 0
  %356 = vmatprep.subr.bf16.mxu0 0
  %357 = vmatpush2.bf16.msra.mxu0 0
  %358 = vmatprep.subr.bf16.mxu0 0
  %359 = vmatpush2.bf16.msra.mxu0 0
  %360 = vmatprep.subr.bf16.mxu0 0
  %361 = vmatpush2.bf16.msra.mxu0 0
  %362 = vmatprep.mubr.bf16.mxu0 0
  %363 = vmatmul.mubr.bf16.gmra.mxu0 %v329
  %v364 = vpop.f32.mrf.mxu0
  %v365 = vadd.f32 0.0, %v364
  %v366 = vpop.f32.mrf.mxu0
  %v367 = vadd.f32 0.0, %v366
  %v368 = vpop.f32.mrf.mxu0
  %v369 = vpop.f32.mrf.mxu0
  %370 = vdwg.mxu0
  %371 = vmatprep.subr.bf16.mxu0 %v180
  %372 = vmatpush1.bf16.msra.mxu0 %v179
  %373 = vmatprep.subr.bf16.mxu0 %v176
  %374 = vmatpush1.bf16.msra.mxu0 %v175
  %375 = vmatprep.subr.bf16.mxu0 %v172
  %376 = vmatpush1.bf16.msra.mxu0 %v171
  %377 = vmatprep.subr.bf16.mxu0 %v168
  %378 = vmatpush1.bf16.msra.mxu0 %v167
  %379 = vmatprep.subr.bf16.mxu0 %v164
  %380 = vmatpush1.bf16.msra.mxu0 %v163
  %381 = vmatprep.subr.bf16.mxu0 %v160
  %382 = vmatpush1.bf16.msra.mxu0 %v159
  %383 = vmatprep.subr.bf16.mxu0 %v156
  %384 = vmatpush1.bf16.msra.mxu0 %v155
  %385 = vmatprep.subr.bf16.mxu0 %v152
  %386 = vmatpush1.bf16.msra.mxu0 %v151
  %387 = vmatprep.subr.bf16.mxu0 0
  %388 = vmatpush2.bf16.msra.mxu0 0
  %389 = vmatprep.subr.bf16.mxu0 0
  %390 = vmatpush2.bf16.msra.mxu0 0
  %391 = vmatprep.subr.bf16.mxu0 0
  %392 = vmatpush2.bf16.msra.mxu0 0
  %393 = vmatprep.subr.bf16.mxu0 0
  %394 = vmatpush2.bf16.msra.mxu0 0
  %395 = vmatprep.subr.bf16.mxu0 0
  %396 = vmatpush2.bf16.msra.mxu0 0
  %397 = vmatprep.subr.bf16.mxu0 0
  %398 = vmatpush2.bf16.msra.mxu0 0
  %399 = vmatprep.subr.bf16.mxu0 0
  %400 = vmatpush2.bf16.msra.mxu0 0
  %401 = vmatprep.subr.bf16.mxu0 0
  %402 = vmatpush2.bf16.msra.mxu0 0
  %403 = vmatprep.mubr.bf16.mxu0 0
  %404 = vmatmul.mubr.bf16.gmra.mxu0 %v329
  %v405 = vpop.f32.mrf.mxu0
  %v406 = vadd.f32 0.0, %v405
  %v407 = vpop.f32.mrf.mxu0
  %v408 = vadd.f32 0.0, %v407
  %v409 = vpop.f32.mrf.mxu0
  %v410 = vpop.f32.mrf.mxu0
  %411 = vdwg.mxu0
  %v412 = vadd.f32 %v325, %v365
  %v413 = vadd.f32 %v326, %v367
  %v414 = vadd.f32 %v327, %v406
  %v415 = vadd.f32 %v328, %v408
  %v416 = vxor.u32 %v412, 2147483648
  %v417 = vmul.f32 %v416, 1.442695
  %v418 = vpow.pop %v417
  %v419 = vadd.f32 %v418, 1.0
  %v420 = vrcp.pop %v419
  %v421 = vmul.f32 1.0, %v420
  %v422 = vxor.u32 %v413, 2147483648
  %v423 = vmul.f32 %v422, 1.442695
  %v424 = vpow.pop %v423
  %v425 = vadd.f32 %v424, 1.0
  %v426 = vrcp.pop %v425
  %v427 = vmul.f32 1.0, %v426
  %v428 = vtanh.pop %v414
  %v429 = vxor.u32 %v415, 2147483648
  %v430 = vmul.f32 %v429, 1.442695
  %v431 = vpow.pop %v430
  %v432 = vadd.f32 %v431, 1.0
  %v433 = vrcp.pop %v432
  %v434 = vmul.f32 1.0, %v433
  %v435 = vmul.f32 %v427, %v320
  %v436 = vmul.f32 %v421, %v428
  %v437 = vadd.f32 %v435, %v436
  %v438 = vtanh.pop %v437
  %v439 = vmul.f32 %v434, %v438
  %s440 = scalar_lea.vmem %s3, 8
  %441 = vst [vmem:[%s440] sm:$0xff] %v439
  %s442 = scalar_lea.vmem %s0, 64
  %v443 = vld [vmem:[%s442] sm:$0xff]
  %v444 = vld [vmem:[%s442 + $0x8] sm:$0xff]
  %v445 = vld [vmem:[%s442 + $0x10] sm:$0xff]
  %v446 = vld [vmem:[%s442 + $0x18] sm:$0xff]
  %v447 = vpack.c.bf16 %v439, %v439
  %448 = vmatprep.subr.bf16.mxu0 %v178
  %449 = vmatpush1.bf16.msra.mxu0 %v177
  %450 = vmatprep.subr.bf16.mxu0 %v174
  %451 = vmatpush1.bf16.msra.mxu0 %v173
  %452 = vmatprep.subr.bf16.mxu0 %v170
  %453 = vmatpush1.bf16.msra.mxu0 %v169
  %454 = vmatprep.subr.bf16.mxu0 %v166
  %455 = vmatpush1.bf16.msra.mxu0 %v165
  %456 = vmatprep.subr.bf16.mxu0 %v162
  %457 = vmatpush1.bf16.msra.mxu0 %v161
  %458 = vmatprep.subr.bf16.mxu0 %v158
  %459 = vmatpush1.bf16.msra.mxu0 %v157
  %460 = vmatprep.subr.bf16.mxu0 %v154
  %461 = vmatpush1.bf16.msra.mxu0 %v153
  %462 = vmatprep.subr.bf16.mxu0 %v150
  %463 = vmatpush1.bf16.msra.mxu0 %v149
  %464 = vmatprep.subr.bf16.mxu0 0
  %465 = vmatpush2.bf16.msra.mxu0 0
  %466 = vmatprep.subr.bf16.mxu0 0
  %467 = vmatpush2.bf16.msra.mxu0 0
  %468 = vmatprep.subr.bf16.mxu0 0
  %469 = vmatpush2.bf16.msra.mxu0 0
  %470 = vmatprep.subr.bf16.mxu0 0
  %471 = vmatpush2.bf16.msra.mxu0 0
  %472 = vmatprep.subr.bf16.mxu0 0
  %473 = vmatpush2.bf16.msra.mxu0 0
  %474 = vmatprep.subr.bf16.mxu0 0
  %475 = vmatpush2.bf16.msra.mxu0 0
  %476 = vmatprep.subr.bf16.mxu0 0
  %477 = vmatpush2.bf16.msra.mxu0 0
  %478 = vmatprep.subr.bf16.mxu0 0
  %479 = vmatpush2.bf16.msra.mxu0 0
  %480 = vmatprep.mubr.bf16.mxu0 0
  %481 = vmatmul.mubr.bf16.gmra.mxu0 %v447
  %v482 = vpop.f32.mrf.mxu0
  %v483 = vadd.f32 0.0, %v482
  %v484 = vpop.f32.mrf.mxu0
  %v485 = vadd.f32 0.0, %v484
  %v486 = vpop.f32.mrf.mxu0
  %v487 = vpop.f32.mrf.mxu0
  %488 = vdwg.mxu0
  %489 = vmatprep.subr.bf16.mxu0 %v180
  %490 = vmatpush1.bf16.msra.mxu0 %v179
  %491 = vmatprep.subr.bf16.mxu0 %v176
  %492 = vmatpush1.bf16.msra.mxu0 %v175
  %493 = vmatprep.subr.bf16.mxu0 %v172
  %494 = vmatpush1.bf16.msra.mxu0 %v171
  %495 = vmatprep.subr.bf16.mxu0 %v168
  %496 = vmatpush1.bf16.msra.mxu0 %v167
  %497 = vmatprep.subr.bf16.mxu0 %v164
  %498 = vmatpush1.bf16.msra.mxu0 %v163
  %499 = vmatprep.subr.bf16.mxu0 %v160
  %500 = vmatpush1.bf16.msra.mxu0 %v159
  %501 = vmatprep.subr.bf16.mxu0 %v156
  %502 = vmatpush1.bf16.msra.mxu0 %v155
  %503 = vmatprep.subr.bf16.mxu0 %v152
  %504 = vmatpush1.bf16.msra.mxu0 %v151
  %505 = vmatprep.subr.bf16.mxu0 0
  %506 = vmatpush2.bf16.msra.mxu0 0
  %507 = vmatprep.subr.bf16.mxu0 0
  %508 = vmatpush2.bf16.msra.mxu0 0
  %509 = vmatprep.subr.bf16.mxu0 0
  %510 = vmatpush2.bf16.msra.mxu0 0
  %511 = vmatprep.subr.bf16.mxu0 0
  %512 = vmatpush2.bf16.msra.mxu0 0
  %513 = vmatprep.subr.bf16.mxu0 0
  %514 = vmatpush2.bf16.msra.mxu0 0
  %515 = vmatprep.subr.bf16.mxu0 0
  %516 = vmatpush2.bf16.msra.mxu0 0
  %517 = vmatprep.subr.bf16.mxu0 0
  %518 = vmatpush2.bf16.msra.mxu0 0
  %519 = vmatprep.subr.bf16.mxu0 0
  %520 = vmatpush2.bf16.msra.mxu0 0
  %521 = vmatprep.mubr.bf16.mxu0 0
  %522 = vmatmul.mubr.bf16.gmra.mxu0 %v447
  %v523 = vpop.f32.mrf.mxu0
  %v524 = vadd.f32 0.0, %v523
  %v525 = vpop.f32.mrf.mxu0
  %v526 = vadd.f32 0.0, %v525
  %v527 = vpop.f32.mrf.mxu0
  %v528 = vpop.f32.mrf.mxu0
  %529 = vdwg.mxu0
  %v530 = vadd.f32 %v443, %v483
  %v531 = vadd.f32 %v444, %v485
  %v532 = vadd.f32 %v445, %v524
  %v533 = vadd.f32 %v446, %v526
  %v534 = vxor.u32 %v530, 2147483648
  %v535 = vmul.f32 %v534, 1.442695
  %v536 = vpow.pop %v535
  %v537 = vadd.f32 %v536, 1.0
  %v538 = vrcp.pop %v537
  %v539 = vmul.f32 1.0, %v538
  %v540 = vxor.u32 %v531, 2147483648
  %v541 = vmul.f32 %v540, 1.442695
  %v542 = vpow.pop %v541
  %v543 = vadd.f32 %v542, 1.0
  %v544 = vrcp.pop %v543
  %v545 = vmul.f32 1.0, %v544
  %v546 = vtanh.pop %v532
  %v547 = vxor.u32 %v533, 2147483648
  %v548 = vmul.f32 %v547, 1.442695
  %v549 = vpow.pop %v548
  %v550 = vadd.f32 %v549, 1.0
  %v551 = vrcp.pop %v550
  %v552 = vmul.f32 1.0, %v551
  %v553 = vmul.f32 %v545, %v437
  %v554 = vmul.f32 %v539, %v546
  %v555 = vadd.f32 %v553, %v554
  %v556 = vtanh.pop %v555
  %v557 = vmul.f32 %v552, %v556
  %s558 = scalar_lea.vmem %s3, 16
  %559 = vst [vmem:[%s558] sm:$0xff] %v557
  %s560 = scalar_lea.vmem %s0, 96
  %v561 = vld [vmem:[%s560] sm:$0xff]
  %v562 = vld [vmem:[%s560 + $0x8] sm:$0xff]
  %v563 = vld [vmem:[%s560 + $0x10] sm:$0xff]
  %v564 = vld [vmem:[%s560 + $0x18] sm:$0xff]
  %v565 = vpack.c.bf16 %v557, %v557
  %566 = vmatprep.subr.bf16.mxu0 %v178
  %567 = vmatpush1.bf16.msra.mxu0 %v177
  %568 = vmatprep.subr.bf16.mxu0 %v174
  %569 = vmatpush1.bf16.msra.mxu0 %v173
  %570 = vmatprep.subr.bf16.mxu0 %v170
  %571 = vmatpush1.bf16.msra.mxu0 %v169
  %572 = vmatprep.subr.bf16.mxu0 %v166
  %573 = vmatpush1.bf16.msra.mxu0 %v165
  %574 = vmatprep.subr.bf16.mxu0 %v162
  %575 = vmatpush1.bf16.msra.mxu0 %v161
  %576 = vmatprep.subr.bf16.mxu0 %v158
  %577 = vmatpush1.bf16.msra.mxu0 %v157
  %578 = vmatprep.subr.bf16.mxu0 %v154
  %579 = vmatpush1.bf16.msra.mxu0 %v153
  %580 = vmatprep.subr.bf16.mxu0 %v150
  %581 = vmatpush1.bf16.msra.mxu0 %v149
  %582 = vmatprep.subr.bf16.mxu0 0
  %583 = vmatpush2.bf16.msra.mxu0 0
  %584 = vmatprep.subr.bf16.mxu0 0
  %585 = vmatpush2.bf16.msra.mxu0 0
  %586 = vmatprep.subr.bf16.mxu0 0
  %587 = vmatpush2.bf16.msra.mxu0 0
  %588 = vmatprep.subr.bf16.mxu0 0
  %589 = vmatpush2.bf16.msra.mxu0 0
  %590 = vmatprep.subr.bf16.mxu0 0
  %591 = vmatpush2.bf16.msra.mxu0 0
  %592 = vmatprep.subr.bf16.mxu0 0
  %593 = vmatpush2.bf16.msra.mxu0 0
  %594 = vmatprep.subr.bf16.mxu0 0
  %595 = vmatpush2.bf16.msra.mxu0 0
  %596 = vmatprep.subr.bf16.mxu0 0
  %597 = vmatpush2.bf16.msra.mxu0 0
  %598 = vmatprep.mubr.bf16.mxu0 0
  %599 = vmatmul.mubr.bf16.gmra.mxu0 %v565
  %v600 = vpop.f32.mrf.mxu0
  %v601 = vadd.f32 0.0, %v600
  %v602 = vpop.f32.mrf.mxu0
  %v603 = vadd.f32 0.0, %v602
  %v604 = vpop.f32.mrf.mxu0
  %v605 = vpop.f32.mrf.mxu0
  %606 = vdwg.mxu0
  %607 = vmatprep.subr.bf16.mxu0 %v180
  %608 = vmatpush1.bf16.msra.mxu0 %v179
  %609 = vmatprep.subr.bf16.mxu0 %v176
  %610 = vmatpush1.bf16.msra.mxu0 %v175
  %611 = vmatprep.subr.bf16.mxu0 %v172
  %612 = vmatpush1.bf16.msra.mxu0 %v171
  %613 = vmatprep.subr.bf16.mxu0 %v168
  %614 = vmatpush1.bf16.msra.mxu0 %v167
  %615 = vmatprep.subr.bf16.mxu0 %v164
  %616 = vmatpush1.bf16.msra.mxu0 %v163
  %617 = vmatprep.subr.bf16.mxu0 %v160
  %618 = vmatpush1.bf16.msra.mxu0 %v159
  %619 = vmatprep.subr.bf16.mxu0 %v156
  %620 = vmatpush1.bf16.msra.mxu0 %v155
  %621 = vmatprep.subr.bf16.mxu0 %v152
  %622 = vmatpush1.bf16.msra.mxu0 %v151
  %623 = vmatprep.subr.bf16.mxu0 0
  %624 = vmatpush2.bf16.msra.mxu0 0
  %625 = vmatprep.subr.bf16.mxu0 0
  %626 = vmatpush2.bf16.msra.mxu0 0
  %627 = vmatprep.subr.bf16.mxu0 0
  %628 = vmatpush2.bf16.msra.mxu0 0
  %629 = vmatprep.subr.bf16.mxu0 0
  %630 = vmatpush2.bf16.msra.mxu0 0
  %631 = vmatprep.subr.bf16.mxu0 0
  %632 = vmatpush2.bf16.msra.mxu0 0
  %633 = vmatprep.subr.bf16.mxu0 0
  %634 = vmatpush2.bf16.msra.mxu0 0
  %635 = vmatprep.subr.bf16.mxu0 0
  %636 = vmatpush2.bf16.msra.mxu0 0
  %637 = vmatprep.subr.bf16.mxu0 0
  %638 = vmatpush2.bf16.msra.mxu0 0
  %639 = vmatprep.mubr.bf16.mxu0 0
  %640 = vmatmul.mubr.bf16.gmra.mxu0 %v565
  %v641 = vpop.f32.mrf.mxu0
  %v642 = vadd.f32 0.0, %v641
  %v643 = vpop.f32.mrf.mxu0
  %v644 = vadd.f32 0.0, %v643
  %v645 = vpop.f32.mrf.mxu0
  %v646 = vpop.f32.mrf.mxu0
  %647 = vdwg.mxu0
  %v648 = vadd.f32 %v561, %v601
  %v649 = vadd.f32 %v562, %v603
  %v650 = vadd.f32 %v563, %v642
  %v651 = vadd.f32 %v564, %v644
  %v652 = vxor.u32 %v648, 2147483648
  %v653 = vmul.f32 %v652, 1.442695
  %v654 = vpow.pop %v653
  %v655 = vadd.f32 %v654, 1.0
  %v656 = vrcp.pop %v655
  %v657 = vmul.f32 1.0, %v656
  %v658 = vxor.u32 %v649, 2147483648
  %v659 = vmul.f32 %v658, 1.442695
  %v660 = vpow.pop %v659
  %v661 = vadd.f32 %v660, 1.0
  %v662 = vrcp.pop %v661
  %v663 = vmul.f32 1.0, %v662
  %v664 = vtanh.pop %v650
  %v665 = vxor.u32 %v651, 2147483648
  %v666 = vmul.f32 %v665, 1.442695
  %v667 = vpow.pop %v666
  %v668 = vadd.f32 %v667, 1.0
  %v669 = vrcp.pop %v668
  %v670 = vmul.f32 1.0, %v669
  %v671 = vmul.f32 %v663, %v555
  %v672 = vmul.f32 %v657, %v664
  %v673 = vadd.f32 %v671, %v672
  %v674 = vtanh.pop %v673
  %v675 = vmul.f32 %v670, %v674
  %s676 = scalar_lea.vmem %s3, 24
  %677 = vst [vmem:[%s676] sm:$0xff] %v675
  %s678 = scalar_lea.vmem %s0, 128
  %v679 = vld [vmem:[%s678] sm:$0xff]
  %v680 = vld [vmem:[%s678 + $0x8] sm:$0xff]
  %v681 = vld [vmem:[%s678 + $0x10] sm:$0xff]
  %v682 = vld [vmem:[%s678 + $0x18] sm:$0xff]
  %v683 = vpack.c.bf16 %v675, %v675
  %684 = vmatprep.subr.bf16.mxu0 %v178
  %685 = vmatpush1.bf16.msra.mxu0 %v177
  %686 = vmatprep.subr.bf16.mxu0 %v174
  %687 = vmatpush1.bf16.msra.mxu0 %v173
  %688 = vmatprep.subr.bf16.mxu0 %v170
  %689 = vmatpush1.bf16.msra.mxu0 %v169
  %690 = vmatprep.subr.bf16.mxu0 %v166
  %691 = vmatpush1.bf16.msra.mxu0 %v165
  %692 = vmatprep.subr.bf16.mxu0 %v162
  %693 = vmatpush1.bf16.msra.mxu0 %v161
  %694 = vmatprep.subr.bf16.mxu0 %v158
  %695 = vmatpush1.bf16.msra.mxu0 %v157
  %696 = vmatprep.subr.bf16.mxu0 %v154
  %697 = vmatpush1.bf16.msra.mxu0 %v153
  %698 = vmatprep.subr.bf16.mxu0 %v150
  %699 = vmatpush1.bf16.msra.mxu0 %v149
  %700 = vmatprep.subr.bf16.mxu0 0
  %701 = vmatpush2.bf16.msra.mxu0 0
  %702 = vmatprep.subr.bf16.mxu0 0
  %703 = vmatpush2.bf16.msra.mxu0 0
  %704 = vmatprep.subr.bf16.mxu0 0
  %705 = vmatpush2.bf16.msra.mxu0 0
  %706 = vmatprep.subr.bf16.mxu0 0
  %707 = vmatpush2.bf16.msra.mxu0 0
  %708 = vmatprep.subr.bf16.mxu0 0
  %709 = vmatpush2.bf16.msra.mxu0 0
  %710 = vmatprep.subr.bf16.mxu0 0
  %711 = vmatpush2.bf16.msra.mxu0 0
  %712 = vmatprep.subr.bf16.mxu0 0
  %713 = vmatpush2.bf16.msra.mxu0 0
  %714 = vmatprep.subr.bf16.mxu0 0
  %715 = vmatpush2.bf16.msra.mxu0 0
  %716 = vmatprep.mubr.bf16.mxu0 0
  %717 = vmatmul.mubr.bf16.gmra.mxu0 %v683
  %v718 = vpop.f32.mrf.mxu0
  %v719 = vadd.f32 0.0, %v718
  %v720 = vpop.f32.mrf.mxu0
  %v721 = vadd.f32 0.0, %v720
  %v722 = vpop.f32.mrf.mxu0
  %v723 = vpop.f32.mrf.mxu0
  %724 = vdwg.mxu0
  %725 = vmatprep.subr.bf16.mxu0 %v180
  %726 = vmatpush1.bf16.msra.mxu0 %v179
  %727 = vmatprep.subr.bf16.mxu0 %v176
  %728 = vmatpush1.bf16.msra.mxu0 %v175
  %729 = vmatprep.subr.bf16.mxu0 %v172
  %730 = vmatpush1.bf16.msra.mxu0 %v171
  %731 = vmatprep.subr.bf16.mxu0 %v168
  %732 = vmatpush1.bf16.msra.mxu0 %v167
  %733 = vmatprep.subr.bf16.mxu0 %v164
  %734 = vmatpush1.bf16.msra.mxu0 %v163
  %735 = vmatprep.subr.bf16.mxu0 %v160
  %736 = vmatpush1.bf16.msra.mxu0 %v159
  %737 = vmatprep.subr.bf16.mxu0 %v156
  %738 = vmatpush1.bf16.msra.mxu0 %v155
  %739 = vmatprep.subr.bf16.mxu0 %v152
  %740 = vmatpush1.bf16.msra.mxu0 %v151
  %741 = vmatprep.subr.bf16.mxu0 0
  %742 = vmatpush2.bf16.msra.mxu0 0
  %743 = vmatprep.subr.bf16.mxu0 0
  %744 = vmatpush2.bf16.msra.mxu0 0
  %745 = vmatprep.subr.bf16.mxu0 0
  %746 = vmatpush2.bf16.msra.mxu0 0
  %747 = vmatprep.subr.bf16.mxu0 0
  %748 = vmatpush2.bf16.msra.mxu0 0
  %749 = vmatprep.subr.bf16.mxu0 0
  %750 = vmatpush2.bf16.msra.mxu0 0
  %751 = vmatprep.subr.bf16.mxu0 0
  %752 = vmatpush2.bf16.msra.mxu0 0
  %753 = vmatprep.subr.bf16.mxu0 0
  %754 = vmatpush2.bf16.msra.mxu0 0
  %755 = vmatprep.subr.bf16.mxu0 0
  %756 = vmatpush2.bf16.msra.mxu0 0
  %757 = vmatprep.mubr.bf16.mxu0 0
  %758 = vmatmul.mubr.bf16.gmra.mxu0 %v683
  %v759 = vpop.f32.mrf.mxu0
  %v760 = vadd.f32 0.0, %v759
  %v761 = vpop.f32.mrf.mxu0
  %v762 = vadd.f32 0.0, %v761
  %v763 = vpop.f32.mrf.mxu0
  %v764 = vpop.f32.mrf.mxu0
  %765 = vdwg.mxu0
  %v766 = vadd.f32 %v679, %v719
  %v767 = vadd.f32 %v680, %v721
  %v768 = vadd.f32 %v681, %v760
  %v769 = vadd.f32 %v682, %v762
  %v770 = vxor.u32 %v766, 2147483648
  %v771 = vmul.f32 %v770, 1.442695
  %v772 = vpow.pop %v771
  %v773 = vadd.f32 %v772, 1.0
  %v774 = vrcp.pop %v773
  %v775 = vmul.f32 1.0, %v774
  %v776 = vxor.u32 %v767, 2147483648
  %v777 = vmul.f32 %v776, 1.442695
  %v778 = vpow.pop %v777
  %v779 = vadd.f32 %v778, 1.0
  %v780 = vrcp.pop %v779
  %v781 = vmul.f32 1.0, %v780
  %v782 = vtanh.pop %v768
  %v783 = vxor.u32 %v769, 2147483648
  %v784 = vmul.f32 %v783, 1.442695
  %v785 = vpow.pop %v784
  %v786 = vadd.f32 %v785, 1.0
  %v787 = vrcp.pop %v786
  %v788 = vmul.f32 1.0, %v787
  %v789 = vmul.f32 %v781, %v673
  %v790 = vmul.f32 %v775, %v782
  %v791 = vadd.f32 %v789, %v790
  %v792 = vtanh.pop %v791
  %v793 = vmul.f32 %v788, %v792
  %s794 = scalar_lea.vmem %s3, 32
  %795 = vst [vmem:[%s794] sm:$0xff] %v793
  %s796 = scalar_lea.vmem %s0, 160
  %v797 = vld [vmem:[%s796] sm:$0xff]
  %v798 = vld [vmem:[%s796 + $0x8] sm:$0xff]
  %v799 = vld [vmem:[%s796 + $0x10] sm:$0xff]
  %v800 = vld [vmem:[%s796 + $0x18] sm:$0xff]
  %v801 = vpack.c.bf16 %v793, %v793
  %802 = vmatprep.subr.bf16.mxu0 %v178
  %803 = vmatpush1.bf16.msra.mxu0 %v177
  %804 = vmatprep.subr.bf16.mxu0 %v174
  %805 = vmatpush1.bf16.msra.mxu0 %v173
  %806 = vmatprep.subr.bf16.mxu0 %v170
  %807 = vmatpush1.bf16.msra.mxu0 %v169
  %808 = vmatprep.subr.bf16.mxu0 %v166
  %809 = vmatpush1.bf16.msra.mxu0 %v165
  %810 = vmatprep.subr.bf16.mxu0 %v162
  %811 = vmatpush1.bf16.msra.mxu0 %v161
  %812 = vmatprep.subr.bf16.mxu0 %v158
  %813 = vmatpush1.bf16.msra.mxu0 %v157
  %814 = vmatprep.subr.bf16.mxu0 %v154
  %815 = vmatpush1.bf16.msra.mxu0 %v153
  %816 = vmatprep.subr.bf16.mxu0 %v150
  %817 = vmatpush1.bf16.msra.mxu0 %v149
  %818 = vmatprep.subr.bf16.mxu0 0
  %819 = vmatpush2.bf16.msra.mxu0 0
  %820 = vmatprep.subr.bf16.mxu0 0
  %821 = vmatpush2.bf16.msra.mxu0 0
  %822 = vmatprep.subr.bf16.mxu0 0
  %823 = vmatpush2.bf16.msra.mxu0 0
  %824 = vmatprep.subr.bf16.mxu0 0
  %825 = vmatpush2.bf16.msra.mxu0 0
  %826 = vmatprep.subr.bf16.mxu0 0
  %827 = vmatpush2.bf16.msra.mxu0 0
  %828 = vmatprep.subr.bf16.mxu0 0
  %829 = vmatpush2.bf16.msra.mxu0 0
  %830 = vmatprep.subr.bf16.mxu0 0
  %831 = vmatpush2.bf16.msra.mxu0 0
  %832 = vmatprep.subr.bf16.mxu0 0
  %833 = vmatpush2.bf16.msra.mxu0 0
  %834 = vmatprep.mubr.bf16.mxu0 0
  %835 = vmatmul.mubr.bf16.gmra.mxu0 %v801
  %v836 = vpop.f32.mrf.mxu0
  %v837 = vadd.f32 0.0, %v836
  %v838 = vpop.f32.mrf.mxu0
  %v839 = vadd.f32 0.0, %v838
  %v840 = vpop.f32.mrf.mxu0
  %v841 = vpop.f32.mrf.mxu0
  %842 = vdwg.mxu0
  %843 = vmatprep.subr.bf16.mxu0 %v180
  %844 = vmatpush1.bf16.msra.mxu0 %v179
  %845 = vmatprep.subr.bf16.mxu0 %v176
  %846 = vmatpush1.bf16.msra.mxu0 %v175
  %847 = vmatprep.subr.bf16.mxu0 %v172
  %848 = vmatpush1.bf16.msra.mxu0 %v171
  %849 = vmatprep.subr.bf16.mxu0 %v168
  %850 = vmatpush1.bf16.msra.mxu0 %v167
  %851 = vmatprep.subr.bf16.mxu0 %v164
  %852 = vmatpush1.bf16.msra.mxu0 %v163
  %853 = vmatprep.subr.bf16.mxu0 %v160
  %854 = vmatpush1.bf16.msra.mxu0 %v159
  %855 = vmatprep.subr.bf16.mxu0 %v156
  %856 = vmatpush1.bf16.msra.mxu0 %v155
  %857 = vmatprep.subr.bf16.mxu0 %v152
  %858 = vmatpush1.bf16.msra.mxu0 %v151
  %859 = vmatprep.subr.bf16.mxu0 0
  %860 = vmatpush2.bf16.msra.mxu0 0
  %861 = vmatprep.subr.bf16.mxu0 0
  %862 = vmatpush2.bf16.msra.mxu0 0
  %863 = vmatprep.subr.bf16.mxu0 0
  %864 = vmatpush2.bf16.msra.mxu0 0
  %865 = vmatprep.subr.bf16.mxu0 0
  %866 = vmatpush2.bf16.msra.mxu0 0
  %867 = vmatprep.subr.bf16.mxu0 0
  %868 = vmatpush2.bf16.msra.mxu0 0
  %869 = vmatprep.subr.bf16.mxu0 0
  %870 = vmatpush2.bf16.msra.mxu0 0
  %871 = vmatprep.subr.bf16.mxu0 0
  %872 = vmatpush2.bf16.msra.mxu0 0
  %873 = vmatprep.subr.bf16.mxu0 0
  %874 = vmatpush2.bf16.msra.mxu0 0
  %875 = vmatprep.mubr.bf16.mxu0 0
  %876 = vmatmul.mubr.bf16.gmra.mxu0 %v801
  %v877 = vpop.f32.mrf.mxu0
  %v878 = vadd.f32 0.0, %v877
  %v879 = vpop.f32.mrf.mxu0
  %v880 = vadd.f32 0.0, %v879
  %v881 = vpop.f32.mrf.mxu0
  %v882 = vpop.f32.mrf.mxu0
  %883 = vdwg.mxu0
  %v884 = vadd.f32 %v797, %v837
  %v885 = vadd.f32 %v798, %v839
  %v886 = vadd.f32 %v799, %v878
  %v887 = vadd.f32 %v800, %v880
  %v888 = vxor.u32 %v884, 2147483648
  %v889 = vmul.f32 %v888, 1.442695
  %v890 = vpow.pop %v889
  %v891 = vadd.f32 %v890, 1.0
  %v892 = vrcp.pop %v891
  %v893 = vmul.f32 1.0, %v892
  %v894 = vxor.u32 %v885, 2147483648
  %v895 = vmul.f32 %v894, 1.442695
  %v896 = vpow.pop %v895
  %v897 = vadd.f32 %v896, 1.0
  %v898 = vrcp.pop %v897
  %v899 = vmul.f32 1.0, %v898
  %v900 = vtanh.pop %v886
  %v901 = vxor.u32 %v887, 2147483648
  %v902 = vmul.f32 %v901, 1.442695
  %v903 = vpow.pop %v902
  %v904 = vadd.f32 %v903, 1.0
  %v905 = vrcp.pop %v904
  %v906 = vmul.f32 1.0, %v905
  %v907 = vmul.f32 %v899, %v791
  %v908 = vmul.f32 %v893, %v900
  %v909 = vadd.f32 %v907, %v908
  %v910 = vtanh.pop %v909
  %v911 = vmul.f32 %v906, %v910
  %s912 = scalar_lea.vmem %s3, 40
  %913 = vst [vmem:[%s912] sm:$0xff] %v911
  %s914 = scalar_lea.vmem %s0, 192
  %v915 = vld [vmem:[%s914] sm:$0xff]
  %v916 = vld [vmem:[%s914 + $0x8] sm:$0xff]
  %v917 = vld [vmem:[%s914 + $0x10] sm:$0xff]
  %v918 = vld [vmem:[%s914 + $0x18] sm:$0xff]
  %v919 = vpack.c.bf16 %v911, %v911
  %920 = vmatprep.subr.bf16.mxu0 %v178
  %921 = vmatpush1.bf16.msra.mxu0 %v177
  %922 = vmatprep.subr.bf16.mxu0 %v174
  %923 = vmatpush1.bf16.msra.mxu0 %v173
  %924 = vmatprep.subr.bf16.mxu0 %v170
  %925 = vmatpush1.bf16.msra.mxu0 %v169
  %926 = vmatprep.subr.bf16.mxu0 %v166
  %927 = vmatpush1.bf16.msra.mxu0 %v165
  %928 = vmatprep.subr.bf16.mxu0 %v162
  %929 = vmatpush1.bf16.msra.mxu0 %v161
  %930 = vmatprep.subr.bf16.mxu0 %v158
  %931 = vmatpush1.bf16.msra.mxu0 %v157
  %932 = vmatprep.subr.bf16.mxu0 %v154
  %933 = vmatpush1.bf16.msra.mxu0 %v153
  %934 = vmatprep.subr.bf16.mxu0 %v150
  %935 = vmatpush1.bf16.msra.mxu0 %v149
  %936 = vmatprep.subr.bf16.mxu0 0
  %937 = vmatpush2.bf16.msra.mxu0 0
  %938 = vmatprep.subr.bf16.mxu0 0
  %939 = vmatpush2.bf16.msra.mxu0 0
  %940 = vmatprep.subr.bf16.mxu0 0
  %941 = vmatpush2.bf16.msra.mxu0 0
  %942 = vmatprep.subr.bf16.mxu0 0
  %943 = vmatpush2.bf16.msra.mxu0 0
  %944 = vmatprep.subr.bf16.mxu0 0
  %945 = vmatpush2.bf16.msra.mxu0 0
  %946 = vmatprep.subr.bf16.mxu0 0
  %947 = vmatpush2.bf16.msra.mxu0 0
  %948 = vmatprep.subr.bf16.mxu0 0
  %949 = vmatpush2.bf16.msra.mxu0 0
  %950 = vmatprep.subr.bf16.mxu0 0
  %951 = vmatpush2.bf16.msra.mxu0 0
  %952 = vmatprep.mubr.bf16.mxu0 0
  %953 = vmatmul.mubr.bf16.gmra.mxu0 %v919
  %v954 = vpop.f32.mrf.mxu0
  %v955 = vadd.f32 0.0, %v954
  %v956 = vpop.f32.mrf.mxu0
  %v957 = vadd.f32 0.0, %v956
  %v958 = vpop.f32.mrf.mxu0
  %v959 = vpop.f32.mrf.mxu0
  %960 = vdwg.mxu0
  %961 = vmatprep.subr.bf16.mxu0 %v180
  %962 = vmatpush1.bf16.msra.mxu0 %v179
  %963 = vmatprep.subr.bf16.mxu0 %v176
  %964 = vmatpush1.bf16.msra.mxu0 %v175
  %965 = vmatprep.subr.bf16.mxu0 %v172
  %966 = vmatpush1.bf16.msra.mxu0 %v171
  %967 = vmatprep.subr.bf16.mxu0 %v168
  %968 = vmatpush1.bf16.msra.mxu0 %v167
  %969 = vmatprep.subr.bf16.mxu0 %v164
  %970 = vmatpush1.bf16.msra.mxu0 %v163
  %971 = vmatprep.subr.bf16.mxu0 %v160
  %972 = vmatpush1.bf16.msra.mxu0 %v159
  %973 = vmatprep.subr.bf16.mxu0 %v156
  %974 = vmatpush1.bf16.msra.mxu0 %v155
  %975 = vmatprep.subr.bf16.mxu0 %v152
  %976 = vmatpush1.bf16.msra.mxu0 %v151
  %977 = vmatprep.subr.bf16.mxu0 0
  %978 = vmatpush2.bf16.msra.mxu0 0
  %979 = vmatprep.subr.bf16.mxu0 0
  %980 = vmatpush2.bf16.msra.mxu0 0
  %981 = vmatprep.subr.bf16.mxu0 0
  %982 = vmatpush2.bf16.msra.mxu0 0
  %983 = vmatprep.subr.bf16.mxu0 0
  %984 = vmatpush2.bf16.msra.mxu0 0
  %985 = vmatprep.subr.bf16.mxu0 0
  %986 = vmatpush2.bf16.msra.mxu0 0
  %987 = vmatprep.subr.bf16.mxu0 0
  %988 = vmatpush2.bf16.msra.mxu0 0
  %989 = vmatprep.subr.bf16.mxu0 0
  %990 = vmatpush2.bf16.msra.mxu0 0
  %991 = vmatprep.subr.bf16.mxu0 0
  %992 = vmatpush2.bf16.msra.mxu0 0
  %993 = vmatprep.mubr.bf16.mxu0 0
  %994 = vmatmul.mubr.bf16.gmra.mxu0 %v919
  %v995 = vpop.f32.mrf.mxu0
  %v996 = vadd.f32 0.0, %v995
  %v997 = vpop.f32.mrf.mxu0
  %v998 = vadd.f32 0.0, %v997
  %v999 = vpop.f32.mrf.mxu0
  %v1000 = vpop.f32.mrf.mxu0
  %1001 = vdwg.mxu0
  %v1002 = vadd.f32 %v915, %v955
  %v1003 = vadd.f32 %v916, %v957
  %v1004 = vadd.f32 %v917, %v996
  %v1005 = vadd.f32 %v918, %v998
  %v1006 = vxor.u32 %v1002, 2147483648
  %v1007 = vmul.f32 %v1006, 1.442695
  %v1008 = vpow.pop %v1007
  %v1009 = vadd.f32 %v1008, 1.0
  %v1010 = vrcp.pop %v1009
  %v1011 = vmul.f32 1.0, %v1010
  %v1012 = vxor.u32 %v1003, 2147483648
  %v1013 = vmul.f32 %v1012, 1.442695
  %v1014 = vpow.pop %v1013
  %v1015 = vadd.f32 %v1014, 1.0
  %v1016 = vrcp.pop %v1015
  %v1017 = vmul.f32 1.0, %v1016
  %v1018 = vtanh.pop %v1004
  %v1019 = vxor.u32 %v1005, 2147483648
  %v1020 = vmul.f32 %v1019, 1.442695
  %v1021 = vpow.pop %v1020
  %v1022 = vadd.f32 %v1021, 1.0
  %v1023 = vrcp.pop %v1022
  %v1024 = vmul.f32 1.0, %v1023
  %v1025 = vmul.f32 %v1017, %v909
  %v1026 = vmul.f32 %v1011, %v1018
  %v1027 = vadd.f32 %v1025, %v1026
  %v1028 = vtanh.pop %v1027
  %v1029 = vmul.f32 %v1024, %v1028
  %s1030 = scalar_lea.vmem %s3, 48
  %1031 = vst [vmem:[%s1030] sm:$0xff] %v1029
  %s1032 = scalar_lea.vmem %s0, 224
  %v1033 = vld [vmem:[%s1032] sm:$0xff]
  %v1034 = vld [vmem:[%s1032 + $0x8] sm:$0xff]
  %v1035 = vld [vmem:[%s1032 + $0x10] sm:$0xff]
  %v1036 = vld [vmem:[%s1032 + $0x18] sm:$0xff]
  %v1037 = vpack.c.bf16 %v1029, %v1029
  %1038 = vmatprep.subr.bf16.mxu0 %v178
  %1039 = vmatpush1.bf16.msra.mxu0 %v177
  %1040 = vmatprep.subr.bf16.mxu0 %v174
  %1041 = vmatpush1.bf16.msra.mxu0 %v173
  %1042 = vmatprep.subr.bf16.mxu0 %v170
  %1043 = vmatpush1.bf16.msra.mxu0 %v169
  %1044 = vmatprep.subr.bf16.mxu0 %v166
  %1045 = vmatpush1.bf16.msra.mxu0 %v165
  %1046 = vmatprep.subr.bf16.mxu0 %v162
  %1047 = vmatpush1.bf16.msra.mxu0 %v161
  %1048 = vmatprep.subr.bf16.mxu0 %v158
  %1049 = vmatpush1.bf16.msra.mxu0 %v157
  %1050 = vmatprep.subr.bf16.mxu0 %v154
  %1051 = vmatpush1.bf16.msra.mxu0 %v153
  %1052 = vmatprep.subr.bf16.mxu0 %v150
  %1053 = vmatpush1.bf16.msra.mxu0 %v149
  %1054 = vmatprep.subr.bf16.mxu0 0
  %1055 = vmatpush2.bf16.msra.mxu0 0
  %1056 = vmatprep.subr.bf16.mxu0 0
  %1057 = vmatpush2.bf16.msra.mxu0 0
  %1058 = vmatprep.subr.bf16.mxu0 0
  %1059 = vmatpush2.bf16.msra.mxu0 0
  %1060 = vmatprep.subr.bf16.mxu0 0
  %1061 = vmatpush2.bf16.msra.mxu0 0
  %1062 = vmatprep.subr.bf16.mxu0 0
  %1063 = vmatpush2.bf16.msra.mxu0 0
  %1064 = vmatprep.subr.bf16.mxu0 0
  %1065 = vmatpush2.bf16.msra.mxu0 0
  %1066 = vmatprep.subr.bf16.mxu0 0
  %1067 = vmatpush2.bf16.msra.mxu0 0
  %1068 = vmatprep.subr.bf16.mxu0 0
  %1069 = vmatpush2.bf16.msra.mxu0 0
  %1070 = vmatprep.mubr.bf16.mxu0 0
  %1071 = vmatmul.mubr.bf16.gmra.mxu0 %v1037
  %v1072 = vpop.f32.mrf.mxu0
  %v1073 = vadd.f32 0.0, %v1072
  %v1074 = vpop.f32.mrf.mxu0
  %v1075 = vadd.f32 0.0, %v1074
  %v1076 = vpop.f32.mrf.mxu0
  %v1077 = vpop.f32.mrf.mxu0
  %1078 = vdwg.mxu0
  %1079 = vmatprep.subr.bf16.mxu0 %v180
  %1080 = vmatpush1.bf16.msra.mxu0 %v179
  %1081 = vmatprep.subr.bf16.mxu0 %v176
  %1082 = vmatpush1.bf16.msra.mxu0 %v175
  %1083 = vmatprep.subr.bf16.mxu0 %v172
  %1084 = vmatpush1.bf16.msra.mxu0 %v171
  %1085 = vmatprep.subr.bf16.mxu0 %v168
  %1086 = vmatpush1.bf16.msra.mxu0 %v167
  %1087 = vmatprep.subr.bf16.mxu0 %v164
  %1088 = vmatpush1.bf16.msra.mxu0 %v163
  %1089 = vmatprep.subr.bf16.mxu0 %v160
  %1090 = vmatpush1.bf16.msra.mxu0 %v159
  %1091 = vmatprep.subr.bf16.mxu0 %v156
  %1092 = vmatpush1.bf16.msra.mxu0 %v155
  %1093 = vmatprep.subr.bf16.mxu0 %v152
  %1094 = vmatpush1.bf16.msra.mxu0 %v151
  %1095 = vmatprep.subr.bf16.mxu0 0
  %1096 = vmatpush2.bf16.msra.mxu0 0
  %1097 = vmatprep.subr.bf16.mxu0 0
  %1098 = vmatpush2.bf16.msra.mxu0 0
  %1099 = vmatprep.subr.bf16.mxu0 0
  %1100 = vmatpush2.bf16.msra.mxu0 0
  %1101 = vmatprep.subr.bf16.mxu0 0
  %1102 = vmatpush2.bf16.msra.mxu0 0
  %1103 = vmatprep.subr.bf16.mxu0 0
  %1104 = vmatpush2.bf16.msra.mxu0 0
  %1105 = vmatprep.subr.bf16.mxu0 0
  %1106 = vmatpush2.bf16.msra.mxu0 0
  %1107 = vmatprep.subr.bf16.mxu0 0
  %1108 = vmatpush2.bf16.msra.mxu0 0
  %1109 = vmatprep.subr.bf16.mxu0 0
  %1110 = vmatpush2.bf16.msra.mxu0 0
  %1111 = vmatprep.mubr.bf16.mxu0 0
  %1112 = vmatmul.mubr.bf16.gmra.mxu0 %v1037
  %v1113 = vpop.f32.mrf.mxu0
  %v1114 = vadd.f32 0.0, %v1113
  %v1115 = vpop.f32.mrf.mxu0
  %v1116 = vadd.f32 0.0, %v1115
  %v1117 = vpop.f32.mrf.mxu0
  %v1118 = vpop.f32.mrf.mxu0
  %1119 = vdwg.mxu0
  %v1120 = vadd.f32 %v1033, %v1073
  %v1121 = vadd.f32 %v1034, %v1075
  %v1122 = vadd.f32 %v1035, %v1114
  %v1123 = vadd.f32 %v1036, %v1116
  %v1124 = vxor.u32 %v1120, 2147483648
  %v1125 = vmul.f32 %v1124, 1.442695
  %v1126 = vpow.pop %v1125
  %v1127 = vadd.f32 %v1126, 1.0
  %v1128 = vrcp.pop %v1127
  %v1129 = vmul.f32 1.0, %v1128
  %v1130 = vxor.u32 %v1121, 2147483648
  %v1131 = vmul.f32 %v1130, 1.442695
  %v1132 = vpow.pop %v1131
  %v1133 = vadd.f32 %v1132, 1.0
  %v1134 = vrcp.pop %v1133
  %v1135 = vmul.f32 1.0, %v1134
  %v1136 = vtanh.pop %v1122
  %v1137 = vxor.u32 %v1123, 2147483648
  %v1138 = vmul.f32 %v1137, 1.442695
  %v1139 = vpow.pop %v1138
  %v1140 = vadd.f32 %v1139, 1.0
  %v1141 = vrcp.pop %v1140
  %v1142 = vmul.f32 1.0, %v1141
  %v1143 = vmul.f32 %v1135, %v1027
  %v1144 = vmul.f32 %v1129, %v1136
  %v1145 = vadd.f32 %v1143, %v1144
  %v1146 = vtanh.pop %v1145
  %v1147 = vmul.f32 %v1142, %v1146
  %s1148 = scalar_lea.vmem %s3, 56
  %1149 = vst [vmem:[%s1148] sm:$0xff] %v1147
  // Predicated region
  $region14: #{image_caption_forward.10} parent=0 // pred_check
    _
  $region15: #{image_caption_forward.10} parent=0 // pred_check_branch
    %1151 = sbr.rel (0) target = $region17
  $region16: #{image_caption_forward.10} parent=0 // pred_region
    _
  $region17: #{image_caption_forward.10} parent=0 // pred_fallthru
    _
  // Predicated region
  $region18: #{image_caption_forward.10} parent=0 // pred_check
    _
  $region19: #{image_caption_forward.10} parent=0 // pred_check_branch
    %1153 = sbr.rel (0) target = $region21
  $region20: #{image_caption_forward.10} parent=0 // pred_region
    _
  $region21: #{image_caption_forward.10} parent=0 // pred_fallthru
    _

</llo_original>
